<compile_context>
chip_gen: v5e
topology: v5e:2x2
jax: 0.10.0
libtpu: 0.0.40
codegen_flags: <defaults>
</compile_context>

<pallas_src>
from types import SimpleNamespace

import numpy as np
import jax
import jax.numpy as jnp
from jax.experimental import pallas as pl
from jax.experimental.pallas import tpu as pltpu


LANE = 128      # lane width: pad all channel/class axes to this
M_ALIGN = 16    # row padding, safe sublane alignment for bf16 (16) and f32 (8)
NEG_INF = -1e30


def _round_up(x, m):
    return (x + m - 1) // m * m


# ----------------------------- fused Pallas kernel -----------------------------

def _build_fused_kernel(n_extra_down, m_out_pads, lrelu):
    """Kernel computing the whole discriminator forward for ONE batch element
    (the grid iterates / parallelizes over batch).

    Ref order: patches0, W0, shift0,
               [G_i, W_i, shift_i]  for each down layer after the first,
               G_f, W_f, bias_f, out.
    """

    def _conv_gather(act, g_ref, w_ref, m_out):
        # act:   (m_in, c_in_pad) f32 activations of the previous layer.
        # g_ref: (kk * m_out, m_in) bf16 binary gather matrix (im2col-as-matmul).
        # w_ref: (kk, c_in_pad, c_out_pad) bf16 per-kernel-position weights.
        kk = w_ref.shape[0]
        c_out = w_ref.shape[2]
        act_b = act.astype(jnp.bfloat16)
        acc = jnp.zeros((m_out, c_out), jnp.float32)
        for q in range(kk):
            gq = g_ref[pl.ds(q * m_out, m_out), :]                       # (m_out, m_in)
            pq = jnp.dot(gq, act_b, preferred_element_type=jnp.float32)  # gathered patch rows
            acc = acc + jnp.dot(pq.astype(jnp.bfloat16), w_ref[q],
                                preferred_element_type=jnp.float32)
        return acc

    def kernel(*refs):
        out_ref = refs[-1]

        # ---- first down layer: wrapper-side im2col, single MXU matmul ----
        patches_ref, w_ref, shift_ref = refs[0], refs[1], refs[2]
        x = patches_ref[0]                                               # (m0, k0_pad) bf16
        y = jnp.dot(x, w_ref[...], preferred_element_type=jnp.float32)
        y = y + shift_ref[...]                                           # folded BN shift
        act = jnp.where(y >= 0.0, y, lrelu * y)                          # LeakyReLU (f32)

        # ---- remaining down layers: in-kernel im2col via gather matmul ----
        ptr = 3
        for li in range(n_extra_down):
            g_ref, w_ref, shift_ref = refs[ptr], refs[ptr + 1], refs[ptr + 2]
            ptr += 3
            acc = _conv_gather(act, g_ref, w_ref, m_out_pads[li])
            y = acc + shift_ref[...]
            act = jnp.where(y >= 0.0, y, lrelu * y)

        # ---- final conv + bias + softmax over the (padded) class lanes ----
        g_ref, w_ref, bias_ref = refs[ptr], refs[ptr + 1], refs[ptr + 2]
        logits = _conv_gather(act, g_ref, w_ref, m_out_pads[n_extra_down])
        logits = logits + bias_ref[...]          # padded class lanes carry -1e30
        m = jnp.max(logits, axis=-1, keepdims=True)
        e = jnp.exp(logits - m)
        s = jnp.sum(e, axis=-1, keepdims=True)
        out_ref[0] = e * pl.reciprocal(s, approx=True)

    return kernel


# ------------------------------- wrapper glue ---------------------------------

def _im2col_first(x_nhwc, k, stride, pad, m_pad, k_pad):
    """Wrapper-side im2col for the first conv only (input is known pre-kernel).
    Returns (B, m_pad, k_pad) bf16 patches, K ordered (kh, kw, c_in)."""
    x = jnp.pad(x_nhwc, ((0, 0), (pad, pad), (pad, pad), (0, 0)))
    B, H, W, C = x.shape
    Ho = (H - k) // stride + 1
    Wo = (W - k) // stride + 1
    cols = [x[:, i:i + stride * Ho:stride, j:j + stride * Wo:stride, :]
            for i in range(k) for j in range(k)]
    p = jnp.concatenate(cols, axis=-1).reshape(B, Ho * Wo, k * k * C)
    p = jnp.pad(p, ((0, 0), (0, m_pad - Ho * Wo), (0, k_pad - k * k * C)))
    return p.astype(jnp.bfloat16)


def _gather_matrix(hi, wi, ho, wo, k, stride, pad, m_in_pad, m_out_pad):
    """Binary gather matrix G of shape (k*k*m_out_pad, m_in_pad).
    Row q*m_out_pad + (oh*wo+ow) selects input row ih*wi+iw for kernel position
    q = kh*k + kw (row is all-zero where the window falls into the padding)."""
    g = np.zeros((k * k * m_out_pad, m_in_pad), np.float32)
    for kh in range(k):
        for kw in range(k):
            q = kh * k + kw
            for oh in range(ho):
                ih = oh * stride + kh - pad
                if ih < 0 or ih >= hi:
                    continue
                for ow in range(wo):
                    iw = ow * stride + kw - pad
                    if iw < 0 or iw >= wi:
                        continue
                    g[q * m_out_pad + oh * wo + ow, ih * wi + iw] = 1.0
    return jnp.asarray(g, jnp.bfloat16)


def _fold_bn(p, eps):
    a = p["gamma"] / jnp.sqrt(p["var"] + eps)
    shift = (p["b"] - p["mean"]) * a + p["beta"]
    return a, shift


def _prep_first_weights(w_oihw, scale, shift, k_pad, c_out_pad):
    c_out, c_in, k, _ = w_oihw.shape
    w2d = jnp.transpose(w_oihw, (2, 3, 1, 0)).reshape(k * k * c_in, c_out)
    w2d = w2d * scale[None, :]                                  # fold BN scale
    w2d = jnp.pad(w2d, ((0, k_pad - k * k * c_in), (0, c_out_pad - c_out)))
    sh = jnp.pad(shift, (0, c_out_pad - c_out)).reshape(1, c_out_pad)
    return w2d.astype(jnp.bfloat16), sh.astype(jnp.float32)


def _prep_gather_weights(w_oihw, scale, c_in_pad, c_out_pad):
    c_out, c_in, k, _ = w_oihw.shape
    wq = jnp.transpose(w_oihw, (2, 3, 1, 0)).reshape(k * k, c_in, c_out)
    wq = wq * scale[None, None, :]                              # fold BN scale (ones for final)
    wq = jnp.pad(wq, ((0, 0), (0, c_in_pad - c_in), (0, c_out_pad - c_out)))
    return wq.astype(jnp.bfloat16)


def discriminator_forward(x_nchw, params, final_params, opts, eps=1e-5):
    """Eval-mode forward of the PyTorch patch discriminator, fully fused."""
    B, c_in, H, W = x_nchw.shape
    n_down = opts.n_discrim_down
    num_classes = opts.num_classes
    x = jnp.transpose(x_nchw, (0, 2, 3, 1)).astype(jnp.float32)   # NCHW -> NHWC

    # Layer geometry: down layers k=4,s=2,p=1; final k=5,s=1,p=1.
    spat = [(H, W)]
    for _ in range(n_down):
        h, w = spat[-1]
        spat.append(((h + 2 - 4) // 2 + 1, (w + 2 - 4) // 2 + 1))
    hf, wf = spat[-1][0] + 2 - 5 + 1, spat[-1][1] + 2 - 5 + 1

    c_pads = [_round_up(p["w"].shape[0], LANE) for p in params]
    cf_pad = _round_up(num_classes, LANE)

    inputs, in_specs = [], []

    def add_shared(arr):
        inputs.append(arr)
        in_specs.append(pl.BlockSpec(arr.shape, lambda b, _n=arr.ndim: (0,) * _n))

    # ---- first down layer: wrapper-side im2col + folded BN ----
    ho0, wo0 = spat[1]
    m0_pad = _round_up(ho0 * wo0, M_ALIGN)
    k0_pad = _round_up(16 * c_in, LANE)
    patches0 = _im2col_first(x, 4, 2, 1, m0_pad, k0_pad)          # (B, m0_pad, k0_pad) bf16
    inputs.append(patches0)
    in_specs.append(pl.BlockSpec((1, m0_pad, k0_pad), lambda b: (b, 0, 0)))
    scale0, shift0 = _fold_bn(params[0], eps)
    w0, s0 = _prep_first_weights(params[0]["w"], scale0, shift0, k0_pad, c_pads[0])
    add_shared(w0)
    add_shared(s0)

    # ---- remaining down layers: in-kernel im2col via gather matmul ----
    m_pads = [m0_pad]
    m_out_pads_gather = []
    for i in range(1, n_down):
        hi, wi = spat[i]
        ho, wo = spat[i + 1]
        m_out = _round_up(ho * wo, M_ALIGN)
        m_pads.append(m_out)
        m_out_pads_gather.append(m_out)
        add_shared(_gather_matrix(hi, wi, ho, wo, 4, 2, 1, m_pads[i - 1], m_out))
        scale, shift = _fold_bn(params[i], eps)
        add_shared(_prep_gather_weights(params[i]["w"], scale, c_pads[i - 1], c_pads[i]))
        add_shared(jnp.pad(shift, (0, c_pads[i] - shift.shape[0]))
                   .reshape(1, c_pads[i]).astype(jnp.float32))

    # ---- final conv (k=5,s=1,p=1) + bias + softmax over classes ----
    w_final, b_final = final_params
    hi, wi = spat[-1]
    mf_pad = _round_up(hf * wf, M_ALIGN)
    m_out_pads_gather.append(mf_pad)
    add_shared(_gather_matrix(hi, wi, hf, wf, 5, 1, 1, m_pads[-1], mf_pad))
    add_shared(_prep_gather_weights(w_final, jnp.ones((num_classes,), jnp.float32),
                                    c_pads[-1], cf_pad))
    bias = jnp.full((1, cf_pad), NEG_INF, jnp.float32)
    bias = bias.at[0, :num_classes].set(b_final.astype(jnp.float32))
    add_shared(bias)

    kernel = _build_fused_kernel(n_down - 1, tuple(m_out_pads_gather),
                                 float(opts.lrelu_val))

    out = pl.pallas_call(
        kernel,
        out_shape=jax.ShapeDtypeStruct((B, mf_pad, cf_pad), jnp.float32),
        grid=(B,),
        in_specs=in_specs,
        out_specs=pl.BlockSpec((1, mf_pad, cf_pad), lambda b: (b, 0, 0)),
        compiler_params=pltpu.CompilerParams(dimension_semantics=("parallel",)),
    )(*inputs)

    # Back to NCHW, then reshape(-1, num_classes) exactly as PyTorch does
    # (row-major flatten of the NCHW probability tensor).
    probs = out[:, :hf * wf, :num_classes].reshape(B, hf, wf, num_classes)
    probs_nchw = jnp.transpose(probs, (0, 3, 1, 2))
    return probs_nchw.reshape(-1, num_classes)


# ------------------------- pure-JAX reference (check) --------------------------

def reference_forward(x_nchw, params, final_params, opts, eps=1e-5):
    dn = ("NCHW", "OIHW", "NCHW")
    x = x_nchw.astype(jnp.float32)
    for p in params:
        y = jax.lax.conv_general_dilated(x, p["w"], (2, 2), ((1, 1), (1, 1)),
                                         dimension_numbers=dn)
        y = y + p["b"][None, :, None, None]
        a = p["gamma"] / jnp.sqrt(p["var"] + eps)
        y = (y - p["mean"][None, :, None, None]) * a[None, :, None, None] \
            + p["beta"][None, :, None, None]
        x = jnp.where(y >= 0.0, y, opts.lrelu_val * y)
    wf, bf = final_params
    y = jax.lax.conv_general_dilated(x, wf, (1, 1), ((1, 1), (1, 1)),
                                     dimension_numbers=dn)
    y = y + bf[None, :, None, None]
    y = jax.nn.softmax(y, axis=1)
    return y.reshape(-1, opts.num_classes)


# ---------------------------------- params -------------------------------------

def init_params(opts, key):
    """Deterministic synthetic parameters, same shapes as the PyTorch module."""
    params = []
    in_ch = opts.D_input_channel
    up = opts.D_channel_up
    for _ in range(opts.n_discrim_down):
        key, k1, k2, k3, k4 = jax.random.split(key, 5)
        w = 0.05 * jax.random.normal(k1, (up, in_ch, 4, 4), jnp.float32)
        b = 0.05 * jax.random.normal(k2, (up,), jnp.float32)
        gamma = 1.0 + 0.1 * jax.random.normal(k3, (up,), jnp.float32)
        beta = 0.1 * jax.random.normal(k4, (up,), jnp.float32)
        params.append(dict(w=w, b=b, gamma=gamma, beta=beta,
                           mean=jnp.zeros((up,), jnp.float32),
                           var=jnp.ones((up,), jnp.float32)))
        in_ch = up
        up *= 2
    key, k1, k2 = jax.random.split(key, 3)
    w_final = 0.05 * jax.random.normal(k1, (opts.num_classes, in_ch, 5, 5), jnp.float32)
    b_final = 0.05 * jax.random.normal(k2, (opts.num_classes,), jnp.float32)
    return params, (w_final, b_final)


# ----------------------------------- main ---------------------------------------

if __name__ == "__main__":
    opts = SimpleNamespace(
        D_input_channel=4,
        D_channel_up=8,
        n_discrim_down=2,
        num_classes=3,
        lrelu_val=0.2,
        dropout=0.5,
        batch=2,
    )

    key = jax.random.PRNGKey(0)
    key, kx = jax.random.split(key)
    x = jax.random.normal(kx, (opts.batch, opts.D_input_channel, 16, 16), jnp.float32)

    params, final_params = init_params(opts, key)

    out = discriminator_forward(x, params, final_params, opts)
    out = jax.block_until_ready(out)

    # 16x16 -> 8x8 -> 4x4 -> (final conv k=5,p=1) 2x2  =>  (2*2*2, num_classes)
    assert out.shape == (opts.batch * 2 * 2, opts.num_classes), out.shape
    assert bool(jnp.all(jnp.isfinite(out)))

    ref = jax.block_until_ready(reference_forward(x, params, final_params, opts))
    err = float(jnp.max(jnp.abs(out - ref)))
    assert err < 5e-2, f"max abs error vs reference = {err}"

    print("KERNEL_OK")
</pallas_src>

<mosaic_0001>
module attributes {stable_mosaic.version = 11 : i64} {
  func.func @kernel(%arg0: i32, %arg1: memref<1x64x128xbf16, #tpu.memory_space<vmem>>, %arg2: memref<128x128xbf16, #tpu.memory_space<vmem>>, %arg3: memref<1x128xf32, #tpu.memory_space<vmem>>, %arg4: memref<256x64xbf16, #tpu.memory_space<vmem>>, %arg5: memref<16x128x128xbf16, #tpu.memory_space<vmem>>, %arg6: memref<1x128xf32, #tpu.memory_space<vmem>>, %arg7: memref<400x16xbf16, #tpu.memory_space<vmem>>, %arg8: memref<25x128x128xbf16, #tpu.memory_space<vmem>>, %arg9: memref<1x128xf32, #tpu.memory_space<vmem>>, %arg10: memref<1x16x128xf32, #tpu.memory_space<vmem>>) attributes {dimension_semantics = [#tpu.dimension_semantics<parallel>], iteration_bounds = array<i64: 2>, scalar_prefetch = 0 : i64, scratch_operands = 0 : i64, tpu.core_type = #tpu.core_type<tc>, window_params = [{transform_indices = @transform_0, window_bounds = array<i64: 1, 64, 128>}, {pipeline_mode = #tpu.pipeline_mode<synchronous>, transform_indices = @transform_1, window_bounds = array<i64: 128, 128>}, {pipeline_mode = #tpu.pipeline_mode<synchronous>, transform_indices = @transform_2, window_bounds = array<i64: 1, 128>}, {pipeline_mode = #tpu.pipeline_mode<synchronous>, transform_indices = @transform_3, window_bounds = array<i64: 256, 64>}, {pipeline_mode = #tpu.pipeline_mode<synchronous>, transform_indices = @transform_4, window_bounds = array<i64: 16, 128, 128>}, {pipeline_mode = #tpu.pipeline_mode<synchronous>, transform_indices = @transform_5, window_bounds = array<i64: 1, 128>}, {pipeline_mode = #tpu.pipeline_mode<synchronous>, transform_indices = @transform_6, window_bounds = array<i64: 400, 16>}, {pipeline_mode = #tpu.pipeline_mode<synchronous>, transform_indices = @transform_7, window_bounds = array<i64: 25, 128, 128>}, {pipeline_mode = #tpu.pipeline_mode<synchronous>, transform_indices = @transform_8, window_bounds = array<i64: 1, 128>}, {transform_indices = @transform_9, window_bounds = array<i64: 1, 16, 128>}]} {
    %c0 = arith.constant 0 : index
    %c0_0 = arith.constant 0 : index
    %c0_1 = arith.constant 0 : index
    %0 = vector.load %arg1[%c0, %c0_0, %c0_1] : memref<1x64x128xbf16, #tpu.memory_space<vmem>>, vector<1x64x128xbf16>
    %1 = vector.shape_cast %0 : vector<1x64x128xbf16> to vector<64x128xbf16>
    %c0_2 = arith.constant 0 : index
    %c0_3 = arith.constant 0 : index
    %2 = vector.load %arg2[%c0_2, %c0_3] : memref<128x128xbf16, #tpu.memory_space<vmem>>, vector<128x128xbf16>
    %cst = arith.constant dense<0.000000e+00> : vector<64x128xf32>
    %3 = tpu.matmul %1, %2, %cst {dimension_numbers = #tpu.dot_dimension_numbers<[1], [0], [0], [1], [0, 0, 1, 1], [], []>} : vector<64x128xbf16>, vector<128x128xbf16>, vector<64x128xf32> -> vector<64x128xf32>
    %c0_4 = arith.constant 0 : index
    %c0_5 = arith.constant 0 : index
    %4 = vector.load %arg3[%c0_4, %c0_5] : memref<1x128xf32, #tpu.memory_space<vmem>>, vector<1x128xf32>
    %5 = vector.broadcast %4 : vector<1x128xf32> to vector<64x128xf32>
    %6 = arith.addf %3, %5 : vector<64x128xf32>
    %cst_6 = arith.constant 0.000000e+00 : f32
    %7 = vector.broadcast %cst_6 : f32 to vector<64x128xf32>
    %8 = arith.cmpf oge, %6, %7 : vector<64x128xf32>
    %cst_7 = arith.constant 2.000000e-01 : f32
    %9 = vector.broadcast %cst_7 : f32 to vector<64x128xf32>
    %10 = arith.mulf %9, %6 : vector<64x128xf32>
    %11 = arith.select %8, %6, %10 : vector<64x128xi1>, vector<64x128xf32>
    %12 = arith.truncf %11 : vector<64x128xf32> to vector<64x128xbf16>
    %cst_8 = arith.constant 0.000000e+00 : f32
    %13 = vector.broadcast %cst_8 : f32 to vector<16x128xf32>
    %c0_9 = arith.constant 0 : index
    %c0_10 = arith.constant 0 : index
    %14 = vector.load %arg4[%c0_9, %c0_10] : memref<256x64xbf16, #tpu.memory_space<vmem>>, vector<16x64xbf16>
    %cst_11 = arith.constant dense<0.000000e+00> : vector<16x128xf32>
    %15 = tpu.matmul %14, %12, %cst_11 {dimension_numbers = #tpu.dot_dimension_numbers<[1], [0], [0], [1], [0, 0, 1, 1], [], []>} : vector<16x64xbf16>, vector<64x128xbf16>, vector<16x128xf32> -> vector<16x128xf32>
    %16 = arith.truncf %15 : vector<16x128xf32> to vector<16x128xbf16>
    %c0_12 = arith.constant 0 : index
    %c0_13 = arith.constant 0 : index
    %c0_14 = arith.constant 0 : index
    %17 = vector.load %arg5[%c0_12, %c0_13, %c0_14] : memref<16x128x128xbf16, #tpu.memory_space<vmem>>, vector<1x128x128xbf16>
    %18 = vector.shape_cast %17 : vector<1x128x128xbf16> to vector<128x128xbf16>
    %cst_15 = arith.constant dense<0.000000e+00> : vector<16x128xf32>
    %19 = tpu.matmul %16, %18, %cst_15 {dimension_numbers = #tpu.dot_dimension_numbers<[1], [0], [0], [1], [0, 0, 1, 1], [], []>} : vector<16x128xbf16>, vector<128x128xbf16>, vector<16x128xf32> -> vector<16x128xf32>
    %20 = arith.addf %13, %19 : vector<16x128xf32>
    %c16 = arith.constant 16 : index
    %c0_16 = arith.constant 0 : index
    %21 = vector.load %arg4[%c16, %c0_16] : memref<256x64xbf16, #tpu.memory_space<vmem>>, vector<16x64xbf16>
    %cst_17 = arith.constant dense<0.000000e+00> : vector<16x128xf32>
    %22 = tpu.matmul %21, %12, %cst_17 {dimension_numbers = #tpu.dot_dimension_numbers<[1], [0], [0], [1], [0, 0, 1, 1], [], []>} : vector<16x64xbf16>, vector<64x128xbf16>, vector<16x128xf32> -> vector<16x128xf32>
    %23 = arith.truncf %22 : vector<16x128xf32> to vector<16x128xbf16>
    %c1 = arith.constant 1 : index
    %c0_18 = arith.constant 0 : index
    %c0_19 = arith.constant 0 : index
    %24 = vector.load %arg5[%c1, %c0_18, %c0_19] : memref<16x128x128xbf16, #tpu.memory_space<vmem>>, vector<1x128x128xbf16>
    %25 = vector.shape_cast %24 : vector<1x128x128xbf16> to vector<128x128xbf16>
    %cst_20 = arith.constant dense<0.000000e+00> : vector<16x128xf32>
    %26 = tpu.matmul %23, %25, %cst_20 {dimension_numbers = #tpu.dot_dimension_numbers<[1], [0], [0], [1], [0, 0, 1, 1], [], []>} : vector<16x128xbf16>, vector<128x128xbf16>, vector<16x128xf32> -> vector<16x128xf32>
    %27 = arith.addf %20, %26 : vector<16x128xf32>
    %c32 = arith.constant 32 : index
    %c0_21 = arith.constant 0 : index
    %28 = vector.load %arg4[%c32, %c0_21] : memref<256x64xbf16, #tpu.memory_space<vmem>>, vector<16x64xbf16>
    %cst_22 = arith.constant dense<0.000000e+00> : vector<16x128xf32>
    %29 = tpu.matmul %28, %12, %cst_22 {dimension_numbers = #tpu.dot_dimension_numbers<[1], [0], [0], [1], [0, 0, 1, 1], [], []>} : vector<16x64xbf16>, vector<64x128xbf16>, vector<16x128xf32> -> vector<16x128xf32>
    %30 = arith.truncf %29 : vector<16x128xf32> to vector<16x128xbf16>
    %c2 = arith.constant 2 : index
    %c0_23 = arith.constant 0 : index
    %c0_24 = arith.constant 0 : index
    %31 = vector.load %arg5[%c2, %c0_23, %c0_24] : memref<16x128x128xbf16, #tpu.memory_space<vmem>>, vector<1x128x128xbf16>
    %32 = vector.shape_cast %31 : vector<1x128x128xbf16> to vector<128x128xbf16>
    %cst_25 = arith.constant dense<0.000000e+00> : vector<16x128xf32>
    %33 = tpu.matmul %30, %32, %cst_25 {dimension_numbers = #tpu.dot_dimension_numbers<[1], [0], [0], [1], [0, 0, 1, 1], [], []>} : vector<16x128xbf16>, vector<128x128xbf16>, vector<16x128xf32> -> vector<16x128xf32>
    %34 = arith.addf %27, %33 : vector<16x128xf32>
    %c48 = arith.constant 48 : index
    %c0_26 = arith.constant 0 : index
    %35 = vector.load %arg4[%c48, %c0_26] : memref<256x64xbf16, #tpu.memory_space<vmem>>, vector<16x64xbf16>
    %cst_27 = arith.constant dense<0.000000e+00> : vector<16x128xf32>
    %36 = tpu.matmul %35, %12, %cst_27 {dimension_numbers = #tpu.dot_dimension_numbers<[1], [0], [0], [1], [0, 0, 1, 1], [], []>} : vector<16x64xbf16>, vector<64x128xbf16>, vector<16x128xf32> -> vector<16x128xf32>
    %37 = arith.truncf %36 : vector<16x128xf32> to vector<16x128xbf16>
    %c3 = arith.constant 3 : index
    %c0_28 = arith.constant 0 : index
    %c0_29 = arith.constant 0 : index
    %38 = vector.load %arg5[%c3, %c0_28, %c0_29] : memref<16x128x128xbf16, #tpu.memory_space<vmem>>, vector<1x128x128xbf16>
    %39 = vector.shape_cast %38 : vector<1x128x128xbf16> to vector<128x128xbf16>
    %cst_30 = arith.constant dense<0.000000e+00> : vector<16x128xf32>
    %40 = tpu.matmul %37, %39, %cst_30 {dimension_numbers = #tpu.dot_dimension_numbers<[1], [0], [0], [1], [0, 0, 1, 1], [], []>} : vector<16x128xbf16>, vector<128x128xbf16>, vector<16x128xf32> -> vector<16x128xf32>
    %41 = arith.addf %34, %40 : vector<16x128xf32>
    %c64 = arith.constant 64 : index
    %c0_31 = arith.constant 0 : index
    %42 = vector.load %arg4[%c64, %c0_31] : memref<256x64xbf16, #tpu.memory_space<vmem>>, vector<16x64xbf16>
    %cst_32 = arith.constant dense<0.000000e+00> : vector<16x128xf32>
    %43 = tpu.matmul %42, %12, %cst_32 {dimension_numbers = #tpu.dot_dimension_numbers<[1], [0], [0], [1], [0, 0, 1, 1], [], []>} : vector<16x64xbf16>, vector<64x128xbf16>, vector<16x128xf32> -> vector<16x128xf32>
    %44 = arith.truncf %43 : vector<16x128xf32> to vector<16x128xbf16>
    %c4 = arith.constant 4 : index
    %c0_33 = arith.constant 0 : index
    %c0_34 = arith.constant 0 : index
    %45 = vector.load %arg5[%c4, %c0_33, %c0_34] : memref<16x128x128xbf16, #tpu.memory_space<vmem>>, vector<1x128x128xbf16>
    %46 = vector.shape_cast %45 : vector<1x128x128xbf16> to vector<128x128xbf16>
    %cst_35 = arith.constant dense<0.000000e+00> : vector<16x128xf32>
    %47 = tpu.matmul %44, %46, %cst_35 {dimension_numbers = #tpu.dot_dimension_numbers<[1], [0], [0], [1], [0, 0, 1, 1], [], []>} : vector<16x128xbf16>, vector<128x128xbf16>, vector<16x128xf32> -> vector<16x128xf32>
    %48 = arith.addf %41, %47 : vector<16x128xf32>
    %c80 = arith.constant 80 : index
    %c0_36 = arith.constant 0 : index
    %49 = vector.load %arg4[%c80, %c0_36] : memref<256x64xbf16, #tpu.memory_space<vmem>>, vector<16x64xbf16>
    %cst_37 = arith.constant dense<0.000000e+00> : vector<16x128xf32>
    %50 = tpu.matmul %49, %12, %cst_37 {dimension_numbers = #tpu.dot_dimension_numbers<[1], [0], [0], [1], [0, 0, 1, 1], [], []>} : vector<16x64xbf16>, vector<64x128xbf16>, vector<16x128xf32> -> vector<16x128xf32>
    %51 = arith.truncf %50 : vector<16x128xf32> to vector<16x128xbf16>
    %c5 = arith.constant 5 : index
    %c0_38 = arith.constant 0 : index
    %c0_39 = arith.constant 0 : index
    %52 = vector.load %arg5[%c5, %c0_38, %c0_39] : memref<16x128x128xbf16, #tpu.memory_space<vmem>>, vector<1x128x128xbf16>
    %53 = vector.shape_cast %52 : vector<1x128x128xbf16> to vector<128x128xbf16>
    %cst_40 = arith.constant dense<0.000000e+00> : vector<16x128xf32>
    %54 = tpu.matmul %51, %53, %cst_40 {dimension_numbers = #tpu.dot_dimension_numbers<[1], [0], [0], [1], [0, 0, 1, 1], [], []>} : vector<16x128xbf16>, vector<128x128xbf16>, vector<16x128xf32> -> vector<16x128xf32>
    %55 = arith.addf %48, %54 : vector<16x128xf32>
    %c96 = arith.constant 96 : index
    %c0_41 = arith.constant 0 : index
    %56 = vector.load %arg4[%c96, %c0_41] : memref<256x64xbf16, #tpu.memory_space<vmem>>, vector<16x64xbf16>
    %cst_42 = arith.constant dense<0.000000e+00> : vector<16x128xf32>
    %57 = tpu.matmul %56, %12, %cst_42 {dimension_numbers = #tpu.dot_dimension_numbers<[1], [0], [0], [1], [0, 0, 1, 1], [], []>} : vector<16x64xbf16>, vector<64x128xbf16>, vector<16x128xf32> -> vector<16x128xf32>
    %58 = arith.truncf %57 : vector<16x128xf32> to vector<16x128xbf16>
    %c6 = arith.constant 6 : index
    %c0_43 = arith.constant 0 : index
    %c0_44 = arith.constant 0 : index
    %59 = vector.load %arg5[%c6, %c0_43, %c0_44] : memref<16x128x128xbf16, #tpu.memory_space<vmem>>, vector<1x128x128xbf16>
    %60 = vector.shape_cast %59 : vector<1x128x128xbf16> to vector<128x128xbf16>
    %cst_45 = arith.constant dense<0.000000e+00> : vector<16x128xf32>
    %61 = tpu.matmul %58, %60, %cst_45 {dimension_numbers = #tpu.dot_dimension_numbers<[1], [0], [0], [1], [0, 0, 1, 1], [], []>} : vector<16x128xbf16>, vector<128x128xbf16>, vector<16x128xf32> -> vector<16x128xf32>
    %62 = arith.addf %55, %61 : vector<16x128xf32>
    %c112 = arith.constant 112 : index
    %c0_46 = arith.constant 0 : index
    %63 = vector.load %arg4[%c112, %c0_46] : memref<256x64xbf16, #tpu.memory_space<vmem>>, vector<16x64xbf16>
    %cst_47 = arith.constant dense<0.000000e+00> : vector<16x128xf32>
    %64 = tpu.matmul %63, %12, %cst_47 {dimension_numbers = #tpu.dot_dimension_numbers<[1], [0], [0], [1], [0, 0, 1, 1], [], []>} : vector<16x64xbf16>, vector<64x128xbf16>, vector<16x128xf32> -> vector<16x128xf32>
    %65 = arith.truncf %64 : vector<16x128xf32> to vector<16x128xbf16>
    %c7 = arith.constant 7 : index
    %c0_48 = arith.constant 0 : index
    %c0_49 = arith.constant 0 : index
    %66 = vector.load %arg5[%c7, %c0_48, %c0_49] : memref<16x128x128xbf16, #tpu.memory_space<vmem>>, vector<1x128x128xbf16>
    %67 = vector.shape_cast %66 : vector<1x128x128xbf16> to vector<128x128xbf16>
    %cst_50 = arith.constant dense<0.000000e+00> : vector<16x128xf32>
    %68 = tpu.matmul %65, %67, %cst_50 {dimension_numbers = #tpu.dot_dimension_numbers<[1], [0], [0], [1], [0, 0, 1, 1], [], []>} : vector<16x128xbf16>, vector<128x128xbf16>, vector<16x128xf32> -> vector<16x128xf32>
    %69 = arith.addf %62, %68 : vector<16x128xf32>
    %c128 = arith.constant 128 : index
    %c0_51 = arith.constant 0 : index
    %70 = vector.load %arg4[%c128, %c0_51] : memref<256x64xbf16, #tpu.memory_space<vmem>>, vector<16x64xbf16>
    %cst_52 = arith.constant dense<0.000000e+00> : vector<16x128xf32>
    %71 = tpu.matmul %70, %12, %cst_52 {dimension_numbers = #tpu.dot_dimension_numbers<[1], [0], [0], [1], [0, 0, 1, 1], [], []>} : vector<16x64xbf16>, vector<64x128xbf16>, vector<16x128xf32> -> vector<16x128xf32>
    %72 = arith.truncf %71 : vector<16x128xf32> to vector<16x128xbf16>
    %c8 = arith.constant 8 : index
    %c0_53 = arith.constant 0 : index
    %c0_54 = arith.constant 0 : index
    %73 = vector.load %arg5[%c8, %c0_53, %c0_54] : memref<16x128x128xbf16, #tpu.memory_space<vmem>>, vector<1x128x128xbf16>
    %74 = vector.shape_cast %73 : vector<1x128x128xbf16> to vector<128x128xbf16>
    %cst_55 = arith.constant dense<0.000000e+00> : vector<16x128xf32>
    %75 = tpu.matmul %72, %74, %cst_55 {dimension_numbers = #tpu.dot_dimension_numbers<[1], [0], [0], [1], [0, 0, 1, 1], [], []>} : vector<16x128xbf16>, vector<128x128xbf16>, vector<16x128xf32> -> vector<16x128xf32>
    %76 = arith.addf %69, %75 : vector<16x128xf32>
    %c144 = arith.constant 144 : index
    %c0_56 = arith.constant 0 : index
    %77 = vector.load %arg4[%c144, %c0_56] : memref<256x64xbf16, #tpu.memory_space<vmem>>, vector<16x64xbf16>
    %cst_57 = arith.constant dense<0.000000e+00> : vector<16x128xf32>
    %78 = tpu.matmul %77, %12, %cst_57 {dimension_numbers = #tpu.dot_dimension_numbers<[1], [0], [0], [1], [0, 0, 1, 1], [], []>} : vector<16x64xbf16>, vector<64x128xbf16>, vector<16x128xf32> -> vector<16x128xf32>
    %79 = arith.truncf %78 : vector<16x128xf32> to vector<16x128xbf16>
    %c9 = arith.constant 9 : index
    %c0_58 = arith.constant 0 : index
    %c0_59 = arith.constant 0 : index
    %80 = vector.load %arg5[%c9, %c0_58, %c0_59] : memref<16x128x128xbf16, #tpu.memory_space<vmem>>, vector<1x128x128xbf16>
    %81 = vector.shape_cast %80 : vector<1x128x128xbf16> to vector<128x128xbf16>
    %cst_60 = arith.constant dense<0.000000e+00> : vector<16x128xf32>
    %82 = tpu.matmul %79, %81, %cst_60 {dimension_numbers = #tpu.dot_dimension_numbers<[1], [0], [0], [1], [0, 0, 1, 1], [], []>} : vector<16x128xbf16>, vector<128x128xbf16>, vector<16x128xf32> -> vector<16x128xf32>
    %83 = arith.addf %76, %82 : vector<16x128xf32>
    %c160 = arith.constant 160 : index
    %c0_61 = arith.constant 0 : index
    %84 = vector.load %arg4[%c160, %c0_61] : memref<256x64xbf16, #tpu.memory_space<vmem>>, vector<16x64xbf16>
    %cst_62 = arith.constant dense<0.000000e+00> : vector<16x128xf32>
    %85 = tpu.matmul %84, %12, %cst_62 {dimension_numbers = #tpu.dot_dimension_numbers<[1], [0], [0], [1], [0, 0, 1, 1], [], []>} : vector<16x64xbf16>, vector<64x128xbf16>, vector<16x128xf32> -> vector<16x128xf32>
    %86 = arith.truncf %85 : vector<16x128xf32> to vector<16x128xbf16>
    %c10 = arith.constant 10 : index
    %c0_63 = arith.constant 0 : index
    %c0_64 = arith.constant 0 : index
    %87 = vector.load %arg5[%c10, %c0_63, %c0_64] : memref<16x128x128xbf16, #tpu.memory_space<vmem>>, vector<1x128x128xbf16>
    %88 = vector.shape_cast %87 : vector<1x128x128xbf16> to vector<128x128xbf16>
    %cst_65 = arith.constant dense<0.000000e+00> : vector<16x128xf32>
    %89 = tpu.matmul %86, %88, %cst_65 {dimension_numbers = #tpu.dot_dimension_numbers<[1], [0], [0], [1], [0, 0, 1, 1], [], []>} : vector<16x128xbf16>, vector<128x128xbf16>, vector<16x128xf32> -> vector<16x128xf32>
    %90 = arith.addf %83, %89 : vector<16x128xf32>
    %c176 = arith.constant 176 : index
    %c0_66 = arith.constant 0 : index
    %91 = vector.load %arg4[%c176, %c0_66] : memref<256x64xbf16, #tpu.memory_space<vmem>>, vector<16x64xbf16>
    %cst_67 = arith.constant dense<0.000000e+00> : vector<16x128xf32>
    %92 = tpu.matmul %91, %12, %cst_67 {dimension_numbers = #tpu.dot_dimension_numbers<[1], [0], [0], [1], [0, 0, 1, 1], [], []>} : vector<16x64xbf16>, vector<64x128xbf16>, vector<16x128xf32> -> vector<16x128xf32>
    %93 = arith.truncf %92 : vector<16x128xf32> to vector<16x128xbf16>
    %c11 = arith.constant 11 : index
    %c0_68 = arith.constant 0 : index
    %c0_69 = arith.constant 0 : index
    %94 = vector.load %arg5[%c11, %c0_68, %c0_69] : memref<16x128x128xbf16, #tpu.memory_space<vmem>>, vector<1x128x128xbf16>
    %95 = vector.shape_cast %94 : vector<1x128x128xbf16> to vector<128x128xbf16>
    %cst_70 = arith.constant dense<0.000000e+00> : vector<16x128xf32>
    %96 = tpu.matmul %93, %95, %cst_70 {dimension_numbers = #tpu.dot_dimension_numbers<[1], [0], [0], [1], [0, 0, 1, 1], [], []>} : vector<16x128xbf16>, vector<128x128xbf16>, vector<16x128xf32> -> vector<16x128xf32>
    %97 = arith.addf %90, %96 : vector<16x128xf32>
    %c192 = arith.constant 192 : index
    %c0_71 = arith.constant 0 : index
    %98 = vector.load %arg4[%c192, %c0_71] : memref<256x64xbf16, #tpu.memory_space<vmem>>, vector<16x64xbf16>
    %cst_72 = arith.constant dense<0.000000e+00> : vector<16x128xf32>
    %99 = tpu.matmul %98, %12, %cst_72 {dimension_numbers = #tpu.dot_dimension_numbers<[1], [0], [0], [1], [0, 0, 1, 1], [], []>} : vector<16x64xbf16>, vector<64x128xbf16>, vector<16x128xf32> -> vector<16x128xf32>
    %100 = arith.truncf %99 : vector<16x128xf32> to vector<16x128xbf16>
    %c12 = arith.constant 12 : index
    %c0_73 = arith.constant 0 : index
    %c0_74 = arith.constant 0 : index
    %101 = vector.load %arg5[%c12, %c0_73, %c0_74] : memref<16x128x128xbf16, #tpu.memory_space<vmem>>, vector<1x128x128xbf16>
    %102 = vector.shape_cast %101 : vector<1x128x128xbf16> to vector<128x128xbf16>
    %cst_75 = arith.constant dense<0.000000e+00> : vector<16x128xf32>
    %103 = tpu.matmul %100, %102, %cst_75 {dimension_numbers = #tpu.dot_dimension_numbers<[1], [0], [0], [1], [0, 0, 1, 1], [], []>} : vector<16x128xbf16>, vector<128x128xbf16>, vector<16x128xf32> -> vector<16x128xf32>
    %104 = arith.addf %97, %103 : vector<16x128xf32>
    %c208 = arith.constant 208 : index
    %c0_76 = arith.constant 0 : index
    %105 = vector.load %arg4[%c208, %c0_76] : memref<256x64xbf16, #tpu.memory_space<vmem>>, vector<16x64xbf16>
    %cst_77 = arith.constant dense<0.000000e+00> : vector<16x128xf32>
    %106 = tpu.matmul %105, %12, %cst_77 {dimension_numbers = #tpu.dot_dimension_numbers<[1], [0], [0], [1], [0, 0, 1, 1], [], []>} : vector<16x64xbf16>, vector<64x128xbf16>, vector<16x128xf32> -> vector<16x128xf32>
    %107 = arith.truncf %106 : vector<16x128xf32> to vector<16x128xbf16>
    %c13 = arith.constant 13 : index
    %c0_78 = arith.constant 0 : index
    %c0_79 = arith.constant 0 : index
    %108 = vector.load %arg5[%c13, %c0_78, %c0_79] : memref<16x128x128xbf16, #tpu.memory_space<vmem>>, vector<1x128x128xbf16>
    %109 = vector.shape_cast %108 : vector<1x128x128xbf16> to vector<128x128xbf16>
    %cst_80 = arith.constant dense<0.000000e+00> : vector<16x128xf32>
    %110 = tpu.matmul %107, %109, %cst_80 {dimension_numbers = #tpu.dot_dimension_numbers<[1], [0], [0], [1], [0, 0, 1, 1], [], []>} : vector<16x128xbf16>, vector<128x128xbf16>, vector<16x128xf32> -> vector<16x128xf32>
    %111 = arith.addf %104, %110 : vector<16x128xf32>
    %c224 = arith.constant 224 : index
    %c0_81 = arith.constant 0 : index
    %112 = vector.load %arg4[%c224, %c0_81] : memref<256x64xbf16, #tpu.memory_space<vmem>>, vector<16x64xbf16>
    %cst_82 = arith.constant dense<0.000000e+00> : vector<16x128xf32>
    %113 = tpu.matmul %112, %12, %cst_82 {dimension_numbers = #tpu.dot_dimension_numbers<[1], [0], [0], [1], [0, 0, 1, 1], [], []>} : vector<16x64xbf16>, vector<64x128xbf16>, vector<16x128xf32> -> vector<16x128xf32>
    %114 = arith.truncf %113 : vector<16x128xf32> to vector<16x128xbf16>
    %c14 = arith.constant 14 : index
    %c0_83 = arith.constant 0 : index
    %c0_84 = arith.constant 0 : index
    %115 = vector.load %arg5[%c14, %c0_83, %c0_84] : memref<16x128x128xbf16, #tpu.memory_space<vmem>>, vector<1x128x128xbf16>
    %116 = vector.shape_cast %115 : vector<1x128x128xbf16> to vector<128x128xbf16>
    %cst_85 = arith.constant dense<0.000000e+00> : vector<16x128xf32>
    %117 = tpu.matmul %114, %116, %cst_85 {dimension_numbers = #tpu.dot_dimension_numbers<[1], [0], [0], [1], [0, 0, 1, 1], [], []>} : vector<16x128xbf16>, vector<128x128xbf16>, vector<16x128xf32> -> vector<16x128xf32>
    %118 = arith.addf %111, %117 : vector<16x128xf32>
    %c240 = arith.constant 240 : index
    %c0_86 = arith.constant 0 : index
    %119 = vector.load %arg4[%c240, %c0_86] : memref<256x64xbf16, #tpu.memory_space<vmem>>, vector<16x64xbf16>
    %cst_87 = arith.constant dense<0.000000e+00> : vector<16x128xf32>
    %120 = tpu.matmul %119, %12, %cst_87 {dimension_numbers = #tpu.dot_dimension_numbers<[1], [0], [0], [1], [0, 0, 1, 1], [], []>} : vector<16x64xbf16>, vector<64x128xbf16>, vector<16x128xf32> -> vector<16x128xf32>
    %121 = arith.truncf %120 : vector<16x128xf32> to vector<16x128xbf16>
    %c15 = arith.constant 15 : index
    %c0_88 = arith.constant 0 : index
    %c0_89 = arith.constant 0 : index
    %122 = vector.load %arg5[%c15, %c0_88, %c0_89] : memref<16x128x128xbf16, #tpu.memory_space<vmem>>, vector<1x128x128xbf16>
    %123 = vector.shape_cast %122 : vector<1x128x128xbf16> to vector<128x128xbf16>
    %cst_90 = arith.constant dense<0.000000e+00> : vector<16x128xf32>
    %124 = tpu.matmul %121, %123, %cst_90 {dimension_numbers = #tpu.dot_dimension_numbers<[1], [0], [0], [1], [0, 0, 1, 1], [], []>} : vector<16x128xbf16>, vector<128x128xbf16>, vector<16x128xf32> -> vector<16x128xf32>
    %125 = arith.addf %118, %124 : vector<16x128xf32>
    %c0_91 = arith.constant 0 : index
    %c0_92 = arith.constant 0 : index
    %126 = vector.load %arg6[%c0_91, %c0_92] : memref<1x128xf32, #tpu.memory_space<vmem>>, vector<1x128xf32>
    %127 = vector.broadcast %126 : vector<1x128xf32> to vector<16x128xf32>
    %128 = arith.addf %125, %127 : vector<16x128xf32>
    %cst_93 = arith.constant 0.000000e+00 : f32
    %129 = vector.broadcast %cst_93 : f32 to vector<16x128xf32>
    %130 = arith.cmpf oge, %128, %129 : vector<16x128xf32>
    %cst_94 = arith.constant 2.000000e-01 : f32
    %131 = vector.broadcast %cst_94 : f32 to vector<16x128xf32>
    %132 = arith.mulf %131, %128 : vector<16x128xf32>
    %133 = arith.select %130, %128, %132 : vector<16x128xi1>, vector<16x128xf32>
    %134 = arith.truncf %133 : vector<16x128xf32> to vector<16x128xbf16>
    %cst_95 = arith.constant 0.000000e+00 : f32
    %135 = vector.broadcast %cst_95 : f32 to vector<16x128xf32>
    %c0_96 = arith.constant 0 : index
    %c0_97 = arith.constant 0 : index
    %136 = vector.load %arg7[%c0_96, %c0_97] : memref<400x16xbf16, #tpu.memory_space<vmem>>, vector<16x16xbf16>
    %cst_98 = arith.constant dense<0.000000e+00> : vector<16x128xf32>
    %137 = tpu.matmul %136, %134, %cst_98 {dimension_numbers = #tpu.dot_dimension_numbers<[1], [0], [0], [1], [0, 0, 1, 1], [], []>} : vector<16x16xbf16>, vector<16x128xbf16>, vector<16x128xf32> -> vector<16x128xf32>
    %138 = arith.truncf %137 : vector<16x128xf32> to vector<16x128xbf16>
    %c0_99 = arith.constant 0 : index
    %c0_100 = arith.constant 0 : index
    %c0_101 = arith.constant 0 : index
    %139 = vector.load %arg8[%c0_99, %c0_100, %c0_101] : memref<25x128x128xbf16, #tpu.memory_space<vmem>>, vector<1x128x128xbf16>
    %140 = vector.shape_cast %139 : vector<1x128x128xbf16> to vector<128x128xbf16>
    %cst_102 = arith.constant dense<0.000000e+00> : vector<16x128xf32>
    %141 = tpu.matmul %138, %140, %cst_102 {dimension_numbers = #tpu.dot_dimension_numbers<[1], [0], [0], [1], [0, 0, 1, 1], [], []>} : vector<16x128xbf16>, vector<128x128xbf16>, vector<16x128xf32> -> vector<16x128xf32>
    %142 = arith.addf %135, %141 : vector<16x128xf32>
    %c16_103 = arith.constant 16 : index
    %c0_104 = arith.constant 0 : index
    %143 = vector.load %arg7[%c16_103, %c0_104] : memref<400x16xbf16, #tpu.memory_space<vmem>>, vector<16x16xbf16>
    %cst_105 = arith.constant dense<0.000000e+00> : vector<16x128xf32>
    %144 = tpu.matmul %143, %134, %cst_105 {dimension_numbers = #tpu.dot_dimension_numbers<[1], [0], [0], [1], [0, 0, 1, 1], [], []>} : vector<16x16xbf16>, vector<16x128xbf16>, vector<16x128xf32> -> vector<16x128xf32>
    %145 = arith.truncf %144 : vector<16x128xf32> to vector<16x128xbf16>
    %c1_106 = arith.constant 1 : index
    %c0_107 = arith.constant 0 : index
    %c0_108 = arith.constant 0 : index
    %146 = vector.load %arg8[%c1_106, %c0_107, %c0_108] : memref<25x128x128xbf16, #tpu.memory_space<vmem>>, vector<1x128x128xbf16>
    %147 = vector.shape_cast %146 : vector<1x128x128xbf16> to vector<128x128xbf16>
    %cst_109 = arith.constant dense<0.000000e+00> : vector<16x128xf32>
    %148 = tpu.matmul %145, %147, %cst_109 {dimension_numbers = #tpu.dot_dimension_numbers<[1], [0], [0], [1], [0, 0, 1, 1], [], []>} : vector<16x128xbf16>, vector<128x128xbf16>, vector<16x128xf32> -> vector<16x128xf32>
    %149 = arith.addf %142, %148 : vector<16x128xf32>
    %c32_110 = arith.constant 32 : index
    %c0_111 = arith.constant 0 : index
    %150 = vector.load %arg7[%c32_110, %c0_111] : memref<400x16xbf16, #tpu.memory_space<vmem>>, vector<16x16xbf16>
    %cst_112 = arith.constant dense<0.000000e+00> : vector<16x128xf32>
    %151 = tpu.matmul %150, %134, %cst_112 {dimension_numbers = #tpu.dot_dimension_numbers<[1], [0], [0], [1], [0, 0, 1, 1], [], []>} : vector<16x16xbf16>, vector<16x128xbf16>, vector<16x128xf32> -> vector<16x128xf32>
    %152 = arith.truncf %151 : vector<16x128xf32> to vector<16x128xbf16>
    %c2_113 = arith.constant 2 : index
    %c0_114 = arith.constant 0 : index
    %c0_115 = arith.constant 0 : index
    %153 = vector.load %arg8[%c2_113, %c0_114, %c0_115] : memref<25x128x128xbf16, #tpu.memory_space<vmem>>, vector<1x128x128xbf16>
    %154 = vector.shape_cast %153 : vector<1x128x128xbf16> to vector<128x128xbf16>
    %cst_116 = arith.constant dense<0.000000e+00> : vector<16x128xf32>
    %155 = tpu.matmul %152, %154, %cst_116 {dimension_numbers = #tpu.dot_dimension_numbers<[1], [0], [0], [1], [0, 0, 1, 1], [], []>} : vector<16x128xbf16>, vector<128x128xbf16>, vector<16x128xf32> -> vector<16x128xf32>
    %156 = arith.addf %149, %155 : vector<16x128xf32>
    %c48_117 = arith.constant 48 : index
    %c0_118 = arith.constant 0 : index
    %157 = vector.load %arg7[%c48_117, %c0_118] : memref<400x16xbf16, #tpu.memory_space<vmem>>, vector<16x16xbf16>
    %cst_119 = arith.constant dense<0.000000e+00> : vector<16x128xf32>
    %158 = tpu.matmul %157, %134, %cst_119 {dimension_numbers = #tpu.dot_dimension_numbers<[1], [0], [0], [1], [0, 0, 1, 1], [], []>} : vector<16x16xbf16>, vector<16x128xbf16>, vector<16x128xf32> -> vector<16x128xf32>
    %159 = arith.truncf %158 : vector<16x128xf32> to vector<16x128xbf16>
    %c3_120 = arith.constant 3 : index
    %c0_121 = arith.constant 0 : index
    %c0_122 = arith.constant 0 : index
    %160 = vector.load %arg8[%c3_120, %c0_121, %c0_122] : memref<25x128x128xbf16, #tpu.memory_space<vmem>>, vector<1x128x128xbf16>
    %161 = vector.shape_cast %160 : vector<1x128x128xbf16> to vector<128x128xbf16>
    %cst_123 = arith.constant dense<0.000000e+00> : vector<16x128xf32>
    %162 = tpu.matmul %159, %161, %cst_123 {dimension_numbers = #tpu.dot_dimension_numbers<[1], [0], [0], [1], [0, 0, 1, 1], [], []>} : vector<16x128xbf16>, vector<128x128xbf16>, vector<16x128xf32> -> vector<16x128xf32>
    %163 = arith.addf %156, %162 : vector<16x128xf32>
    %c64_124 = arith.constant 64 : index
    %c0_125 = arith.constant 0 : index
    %164 = vector.load %arg7[%c64_124, %c0_125] : memref<400x16xbf16, #tpu.memory_space<vmem>>, vector<16x16xbf16>
    %cst_126 = arith.constant dense<0.000000e+00> : vector<16x128xf32>
    %165 = tpu.matmul %164, %134, %cst_126 {dimension_numbers = #tpu.dot_dimension_numbers<[1], [0], [0], [1], [0, 0, 1, 1], [], []>} : vector<16x16xbf16>, vector<16x128xbf16>, vector<16x128xf32> -> vector<16x128xf32>
    %166 = arith.truncf %165 : vector<16x128xf32> to vector<16x128xbf16>
    %c4_127 = arith.constant 4 : index
    %c0_128 = arith.constant 0 : index
    %c0_129 = arith.constant 0 : index
    %167 = vector.load %arg8[%c4_127, %c0_128, %c0_129] : memref<25x128x128xbf16, #tpu.memory_space<vmem>>, vector<1x128x128xbf16>
    %168 = vector.shape_cast %167 : vector<1x128x128xbf16> to vector<128x128xbf16>
    %cst_130 = arith.constant dense<0.000000e+00> : vector<16x128xf32>
    %169 = tpu.matmul %166, %168, %cst_130 {dimension_numbers = #tpu.dot_dimension_numbers<[1], [0], [0], [1], [0, 0, 1, 1], [], []>} : vector<16x128xbf16>, vector<128x128xbf16>, vector<16x128xf32> -> vector<16x128xf32>
    %170 = arith.addf %163, %169 : vector<16x128xf32>
    %c80_131 = arith.constant 80 : index
    %c0_132 = arith.constant 0 : index
    %171 = vector.load %arg7[%c80_131, %c0_132] : memref<400x16xbf16, #tpu.memory_space<vmem>>, vector<16x16xbf16>
    %cst_133 = arith.constant dense<0.000000e+00> : vector<16x128xf32>
    %172 = tpu.matmul %171, %134, %cst_133 {dimension_numbers = #tpu.dot_dimension_numbers<[1], [0], [0], [1], [0, 0, 1, 1], [], []>} : vector<16x16xbf16>, vector<16x128xbf16>, vector<16x128xf32> -> vector<16x128xf32>
    %173 = arith.truncf %172 : vector<16x128xf32> to vector<16x128xbf16>
    %c5_134 = arith.constant 5 : index
    %c0_135 = arith.constant 0 : index
    %c0_136 = arith.constant 0 : index
    %174 = vector.load %arg8[%c5_134, %c0_135, %c0_136] : memref<25x128x128xbf16, #tpu.memory_space<vmem>>, vector<1x128x128xbf16>
    %175 = vector.shape_cast %174 : vector<1x128x128xbf16> to vector<128x128xbf16>
    %cst_137 = arith.constant dense<0.000000e+00> : vector<16x128xf32>
    %176 = tpu.matmul %173, %175, %cst_137 {dimension_numbers = #tpu.dot_dimension_numbers<[1], [0], [0], [1], [0, 0, 1, 1], [], []>} : vector<16x128xbf16>, vector<128x128xbf16>, vector<16x128xf32> -> vector<16x128xf32>
    %177 = arith.addf %170, %176 : vector<16x128xf32>
    %c96_138 = arith.constant 96 : index
    %c0_139 = arith.constant 0 : index
    %178 = vector.load %arg7[%c96_138, %c0_139] : memref<400x16xbf16, #tpu.memory_space<vmem>>, vector<16x16xbf16>
    %cst_140 = arith.constant dense<0.000000e+00> : vector<16x128xf32>
    %179 = tpu.matmul %178, %134, %cst_140 {dimension_numbers = #tpu.dot_dimension_numbers<[1], [0], [0], [1], [0, 0, 1, 1], [], []>} : vector<16x16xbf16>, vector<16x128xbf16>, vector<16x128xf32> -> vector<16x128xf32>
    %180 = arith.truncf %179 : vector<16x128xf32> to vector<16x128xbf16>
    %c6_141 = arith.constant 6 : index
    %c0_142 = arith.constant 0 : index
    %c0_143 = arith.constant 0 : index
    %181 = vector.load %arg8[%c6_141, %c0_142, %c0_143] : memref<25x128x128xbf16, #tpu.memory_space<vmem>>, vector<1x128x128xbf16>
    %182 = vector.shape_cast %181 : vector<1x128x128xbf16> to vector<128x128xbf16>
    %cst_144 = arith.constant dense<0.000000e+00> : vector<16x128xf32>
    %183 = tpu.matmul %180, %182, %cst_144 {dimension_numbers = #tpu.dot_dimension_numbers<[1], [0], [0], [1], [0, 0, 1, 1], [], []>} : vector<16x128xbf16>, vector<128x128xbf16>, vector<16x128xf32> -> vector<16x128xf32>
    %184 = arith.addf %177, %183 : vector<16x128xf32>
    %c112_145 = arith.constant 112 : index
    %c0_146 = arith.constant 0 : index
    %185 = vector.load %arg7[%c112_145, %c0_146] : memref<400x16xbf16, #tpu.memory_space<vmem>>, vector<16x16xbf16>
    %cst_147 = arith.constant dense<0.000000e+00> : vector<16x128xf32>
    %186 = tpu.matmul %185, %134, %cst_147 {dimension_numbers = #tpu.dot_dimension_numbers<[1], [0], [0], [1], [0, 0, 1, 1], [], []>} : vector<16x16xbf16>, vector<16x128xbf16>, vector<16x128xf32> -> vector<16x128xf32>
    %187 = arith.truncf %186 : vector<16x128xf32> to vector<16x128xbf16>
    %c7_148 = arith.constant 7 : index
    %c0_149 = arith.constant 0 : index
    %c0_150 = arith.constant 0 : index
    %188 = vector.load %arg8[%c7_148, %c0_149, %c0_150] : memref<25x128x128xbf16, #tpu.memory_space<vmem>>, vector<1x128x128xbf16>
    %189 = vector.shape_cast %188 : vector<1x128x128xbf16> to vector<128x128xbf16>
    %cst_151 = arith.constant dense<0.000000e+00> : vector<16x128xf32>
    %190 = tpu.matmul %187, %189, %cst_151 {dimension_numbers = #tpu.dot_dimension_numbers<[1], [0], [0], [1], [0, 0, 1, 1], [], []>} : vector<16x128xbf16>, vector<128x128xbf16>, vector<16x128xf32> -> vector<16x128xf32>
    %191 = arith.addf %184, %190 : vector<16x128xf32>
    %c128_152 = arith.constant 128 : index
    %c0_153 = arith.constant 0 : index
    %192 = vector.load %arg7[%c128_152, %c0_153] : memref<400x16xbf16, #tpu.memory_space<vmem>>, vector<16x16xbf16>
    %cst_154 = arith.constant dense<0.000000e+00> : vector<16x128xf32>
    %193 = tpu.matmul %192, %134, %cst_154 {dimension_numbers = #tpu.dot_dimension_numbers<[1], [0], [0], [1], [0, 0, 1, 1], [], []>} : vector<16x16xbf16>, vector<16x128xbf16>, vector<16x128xf32> -> vector<16x128xf32>
    %194 = arith.truncf %193 : vector<16x128xf32> to vector<16x128xbf16>
    %c8_155 = arith.constant 8 : index
    %c0_156 = arith.constant 0 : index
    %c0_157 = arith.constant 0 : index
    %195 = vector.load %arg8[%c8_155, %c0_156, %c0_157] : memref<25x128x128xbf16, #tpu.memory_space<vmem>>, vector<1x128x128xbf16>
    %196 = vector.shape_cast %195 : vector<1x128x128xbf16> to vector<128x128xbf16>
    %cst_158 = arith.constant dense<0.000000e+00> : vector<16x128xf32>
    %197 = tpu.matmul %194, %196, %cst_158 {dimension_numbers = #tpu.dot_dimension_numbers<[1], [0], [0], [1], [0, 0, 1, 1], [], []>} : vector<16x128xbf16>, vector<128x128xbf16>, vector<16x128xf32> -> vector<16x128xf32>
    %198 = arith.addf %191, %197 : vector<16x128xf32>
    %c144_159 = arith.constant 144 : index
    %c0_160 = arith.constant 0 : index
    %199 = vector.load %arg7[%c144_159, %c0_160] : memref<400x16xbf16, #tpu.memory_space<vmem>>, vector<16x16xbf16>
    %cst_161 = arith.constant dense<0.000000e+00> : vector<16x128xf32>
    %200 = tpu.matmul %199, %134, %cst_161 {dimension_numbers = #tpu.dot_dimension_numbers<[1], [0], [0], [1], [0, 0, 1, 1], [], []>} : vector<16x16xbf16>, vector<16x128xbf16>, vector<16x128xf32> -> vector<16x128xf32>
    %201 = arith.truncf %200 : vector<16x128xf32> to vector<16x128xbf16>
    %c9_162 = arith.constant 9 : index
    %c0_163 = arith.constant 0 : index
    %c0_164 = arith.constant 0 : index
    %202 = vector.load %arg8[%c9_162, %c0_163, %c0_164] : memref<25x128x128xbf16, #tpu.memory_space<vmem>>, vector<1x128x128xbf16>
    %203 = vector.shape_cast %202 : vector<1x128x128xbf16> to vector<128x128xbf16>
    %cst_165 = arith.constant dense<0.000000e+00> : vector<16x128xf32>
    %204 = tpu.matmul %201, %203, %cst_165 {dimension_numbers = #tpu.dot_dimension_numbers<[1], [0], [0], [1], [0, 0, 1, 1], [], []>} : vector<16x128xbf16>, vector<128x128xbf16>, vector<16x128xf32> -> vector<16x128xf32>
    %205 = arith.addf %198, %204 : vector<16x128xf32>
    %c160_166 = arith.constant 160 : index
    %c0_167 = arith.constant 0 : index
    %206 = vector.load %arg7[%c160_166, %c0_167] : memref<400x16xbf16, #tpu.memory_space<vmem>>, vector<16x16xbf16>
    %cst_168 = arith.constant dense<0.000000e+00> : vector<16x128xf32>
    %207 = tpu.matmul %206, %134, %cst_168 {dimension_numbers = #tpu.dot_dimension_numbers<[1], [0], [0], [1], [0, 0, 1, 1], [], []>} : vector<16x16xbf16>, vector<16x128xbf16>, vector<16x128xf32> -> vector<16x128xf32>
    %208 = arith.truncf %207 : vector<16x128xf32> to vector<16x128xbf16>
    %c10_169 = arith.constant 10 : index
    %c0_170 = arith.constant 0 : index
    %c0_171 = arith.constant 0 : index
    %209 = vector.load %arg8[%c10_169, %c0_170, %c0_171] : memref<25x128x128xbf16, #tpu.memory_space<vmem>>, vector<1x128x128xbf16>
    %210 = vector.shape_cast %209 : vector<1x128x128xbf16> to vector<128x128xbf16>
    %cst_172 = arith.constant dense<0.000000e+00> : vector<16x128xf32>
    %211 = tpu.matmul %208, %210, %cst_172 {dimension_numbers = #tpu.dot_dimension_numbers<[1], [0], [0], [1], [0, 0, 1, 1], [], []>} : vector<16x128xbf16>, vector<128x128xbf16>, vector<16x128xf32> -> vector<16x128xf32>
    %212 = arith.addf %205, %211 : vector<16x128xf32>
    %c176_173 = arith.constant 176 : index
    %c0_174 = arith.constant 0 : index
    %213 = vector.load %arg7[%c176_173, %c0_174] : memref<400x16xbf16, #tpu.memory_space<vmem>>, vector<16x16xbf16>
    %cst_175 = arith.constant dense<0.000000e+00> : vector<16x128xf32>
    %214 = tpu.matmul %213, %134, %cst_175 {dimension_numbers = #tpu.dot_dimension_numbers<[1], [0], [0], [1], [0, 0, 1, 1], [], []>} : vector<16x16xbf16>, vector<16x128xbf16>, vector<16x128xf32> -> vector<16x128xf32>
    %215 = arith.truncf %214 : vector<16x128xf32> to vector<16x128xbf16>
    %c11_176 = arith.constant 11 : index
    %c0_177 = arith.constant 0 : index
    %c0_178 = arith.constant 0 : index
    %216 = vector.load %arg8[%c11_176, %c0_177, %c0_178] : memref<25x128x128xbf16, #tpu.memory_space<vmem>>, vector<1x128x128xbf16>
    %217 = vector.shape_cast %216 : vector<1x128x128xbf16> to vector<128x128xbf16>
    %cst_179 = arith.constant dense<0.000000e+00> : vector<16x128xf32>
    %218 = tpu.matmul %215, %217, %cst_179 {dimension_numbers = #tpu.dot_dimension_numbers<[1], [0], [0], [1], [0, 0, 1, 1], [], []>} : vector<16x128xbf16>, vector<128x128xbf16>, vector<16x128xf32> -> vector<16x128xf32>
    %219 = arith.addf %212, %218 : vector<16x128xf32>
    %c192_180 = arith.constant 192 : index
    %c0_181 = arith.constant 0 : index
    %220 = vector.load %arg7[%c192_180, %c0_181] : memref<400x16xbf16, #tpu.memory_space<vmem>>, vector<16x16xbf16>
    %cst_182 = arith.constant dense<0.000000e+00> : vector<16x128xf32>
    %221 = tpu.matmul %220, %134, %cst_182 {dimension_numbers = #tpu.dot_dimension_numbers<[1], [0], [0], [1], [0, 0, 1, 1], [], []>} : vector<16x16xbf16>, vector<16x128xbf16>, vector<16x128xf32> -> vector<16x128xf32>
    %222 = arith.truncf %221 : vector<16x128xf32> to vector<16x128xbf16>
    %c12_183 = arith.constant 12 : index
    %c0_184 = arith.constant 0 : index
    %c0_185 = arith.constant 0 : index
    %223 = vector.load %arg8[%c12_183, %c0_184, %c0_185] : memref<25x128x128xbf16, #tpu.memory_space<vmem>>, vector<1x128x128xbf16>
    %224 = vector.shape_cast %223 : vector<1x128x128xbf16> to vector<128x128xbf16>
    %cst_186 = arith.constant dense<0.000000e+00> : vector<16x128xf32>
    %225 = tpu.matmul %222, %224, %cst_186 {dimension_numbers = #tpu.dot_dimension_numbers<[1], [0], [0], [1], [0, 0, 1, 1], [], []>} : vector<16x128xbf16>, vector<128x128xbf16>, vector<16x128xf32> -> vector<16x128xf32>
    %226 = arith.addf %219, %225 : vector<16x128xf32>
    %c208_187 = arith.constant 208 : index
    %c0_188 = arith.constant 0 : index
    %227 = vector.load %arg7[%c208_187, %c0_188] : memref<400x16xbf16, #tpu.memory_space<vmem>>, vector<16x16xbf16>
    %cst_189 = arith.constant dense<0.000000e+00> : vector<16x128xf32>
    %228 = tpu.matmul %227, %134, %cst_189 {dimension_numbers = #tpu.dot_dimension_numbers<[1], [0], [0], [1], [0, 0, 1, 1], [], []>} : vector<16x16xbf16>, vector<16x128xbf16>, vector<16x128xf32> -> vector<16x128xf32>
    %229 = arith.truncf %228 : vector<16x128xf32> to vector<16x128xbf16>
    %c13_190 = arith.constant 13 : index
    %c0_191 = arith.constant 0 : index
    %c0_192 = arith.constant 0 : index
    %230 = vector.load %arg8[%c13_190, %c0_191, %c0_192] : memref<25x128x128xbf16, #tpu.memory_space<vmem>>, vector<1x128x128xbf16>
    %231 = vector.shape_cast %230 : vector<1x128x128xbf16> to vector<128x128xbf16>
    %cst_193 = arith.constant dense<0.000000e+00> : vector<16x128xf32>
    %232 = tpu.matmul %229, %231, %cst_193 {dimension_numbers = #tpu.dot_dimension_numbers<[1], [0], [0], [1], [0, 0, 1, 1], [], []>} : vector<16x128xbf16>, vector<128x128xbf16>, vector<16x128xf32> -> vector<16x128xf32>
    %233 = arith.addf %226, %232 : vector<16x128xf32>
    %c224_194 = arith.constant 224 : index
    %c0_195 = arith.constant 0 : index
    %234 = vector.load %arg7[%c224_194, %c0_195] : memref<400x16xbf16, #tpu.memory_space<vmem>>, vector<16x16xbf16>
    %cst_196 = arith.constant dense<0.000000e+00> : vector<16x128xf32>
    %235 = tpu.matmul %234, %134, %cst_196 {dimension_numbers = #tpu.dot_dimension_numbers<[1], [0], [0], [1], [0, 0, 1, 1], [], []>} : vector<16x16xbf16>, vector<16x128xbf16>, vector<16x128xf32> -> vector<16x128xf32>
    %236 = arith.truncf %235 : vector<16x128xf32> to vector<16x128xbf16>
    %c14_197 = arith.constant 14 : index
    %c0_198 = arith.constant 0 : index
    %c0_199 = arith.constant 0 : index
    %237 = vector.load %arg8[%c14_197, %c0_198, %c0_199] : memref<25x128x128xbf16, #tpu.memory_space<vmem>>, vector<1x128x128xbf16>
    %238 = vector.shape_cast %237 : vector<1x128x128xbf16> to vector<128x128xbf16>
    %cst_200 = arith.constant dense<0.000000e+00> : vector<16x128xf32>
    %239 = tpu.matmul %236, %238, %cst_200 {dimension_numbers = #tpu.dot_dimension_numbers<[1], [0], [0], [1], [0, 0, 1, 1], [], []>} : vector<16x128xbf16>, vector<128x128xbf16>, vector<16x128xf32> -> vector<16x128xf32>
    %240 = arith.addf %233, %239 : vector<16x128xf32>
    %c240_201 = arith.constant 240 : index
    %c0_202 = arith.constant 0 : index
    %241 = vector.load %arg7[%c240_201, %c0_202] : memref<400x16xbf16, #tpu.memory_space<vmem>>, vector<16x16xbf16>
    %cst_203 = arith.constant dense<0.000000e+00> : vector<16x128xf32>
    %242 = tpu.matmul %241, %134, %cst_203 {dimension_numbers = #tpu.dot_dimension_numbers<[1], [0], [0], [1], [0, 0, 1, 1], [], []>} : vector<16x16xbf16>, vector<16x128xbf16>, vector<16x128xf32> -> vector<16x128xf32>
    %243 = arith.truncf %242 : vector<16x128xf32> to vector<16x128xbf16>
    %c15_204 = arith.constant 15 : index
    %c0_205 = arith.constant 0 : index
    %c0_206 = arith.constant 0 : index
    %244 = vector.load %arg8[%c15_204, %c0_205, %c0_206] : memref<25x128x128xbf16, #tpu.memory_space<vmem>>, vector<1x128x128xbf16>
    %245 = vector.shape_cast %244 : vector<1x128x128xbf16> to vector<128x128xbf16>
    %cst_207 = arith.constant dense<0.000000e+00> : vector<16x128xf32>
    %246 = tpu.matmul %243, %245, %cst_207 {dimension_numbers = #tpu.dot_dimension_numbers<[1], [0], [0], [1], [0, 0, 1, 1], [], []>} : vector<16x128xbf16>, vector<128x128xbf16>, vector<16x128xf32> -> vector<16x128xf32>
    %247 = arith.addf %240, %246 : vector<16x128xf32>
    %c256 = arith.constant 256 : index
    %c0_208 = arith.constant 0 : index
    %248 = vector.load %arg7[%c256, %c0_208] : memref<400x16xbf16, #tpu.memory_space<vmem>>, vector<16x16xbf16>
    %cst_209 = arith.constant dense<0.000000e+00> : vector<16x128xf32>
    %249 = tpu.matmul %248, %134, %cst_209 {dimension_numbers = #tpu.dot_dimension_numbers<[1], [0], [0], [1], [0, 0, 1, 1], [], []>} : vector<16x16xbf16>, vector<16x128xbf16>, vector<16x128xf32> -> vector<16x128xf32>
    %250 = arith.truncf %249 : vector<16x128xf32> to vector<16x128xbf16>
    %c16_210 = arith.constant 16 : index
    %c0_211 = arith.constant 0 : index
    %c0_212 = arith.constant 0 : index
    %251 = vector.load %arg8[%c16_210, %c0_211, %c0_212] : memref<25x128x128xbf16, #tpu.memory_space<vmem>>, vector<1x128x128xbf16>
    %252 = vector.shape_cast %251 : vector<1x128x128xbf16> to vector<128x128xbf16>
    %cst_213 = arith.constant dense<0.000000e+00> : vector<16x128xf32>
    %253 = tpu.matmul %250, %252, %cst_213 {dimension_numbers = #tpu.dot_dimension_numbers<[1], [0], [0], [1], [0, 0, 1, 1], [], []>} : vector<16x128xbf16>, vector<128x128xbf16>, vector<16x128xf32> -> vector<16x128xf32>
    %254 = arith.addf %247, %253 : vector<16x128xf32>
    %c272 = arith.constant 272 : index
    %c0_214 = arith.constant 0 : index
    %255 = vector.load %arg7[%c272, %c0_214] : memref<400x16xbf16, #tpu.memory_space<vmem>>, vector<16x16xbf16>
    %cst_215 = arith.constant dense<0.000000e+00> : vector<16x128xf32>
    %256 = tpu.matmul %255, %134, %cst_215 {dimension_numbers = #tpu.dot_dimension_numbers<[1], [0], [0], [1], [0, 0, 1, 1], [], []>} : vector<16x16xbf16>, vector<16x128xbf16>, vector<16x128xf32> -> vector<16x128xf32>
    %257 = arith.truncf %256 : vector<16x128xf32> to vector<16x128xbf16>
    %c17 = arith.constant 17 : index
    %c0_216 = arith.constant 0 : index
    %c0_217 = arith.constant 0 : index
    %258 = vector.load %arg8[%c17, %c0_216, %c0_217] : memref<25x128x128xbf16, #tpu.memory_space<vmem>>, vector<1x128x128xbf16>
    %259 = vector.shape_cast %258 : vector<1x128x128xbf16> to vector<128x128xbf16>
    %cst_218 = arith.constant dense<0.000000e+00> : vector<16x128xf32>
    %260 = tpu.matmul %257, %259, %cst_218 {dimension_numbers = #tpu.dot_dimension_numbers<[1], [0], [0], [1], [0, 0, 1, 1], [], []>} : vector<16x128xbf16>, vector<128x128xbf16>, vector<16x128xf32> -> vector<16x128xf32>
    %261 = arith.addf %254, %260 : vector<16x128xf32>
    %c288 = arith.constant 288 : index
    %c0_219 = arith.constant 0 : index
    %262 = vector.load %arg7[%c288, %c0_219] : memref<400x16xbf16, #tpu.memory_space<vmem>>, vector<16x16xbf16>
    %cst_220 = arith.constant dense<0.000000e+00> : vector<16x128xf32>
    %263 = tpu.matmul %262, %134, %cst_220 {dimension_numbers = #tpu.dot_dimension_numbers<[1], [0], [0], [1], [0, 0, 1, 1], [], []>} : vector<16x16xbf16>, vector<16x128xbf16>, vector<16x128xf32> -> vector<16x128xf32>
    %264 = arith.truncf %263 : vector<16x128xf32> to vector<16x128xbf16>
    %c18 = arith.constant 18 : index
    %c0_221 = arith.constant 0 : index
    %c0_222 = arith.constant 0 : index
    %265 = vector.load %arg8[%c18, %c0_221, %c0_222] : memref<25x128x128xbf16, #tpu.memory_space<vmem>>, vector<1x128x128xbf16>
    %266 = vector.shape_cast %265 : vector<1x128x128xbf16> to vector<128x128xbf16>
    %cst_223 = arith.constant dense<0.000000e+00> : vector<16x128xf32>
    %267 = tpu.matmul %264, %266, %cst_223 {dimension_numbers = #tpu.dot_dimension_numbers<[1], [0], [0], [1], [0, 0, 1, 1], [], []>} : vector<16x128xbf16>, vector<128x128xbf16>, vector<16x128xf32> -> vector<16x128xf32>
    %268 = arith.addf %261, %267 : vector<16x128xf32>
    %c304 = arith.constant 304 : index
    %c0_224 = arith.constant 0 : index
    %269 = vector.load %arg7[%c304, %c0_224] : memref<400x16xbf16, #tpu.memory_space<vmem>>, vector<16x16xbf16>
    %cst_225 = arith.constant dense<0.000000e+00> : vector<16x128xf32>
    %270 = tpu.matmul %269, %134, %cst_225 {dimension_numbers = #tpu.dot_dimension_numbers<[1], [0], [0], [1], [0, 0, 1, 1], [], []>} : vector<16x16xbf16>, vector<16x128xbf16>, vector<16x128xf32> -> vector<16x128xf32>
    %271 = arith.truncf %270 : vector<16x128xf32> to vector<16x128xbf16>
    %c19 = arith.constant 19 : index
    %c0_226 = arith.constant 0 : index
    %c0_227 = arith.constant 0 : index
    %272 = vector.load %arg8[%c19, %c0_226, %c0_227] : memref<25x128x128xbf16, #tpu.memory_space<vmem>>, vector<1x128x128xbf16>
    %273 = vector.shape_cast %272 : vector<1x128x128xbf16> to vector<128x128xbf16>
    %cst_228 = arith.constant dense<0.000000e+00> : vector<16x128xf32>
    %274 = tpu.matmul %271, %273, %cst_228 {dimension_numbers = #tpu.dot_dimension_numbers<[1], [0], [0], [1], [0, 0, 1, 1], [], []>} : vector<16x128xbf16>, vector<128x128xbf16>, vector<16x128xf32> -> vector<16x128xf32>
    %275 = arith.addf %268, %274 : vector<16x128xf32>
    %c320 = arith.constant 320 : index
    %c0_229 = arith.constant 0 : index
    %276 = vector.load %arg7[%c320, %c0_229] : memref<400x16xbf16, #tpu.memory_space<vmem>>, vector<16x16xbf16>
    %cst_230 = arith.constant dense<0.000000e+00> : vector<16x128xf32>
    %277 = tpu.matmul %276, %134, %cst_230 {dimension_numbers = #tpu.dot_dimension_numbers<[1], [0], [0], [1], [0, 0, 1, 1], [], []>} : vector<16x16xbf16>, vector<16x128xbf16>, vector<16x128xf32> -> vector<16x128xf32>
    %278 = arith.truncf %277 : vector<16x128xf32> to vector<16x128xbf16>
    %c20 = arith.constant 20 : index
    %c0_231 = arith.constant 0 : index
    %c0_232 = arith.constant 0 : index
    %279 = vector.load %arg8[%c20, %c0_231, %c0_232] : memref<25x128x128xbf16, #tpu.memory_space<vmem>>, vector<1x128x128xbf16>
    %280 = vector.shape_cast %279 : vector<1x128x128xbf16> to vector<128x128xbf16>
    %cst_233 = arith.constant dense<0.000000e+00> : vector<16x128xf32>
    %281 = tpu.matmul %278, %280, %cst_233 {dimension_numbers = #tpu.dot_dimension_numbers<[1], [0], [0], [1], [0, 0, 1, 1], [], []>} : vector<16x128xbf16>, vector<128x128xbf16>, vector<16x128xf32> -> vector<16x128xf32>
    %282 = arith.addf %275, %281 : vector<16x128xf32>
    %c336 = arith.constant 336 : index
    %c0_234 = arith.constant 0 : index
    %283 = vector.load %arg7[%c336, %c0_234] : memref<400x16xbf16, #tpu.memory_space<vmem>>, vector<16x16xbf16>
    %cst_235 = arith.constant dense<0.000000e+00> : vector<16x128xf32>
    %284 = tpu.matmul %283, %134, %cst_235 {dimension_numbers = #tpu.dot_dimension_numbers<[1], [0], [0], [1], [0, 0, 1, 1], [], []>} : vector<16x16xbf16>, vector<16x128xbf16>, vector<16x128xf32> -> vector<16x128xf32>
    %285 = arith.truncf %284 : vector<16x128xf32> to vector<16x128xbf16>
    %c21 = arith.constant 21 : index
    %c0_236 = arith.constant 0 : index
    %c0_237 = arith.constant 0 : index
    %286 = vector.load %arg8[%c21, %c0_236, %c0_237] : memref<25x128x128xbf16, #tpu.memory_space<vmem>>, vector<1x128x128xbf16>
    %287 = vector.shape_cast %286 : vector<1x128x128xbf16> to vector<128x128xbf16>
    %cst_238 = arith.constant dense<0.000000e+00> : vector<16x128xf32>
    %288 = tpu.matmul %285, %287, %cst_238 {dimension_numbers = #tpu.dot_dimension_numbers<[1], [0], [0], [1], [0, 0, 1, 1], [], []>} : vector<16x128xbf16>, vector<128x128xbf16>, vector<16x128xf32> -> vector<16x128xf32>
    %289 = arith.addf %282, %288 : vector<16x128xf32>
    %c352 = arith.constant 352 : index
    %c0_239 = arith.constant 0 : index
    %290 = vector.load %arg7[%c352, %c0_239] : memref<400x16xbf16, #tpu.memory_space<vmem>>, vector<16x16xbf16>
    %cst_240 = arith.constant dense<0.000000e+00> : vector<16x128xf32>
    %291 = tpu.matmul %290, %134, %cst_240 {dimension_numbers = #tpu.dot_dimension_numbers<[1], [0], [0], [1], [0, 0, 1, 1], [], []>} : vector<16x16xbf16>, vector<16x128xbf16>, vector<16x128xf32> -> vector<16x128xf32>
    %292 = arith.truncf %291 : vector<16x128xf32> to vector<16x128xbf16>
    %c22 = arith.constant 22 : index
    %c0_241 = arith.constant 0 : index
    %c0_242 = arith.constant 0 : index
    %293 = vector.load %arg8[%c22, %c0_241, %c0_242] : memref<25x128x128xbf16, #tpu.memory_space<vmem>>, vector<1x128x128xbf16>
    %294 = vector.shape_cast %293 : vector<1x128x128xbf16> to vector<128x128xbf16>
    %cst_243 = arith.constant dense<0.000000e+00> : vector<16x128xf32>
    %295 = tpu.matmul %292, %294, %cst_243 {dimension_numbers = #tpu.dot_dimension_numbers<[1], [0], [0], [1], [0, 0, 1, 1], [], []>} : vector<16x128xbf16>, vector<128x128xbf16>, vector<16x128xf32> -> vector<16x128xf32>
    %296 = arith.addf %289, %295 : vector<16x128xf32>
    %c368 = arith.constant 368 : index
    %c0_244 = arith.constant 0 : index
    %297 = vector.load %arg7[%c368, %c0_244] : memref<400x16xbf16, #tpu.memory_space<vmem>>, vector<16x16xbf16>
    %cst_245 = arith.constant dense<0.000000e+00> : vector<16x128xf32>
    %298 = tpu.matmul %297, %134, %cst_245 {dimension_numbers = #tpu.dot_dimension_numbers<[1], [0], [0], [1], [0, 0, 1, 1], [], []>} : vector<16x16xbf16>, vector<16x128xbf16>, vector<16x128xf32> -> vector<16x128xf32>
    %299 = arith.truncf %298 : vector<16x128xf32> to vector<16x128xbf16>
    %c23 = arith.constant 23 : index
    %c0_246 = arith.constant 0 : index
    %c0_247 = arith.constant 0 : index
    %300 = vector.load %arg8[%c23, %c0_246, %c0_247] : memref<25x128x128xbf16, #tpu.memory_space<vmem>>, vector<1x128x128xbf16>
    %301 = vector.shape_cast %300 : vector<1x128x128xbf16> to vector<128x128xbf16>
    %cst_248 = arith.constant dense<0.000000e+00> : vector<16x128xf32>
    %302 = tpu.matmul %299, %301, %cst_248 {dimension_numbers = #tpu.dot_dimension_numbers<[1], [0], [0], [1], [0, 0, 1, 1], [], []>} : vector<16x128xbf16>, vector<128x128xbf16>, vector<16x128xf32> -> vector<16x128xf32>
    %303 = arith.addf %296, %302 : vector<16x128xf32>
    %c384 = arith.constant 384 : index
    %c0_249 = arith.constant 0 : index
    %304 = vector.load %arg7[%c384, %c0_249] : memref<400x16xbf16, #tpu.memory_space<vmem>>, vector<16x16xbf16>
    %cst_250 = arith.constant dense<0.000000e+00> : vector<16x128xf32>
    %305 = tpu.matmul %304, %134, %cst_250 {dimension_numbers = #tpu.dot_dimension_numbers<[1], [0], [0], [1], [0, 0, 1, 1], [], []>} : vector<16x16xbf16>, vector<16x128xbf16>, vector<16x128xf32> -> vector<16x128xf32>
    %306 = arith.truncf %305 : vector<16x128xf32> to vector<16x128xbf16>
    %c24 = arith.constant 24 : index
    %c0_251 = arith.constant 0 : index
    %c0_252 = arith.constant 0 : index
    %307 = vector.load %arg8[%c24, %c0_251, %c0_252] : memref<25x128x128xbf16, #tpu.memory_space<vmem>>, vector<1x128x128xbf16>
    %308 = vector.shape_cast %307 : vector<1x128x128xbf16> to vector<128x128xbf16>
    %cst_253 = arith.constant dense<0.000000e+00> : vector<16x128xf32>
    %309 = tpu.matmul %306, %308, %cst_253 {dimension_numbers = #tpu.dot_dimension_numbers<[1], [0], [0], [1], [0, 0, 1, 1], [], []>} : vector<16x128xbf16>, vector<128x128xbf16>, vector<16x128xf32> -> vector<16x128xf32>
    %310 = arith.addf %303, %309 : vector<16x128xf32>
    %c0_254 = arith.constant 0 : index
    %c0_255 = arith.constant 0 : index
    %311 = vector.load %arg9[%c0_254, %c0_255] : memref<1x128xf32, #tpu.memory_space<vmem>>, vector<1x128xf32>
    %312 = vector.broadcast %311 : vector<1x128xf32> to vector<16x128xf32>
    %313 = arith.addf %310, %312 : vector<16x128xf32>
    %cst_256 = arith.constant dense<0xFF800000> : vector<16xf32>
    %314 = vector.multi_reduction <maximumf>, %313, %cst_256 [1] : vector<16x128xf32> to vector<16xf32>
    %315 = vector.shape_cast %314 : vector<16xf32> to vector<16x1xf32>
    %316 = vector.broadcast %315 : vector<16x1xf32> to vector<16x128xf32>
    %317 = arith.subf %313, %316 : vector<16x128xf32>
    %318 = math.exp %317 : vector<16x128xf32>
    %cst_257 = arith.constant dense<0.000000e+00> : vector<16xf32>
    %319 = vector.multi_reduction <add>, %318, %cst_257 [1] : vector<16x128xf32> to vector<16xf32>
    %320 = vector.shape_cast %319 : vector<16xf32> to vector<16x1xf32>
    %321 = tpu.reciprocal %320 {approx = true} : vector<16x1xf32> -> vector<16x1xf32>
    %322 = vector.broadcast %321 : vector<16x1xf32> to vector<16x128xf32>
    %323 = arith.mulf %318, %322 : vector<16x128xf32>
    %c0_258 = arith.constant 0 : index
    %c0_259 = arith.constant 0 : index
    %c0_260 = arith.constant 0 : index
    %324 = vector.load %arg10[%c0_258, %c0_259, %c0_260] : memref<1x16x128xf32, #tpu.memory_space<vmem>>, vector<1x16x128xf32>
    %325 = vector.shape_cast %324 : vector<1x16x128xf32> to vector<16x128xf32>
    %326 = vector.shape_cast %323 : vector<16x128xf32> to vector<1x16x128xf32>
    tpu.vector_store %arg10[%c0_258, %c0_259, %c0_260], %326 {strides = array<i32>} : memref<1x16x128xf32, #tpu.memory_space<vmem>>, vector<1x16x128xf32>,
    return
  }
  func.func @transform_0(%arg0: i32) -> (i32, i32, i32) {
    %c0_i32 = arith.constant 0 : i32
    %c0_i32_0 = arith.constant 0 : i32
    %c0_i32_1 = arith.constant 0 : i32
    return %arg0, %c0_i32, %c0_i32_0 : i32, i32, i32
  }
  func.func @transform_1(%arg0: i32) -> (i32, i32) {
    %c0_i32 = arith.constant 0 : i32
    %c0_i32_0 = arith.constant 0 : i32
    %c0_i32_1 = arith.constant 0 : i32
    return %c0_i32, %c0_i32_0 : i32, i32
  }
  func.func @transform_2(%arg0: i32) -> (i32, i32) {
    %c0_i32 = arith.constant 0 : i32
    %c0_i32_0 = arith.constant 0 : i32
    %c0_i32_1 = arith.constant 0 : i32
    return %c0_i32, %c0_i32_0 : i32, i32
  }
  func.func @transform_3(%arg0: i32) -> (i32, i32) {
    %c0_i32 = arith.constant 0 : i32
    %c0_i32_0 = arith.constant 0 : i32
    %c0_i32_1 = arith.constant 0 : i32
    return %c0_i32, %c0_i32_0 : i32, i32
  }
  func.func @transform_4(%arg0: i32) -> (i32, i32, i32) {
    %c0_i32 = arith.constant 0 : i32
    %c0_i32_0 = arith.constant 0 : i32
    %c0_i32_1 = arith.constant 0 : i32
    %c0_i32_2 = arith.constant 0 : i32
    return %c0_i32, %c0_i32_0, %c0_i32_1 : i32, i32, i32
  }
  func.func @transform_5(%arg0: i32) -> (i32, i32) {
    %c0_i32 = arith.constant 0 : i32
    %c0_i32_0 = arith.constant 0 : i32
    %c0_i32_1 = arith.constant 0 : i32
    return %c0_i32, %c0_i32_0 : i32, i32
  }
  func.func @transform_6(%arg0: i32) -> (i32, i32) {
    %c0_i32 = arith.constant 0 : i32
    %c0_i32_0 = arith.constant 0 : i32
    %c0_i32_1 = arith.constant 0 : i32
    return %c0_i32, %c0_i32_0 : i32, i32
  }
  func.func @transform_7(%arg0: i32) -> (i32, i32, i32) {
    %c0_i32 = arith.constant 0 : i32
    %c0_i32_0 = arith.constant 0 : i32
    %c0_i32_1 = arith.constant 0 : i32
    %c0_i32_2 = arith.constant 0 : i32
    return %c0_i32, %c0_i32_0, %c0_i32_1 : i32, i32, i32
  }
  func.func @transform_8(%arg0: i32) -> (i32, i32) {
    %c0_i32 = arith.constant 0 : i32
    %c0_i32_0 = arith.constant 0 : i32
    %c0_i32_1 = arith.constant 0 : i32
    return %c0_i32, %c0_i32_0 : i32, i32
  }
  func.func @transform_9(%arg0: i32) -> (i32, i32, i32) {
    %c0_i32 = arith.constant 0 : i32
    %c0_i32_0 = arith.constant 0 : i32
    %c0_i32_1 = arith.constant 0 : i32
    return %arg0, %c0_i32, %c0_i32_0 : i32, i32, i32
  }
}

</mosaic_0001>

<llo_original>
// kernel: tpu_custom_call.1
$region0: #{tpu_custom_call.1}
  #allocation0 [shape = 'u32[]', space=smem, size = 0x4, offset = 0x4, fixed_abs, tag = 'smem constant byte address 0x4 - core index']
  #allocation1 [shape = 'u32[72,128]{1,0:T(1,128)}', space=vmem, size = 0x9000, scoped, tag = 'internal scratch']
  %s0 = inlined_call_operand.vmem [shape: bf16[2,64,128], index: 0, kind: input, shape index: {}]
  %s1 = inlined_call_operand.vmem [shape: bf16[128,128], index: 1, kind: input, shape index: {}]
  %s2 = inlined_call_operand.vmem [shape: f32[1,128], index: 2, kind: input, shape index: {}]
  %s3 = inlined_call_operand.vmem [shape: bf16[256,64], index: 3, kind: input, shape index: {}]
  %s4 = inlined_call_operand.hbm [shape: bf16[16,128,128], index: 4, kind: input, shape index: {}]
  %s5 = inlined_call_operand.vmem [shape: f32[1,128], index: 5, kind: input, shape index: {}]
  %s6 = inlined_call_operand.vmem [shape: bf16[400,16], index: 6, kind: input, shape index: {}]
  %s7 = inlined_call_operand.hbm [shape: bf16[25,128,128], index: 7, kind: input, shape index: {}]
  %s8 = inlined_call_operand.vmem [shape: f32[1,128], index: 8, kind: input, shape index: {}]
  %s9 = inlined_call_operand.hbm [shape: f32[2,16,128], index: 9, kind: output, shape index: {}]
  %s10 = sld [smem:[#allocation0]]
  $region77: #{tpu_custom_call.1} parent=0
    _
  %s12 = ssub.s32 1, %s10
  %s13 = scalar_select 0, %s12, %s10
  $region1: #{tpu_custom_call.1} parent=0
    #allocation2 [shape = 'u8[524288]{0}', space=vmem, size = 0x80000, scoped, tag = 'input window, operand 4, single buffered']
    #allocation3 [shape = 's32[2]{0}', space=sflag, size = 0x8, scoped, tag = 'scoped memory for tpu_custom_call.1']
    #allocation4 [shape = 's32[2]{0}', space=sflag, size = 0x8, scoped, tag = 'scoped memory for tpu_custom_call.1']
    #allocation5 [shape = 'u8[819200]{0}', space=vmem, size = 0xc8000, scoped, tag = 'input window, operand 7, single buffered']
    #allocation6 [shape = 's32[1]{0}', space=sflag, size = 0x4, scoped, tag = 'scoped memory for tpu_custom_call.1']
    #allocation7 [shape = 'u8[16384]{0}', space=vmem, size = 0x4000, scoped, tag = 'output window, operand 0']
    %14 = vsyncpa [#allocation3], 0
    %15 = vsyncpa [#allocation6], 0
    %16 = vsyncpa [#allocation4], 0
    %s17 = scalar_lea.sflag [#allocation4], 1
    %18 = vsyncpa %s17, 0
    loop: start=0, step=1, limit=4
    $region2: #{tpu_custom_call.1} parent=1 // loop_pre_header
      _
    $region3: #{tpu_custom_call.1} parent=1 // loop_header
      %s20 = sphi 0, %s24
      %p21 = scmp.ge.s32.totalorder %s20, 4
      %s30 = sphi 0, %s32
      %s33 = sphi 0, %s30
      %s34 = sphi 0, %s33
      %s50 = sphi 0, %s34
      %s54 = sphi 0, %s54
      %s56 = sphi 0, %s54
      %s57 = sphi 0, %s56
      %s71 = sphi 0, %s57
      %s75 = sphi 0, %s75
      %s77 = sphi 0, %s75
      %s78 = sphi 0, %s77
      %s92 = sphi 0, %s78
      %s96 = sphi 0, %s96
      %s98 = sphi 0, %s96
      %s99 = sphi 0, %s98
      %s113 = sphi 0, %s99
      %s117 = sphi 0, %s117
      %s119 = sphi 0, %s117
      %s120 = sphi 0, %s119
      %s134 = sphi 0, %s120
      %s138 = sphi 0, %s138
      %s140 = sphi 0, %s138
      %s141 = sphi 0, %s140
      %s155 = sphi 0, %s141
      %s159 = sphi 0, %s159
      %s161 = sphi 0, %s159
      %s162 = sphi 0, %s161
      %s176 = sphi 0, %s162
      %s180 = sphi 0, %s180
      %s182 = sphi 0, %s180
      %s183 = sphi 0, %s182
      %s197 = sphi 0, %s183
      %s201 = sphi 0, %s201
      %s203 = sphi 0, %s201
      %s204 = sphi 0, %s203
      %s218 = sphi 0, %s204
      %s224 = sphi 0, %s226
      %s227 = sphi 0, %s224
      %s228 = sphi 0, %s227
      %s244 = sphi 0, %s228
    $region4: #{tpu_custom_call.1} parent=1 // loop_header_branch
      %23 = sbr.rel (%p21) target = $region8
    $region5: #{tpu_custom_call.1} parent=1 // loop_body
      %s25 = ssub.s32 %s20, 1
      %s26 = ssub.s32 %s20, 2
      %s27 = sadd.s32 %s20, 1
      %s28 = ssub.s32 %s20, %s27
      %p29 = scmp.eq.s32.totalorder %s28, 0
      %s31 = sadd.s32 %s30, 1
      %s32 = scalar_select %p29, %s30, %s31
      %p35 = pneg %p29
      %p36 = scmp.eq.s32.totalorder %s20, 1
      %p37 = por %p35, %p36
      %p38 = scmp.ne.s32.totalorder %s30, %s33
      %p39 = scmp.eq.s32.totalorder %s20, 0
      %p40 = por %p38, %p39
      %p41 = scmp.ne.s32.totalorder %s30, %s33
      %p42 = scmp.eq.s32.totalorder %s25, 1
      %p43 = por %p41, %p42
      %p44 = scmp.ne.s32.totalorder %s33, %s34
      %p45 = scmp.eq.s32.totalorder %s25, 0
      %p46 = por %p44, %p45
      %p47 = scmp.ne.s32.totalorder %s33, %s34
      %p48 = scmp.eq.s32.totalorder %s26, 1
      %p49 = por %p47, %p48
      %p51 = scmp.ne.s32.totalorder %s34, %s50
      %p52 = scmp.eq.s32.totalorder %s26, 0
      %p53 = por %p51, %p52
      %s55 = sadd.s32 %s54, 1
      %p58 = scmp.eq.s32.totalorder %s20, 1
      %p59 = scmp.ne.s32.totalorder %s54, %s56
      %p60 = scmp.eq.s32.totalorder %s20, 0
      %p61 = por %p59, %p60
      %p62 = scmp.ne.s32.totalorder %s54, %s56
      %p63 = scmp.eq.s32.totalorder %s25, 1
      %p64 = por %p62, %p63
      %p65 = scmp.ne.s32.totalorder %s56, %s57
      %p66 = scmp.eq.s32.totalorder %s25, 0
      %p67 = por %p65, %p66
      %p68 = scmp.ne.s32.totalorder %s56, %s57
      %p69 = scmp.eq.s32.totalorder %s26, 1
      %p70 = por %p68, %p69
      %p72 = scmp.ne.s32.totalorder %s57, %s71
      %p73 = scmp.eq.s32.totalorder %s26, 0
      %p74 = por %p72, %p73
      %s76 = sadd.s32 %s75, 1
      %p79 = scmp.eq.s32.totalorder %s20, 1
      %p80 = scmp.ne.s32.totalorder %s75, %s77
      %p81 = scmp.eq.s32.totalorder %s20, 0
      %p82 = por %p80, %p81
      %p83 = scmp.ne.s32.totalorder %s75, %s77
      %p84 = scmp.eq.s32.totalorder %s25, 1
      %p85 = por %p83, %p84
      %p86 = scmp.ne.s32.totalorder %s77, %s78
      %p87 = scmp.eq.s32.totalorder %s25, 0
      %p88 = por %p86, %p87
      %p89 = scmp.ne.s32.totalorder %s77, %s78
      %p90 = scmp.eq.s32.totalorder %s26, 1
      %p91 = por %p89, %p90
      %p93 = scmp.ne.s32.totalorder %s78, %s92
      %p94 = scmp.eq.s32.totalorder %s26, 0
      %p95 = por %p93, %p94
      %s97 = sadd.s32 %s96, 1
      %p100 = scmp.eq.s32.totalorder %s20, 1
      %p101 = scmp.ne.s32.totalorder %s96, %s98
      %p102 = scmp.eq.s32.totalorder %s20, 0
      %p103 = por %p101, %p102
      %p104 = scmp.ne.s32.totalorder %s96, %s98
      %p105 = scmp.eq.s32.totalorder %s25, 1
      %p106 = por %p104, %p105
      %p107 = scmp.ne.s32.totalorder %s98, %s99
      %p108 = scmp.eq.s32.totalorder %s25, 0
      %p109 = por %p107, %p108
      %p110 = scmp.ne.s32.totalorder %s98, %s99
      %p111 = scmp.eq.s32.totalorder %s26, 1
      %p112 = por %p110, %p111
      %p114 = scmp.ne.s32.totalorder %s99, %s113
      %p115 = scmp.eq.s32.totalorder %s26, 0
      %p116 = por %p114, %p115
      %s118 = sadd.s32 %s117, 1
      %p121 = scmp.eq.s32.totalorder %s20, 1
      %p122 = scmp.ne.s32.totalorder %s117, %s119
      %p123 = scmp.eq.s32.totalorder %s20, 0
      %p124 = por %p122, %p123
      %p125 = scmp.ne.s32.totalorder %s117, %s119
      %p126 = scmp.eq.s32.totalorder %s25, 1
      %p127 = por %p125, %p126
      %p128 = scmp.ne.s32.totalorder %s119, %s120
      %p129 = scmp.eq.s32.totalorder %s25, 0
      %p130 = por %p128, %p129
      %p131 = scmp.ne.s32.totalorder %s119, %s120
      %p132 = scmp.eq.s32.totalorder %s26, 1
      %p133 = por %p131, %p132
      %p135 = scmp.ne.s32.totalorder %s120, %s134
      %p136 = scmp.eq.s32.totalorder %s26, 0
      %p137 = por %p135, %p136
      %s139 = sadd.s32 %s138, 1
      %p142 = scmp.eq.s32.totalorder %s20, 1
      %p143 = scmp.ne.s32.totalorder %s138, %s140
      %p144 = scmp.eq.s32.totalorder %s20, 0
      %p145 = por %p143, %p144
      %p146 = scmp.ne.s32.totalorder %s138, %s140
      %p147 = scmp.eq.s32.totalorder %s25, 1
      %p148 = por %p146, %p147
      %p149 = scmp.ne.s32.totalorder %s140, %s141
      %p150 = scmp.eq.s32.totalorder %s25, 0
      %p151 = por %p149, %p150
      %p152 = scmp.ne.s32.totalorder %s140, %s141
      %p153 = scmp.eq.s32.totalorder %s26, 1
      %p154 = por %p152, %p153
      %p156 = scmp.ne.s32.totalorder %s141, %s155
      %p157 = scmp.eq.s32.totalorder %s26, 0
      %p158 = por %p156, %p157
      %s160 = sadd.s32 %s159, 1
      %p163 = scmp.eq.s32.totalorder %s20, 1
      %p164 = scmp.ne.s32.totalorder %s159, %s161
      %p165 = scmp.eq.s32.totalorder %s20, 0
      %p166 = por %p164, %p165
      %p167 = scmp.ne.s32.totalorder %s159, %s161
      %p168 = scmp.eq.s32.totalorder %s25, 1
      %p169 = por %p167, %p168
      %p170 = scmp.ne.s32.totalorder %s161, %s162
      %p171 = scmp.eq.s32.totalorder %s25, 0
      %p172 = por %p170, %p171
      %p173 = scmp.ne.s32.totalorder %s161, %s162
      %p174 = scmp.eq.s32.totalorder %s26, 1
      %p175 = por %p173, %p174
      %p177 = scmp.ne.s32.totalorder %s162, %s176
      %p178 = scmp.eq.s32.totalorder %s26, 0
      %p179 = por %p177, %p178
      %s181 = sadd.s32 %s180, 1
      %p184 = scmp.eq.s32.totalorder %s20, 1
      %p185 = scmp.ne.s32.totalorder %s180, %s182
      %p186 = scmp.eq.s32.totalorder %s20, 0
      %p187 = por %p185, %p186
      %p188 = scmp.ne.s32.totalorder %s180, %s182
      %p189 = scmp.eq.s32.totalorder %s25, 1
      %p190 = por %p188, %p189
      %p191 = scmp.ne.s32.totalorder %s182, %s183
      %p192 = scmp.eq.s32.totalorder %s25, 0
      %p193 = por %p191, %p192
      %p194 = scmp.ne.s32.totalorder %s182, %s183
      %p195 = scmp.eq.s32.totalorder %s26, 1
      %p196 = por %p194, %p195
      %p198 = scmp.ne.s32.totalorder %s183, %s197
      %p199 = scmp.eq.s32.totalorder %s26, 0
      %p200 = por %p198, %p199
      %s202 = sadd.s32 %s201, 1
      %p205 = scmp.eq.s32.totalorder %s20, 1
      %p206 = scmp.ne.s32.totalorder %s201, %s203
      %p207 = scmp.eq.s32.totalorder %s20, 0
      %p208 = por %p206, %p207
      %p209 = scmp.ne.s32.totalorder %s201, %s203
      %p210 = scmp.eq.s32.totalorder %s25, 1
      %p211 = por %p209, %p210
      %p212 = scmp.ne.s32.totalorder %s203, %s204
      %p213 = scmp.eq.s32.totalorder %s25, 0
      %p214 = por %p212, %p213
      %p215 = scmp.ne.s32.totalorder %s203, %s204
      %p216 = scmp.eq.s32.totalorder %s26, 1
      %p217 = por %p215, %p216
      %p219 = scmp.ne.s32.totalorder %s204, %s218
      %p220 = scmp.eq.s32.totalorder %s26, 0
      %p221 = por %p219, %p220
      %s222 = ssub.s32 %s20, %s27
      %p223 = scmp.eq.s32.totalorder %s222, 0
      %s225 = sadd.s32 %s224, 1
      %s226 = scalar_select %p223, %s224, %s225
      %p229 = pneg %p223
      %p230 = scmp.eq.s32.totalorder %s20, 1
      %p231 = por %p229, %p230
      %p232 = scmp.ne.s32.totalorder %s224, %s227
      %p233 = scmp.eq.s32.totalorder %s20, 0
      %p234 = por %p232, %p233
      %p235 = scmp.ne.s32.totalorder %s224, %s227
      %p236 = scmp.eq.s32.totalorder %s25, 1
      %p237 = por %p235, %p236
      %p238 = scmp.ne.s32.totalorder %s227, %s228
      %p239 = scmp.eq.s32.totalorder %s25, 0
      %p240 = por %p238, %p239
      %p241 = scmp.ne.s32.totalorder %s227, %s228
      %p242 = scmp.eq.s32.totalorder %s26, 1
      %p243 = por %p241, %p242
      %p245 = scmp.ne.s32.totalorder %s228, %s244
      %p246 = scmp.eq.s32.totalorder %s26, 0
      %p247 = por %p245, %p246
      %p248 = scmp.le.s32.totalorder 1, %s20
      %p249 = scmp.lt.s32.totalorder %s20, 3
      %p250 = pnand %p248, %p249
      %p251 = pneg %p250
      // Predicated region
      $region9: #{tpu_custom_call.1} parent=5 // pred_check
        _
      $region10: #{tpu_custom_call.1} parent=5 // pred_check_branch
        %253 = sbr.rel (%p250) target = $region12
      $region11: #{tpu_custom_call.1} parent=5 // pred_region
        %s254 = ssub.s32 %s20, 1
        // Predicated region
        $region13: #{tpu_custom_call.1} parent=11 // pred_check
          %p255 = pneg %p67
        $region14: #{tpu_custom_call.1} parent=11 // pred_check_branch
          %257 = sbr.rel (%p255) target = $region16
        $region15: #{tpu_custom_call.1} parent=11 // pred_region
          _
        $region16: #{tpu_custom_call.1} parent=11 // pred_fallthru
          _
        // Predicated region
        $region17: #{tpu_custom_call.1} parent=11 // pred_check
          %p258 = pneg %p88
        $region18: #{tpu_custom_call.1} parent=11 // pred_check_branch
          %260 = sbr.rel (%p258) target = $region20
        $region19: #{tpu_custom_call.1} parent=11 // pred_region
          _
        $region20: #{tpu_custom_call.1} parent=11 // pred_fallthru
          _
        // Predicated region
        $region21: #{tpu_custom_call.1} parent=11 // pred_check
          %p261 = pneg %p109
        $region22: #{tpu_custom_call.1} parent=11 // pred_check_branch
          %263 = sbr.rel (%p261) target = $region24
        $region23: #{tpu_custom_call.1} parent=11 // pred_region
          _
        $region24: #{tpu_custom_call.1} parent=11 // pred_fallthru
          _
        // Predicated region
        $region25: #{tpu_custom_call.1} parent=11 // pred_check
          %p264 = pneg %p130
        $region26: #{tpu_custom_call.1} parent=11 // pred_check_branch
          %266 = sbr.rel (%p264) target = $region28
        $region27: #{tpu_custom_call.1} parent=11 // pred_region
          %268 = vsyncadd [#allocation3], 0
          %s269 = sshll.u32 %s4, 4
          %s270 = int_to_ptr.hbm [resolvable:$true] %s269
          %s271 = sshll.u32 [#allocation2], 4
          %s272 = int_to_ptr.vmem [resolvable:$true] %s271
          %277 = dma.hbm_to_vmem [thread:$0]  %s270, 16384, %s272, [#allocation3], 64, 64, 4
        $region28: #{tpu_custom_call.1} parent=11 // pred_fallthru
          _
        // Predicated region
        $region29: #{tpu_custom_call.1} parent=11 // pred_check
          %p278 = pneg %p151
        $region30: #{tpu_custom_call.1} parent=11 // pred_check_branch
          %280 = sbr.rel (%p278) target = $region32
        $region31: #{tpu_custom_call.1} parent=11 // pred_region
          _
        $region32: #{tpu_custom_call.1} parent=11 // pred_fallthru
          _
        // Predicated region
        $region33: #{tpu_custom_call.1} parent=11 // pred_check
          %p281 = pneg %p172
        $region34: #{tpu_custom_call.1} parent=11 // pred_check_branch
          %283 = sbr.rel (%p281) target = $region36
        $region35: #{tpu_custom_call.1} parent=11 // pred_region
          _
        $region36: #{tpu_custom_call.1} parent=11 // pred_fallthru
          _
        // Predicated region
        $region37: #{tpu_custom_call.1} parent=11 // pred_check
          %p284 = pneg %p193
        $region38: #{tpu_custom_call.1} parent=11 // pred_check_branch
          %286 = sbr.rel (%p284) target = $region40
        $region39: #{tpu_custom_call.1} parent=11 // pred_region
          %288 = vsyncadd [#allocation6], 0
          %s289 = sshll.u32 %s7, 4
          %s290 = int_to_ptr.hbm [resolvable:$true] %s289
          %s291 = sshll.u32 [#allocation5], 4
          %s292 = int_to_ptr.vmem [resolvable:$true] %s291
          %297 = dma.hbm_to_vmem [thread:$0]  %s290, 25600, %s292, [#allocation6], 64, 64, 4
        $region40: #{tpu_custom_call.1} parent=11 // pred_fallthru
          _
        // Predicated region
        $region41: #{tpu_custom_call.1} parent=11 // pred_check
          %p298 = pneg %p214
        $region42: #{tpu_custom_call.1} parent=11 // pred_check_branch
          %300 = sbr.rel (%p298) target = $region44
        $region43: #{tpu_custom_call.1} parent=11 // pred_region
          _
        $region44: #{tpu_custom_call.1} parent=11 // pred_fallthru
          _
      $region12: #{tpu_custom_call.1} parent=5 // pred_fallthru
        _
      %p301 = scmp.lt.s32.totalorder %s20, 2
      // Predicated region
      $region45: #{tpu_custom_call.1} parent=5 // pred_check
        %p302 = pneg %p301
      $region46: #{tpu_custom_call.1} parent=5 // pred_check_branch
        %304 = sbr.rel (%p302) target = $region48
      $region47: #{tpu_custom_call.1} parent=5 // pred_region
        // Predicated region
        $region49: #{tpu_custom_call.1} parent=47 // pred_check
          %p305 = pneg %p40
        $region50: #{tpu_custom_call.1} parent=47 // pred_check_branch
          %307 = sbr.rel (%p305) target = $region52
        $region51: #{tpu_custom_call.1} parent=47 // pred_region
          %p308 = scmp.lt.s32.totalorder %s20, 1
          %s309 = scalar_select %p308, %s20, 1
          %s310 = smul.addr %s309, 8
          %s311 = smul.addr %s310, 4
          %s312 = scalar_lea.vmem %s0, %s311
        $region52: #{tpu_custom_call.1} parent=47 // pred_fallthru
          _
      $region48: #{tpu_custom_call.1} parent=5 // pred_fallthru
        _
      %p313 = scmp.le.s32.totalorder 1, %s20
      %p314 = scmp.lt.s32.totalorder %s20, 3
      %p315 = pnand %p313, %p314
      %p316 = pneg %p315
      // Predicated region
      $region53: #{tpu_custom_call.1} parent=5 // pred_check
        _
      $region54: #{tpu_custom_call.1} parent=5 // pred_check_branch
        %318 = sbr.rel (%p315) target = $region56
      $region55: #{tpu_custom_call.1} parent=5 // pred_region
        %s319 = ssub.s32 %s20, 1
        // Predicated region
        $region57: #{tpu_custom_call.1} parent=55 // pred_check
          %p320 = pneg %p130
        $region58: #{tpu_custom_call.1} parent=55 // pred_check_branch
          %322 = sbr.rel (%p320) target = $region60
        $region59: #{tpu_custom_call.1} parent=55 // pred_region
          %324 = dma.done [#allocation3], 16384
        $region60: #{tpu_custom_call.1} parent=55 // pred_fallthru
          _
        // Predicated region
        $region61: #{tpu_custom_call.1} parent=55 // pred_check
          %p325 = pneg %p193
        $region62: #{tpu_custom_call.1} parent=55 // pred_check_branch
          %327 = sbr.rel (%p325) target = $region64
        $region63: #{tpu_custom_call.1} parent=55 // pred_region
          %329 = dma.done [#allocation6], 25600
        $region64: #{tpu_custom_call.1} parent=55 // pred_fallthru
          _
        %p330 = scmp.lt.s32.totalorder %s25, 1
        %s331 = scalar_select %p330, %s25, 1
        %s332 = smul.addr %s331, 8
        %s333 = smul.addr %s332, 4
        %s334 = scalar_lea.vmem %s0, %s333
        %p335 = pneg %p46
        %p336 = pneg %p43
        %p337 = pneg %p67
        %p338 = pneg %p64
        %p339 = pneg %p88
        %p340 = pneg %p85
        %p341 = pneg %p109
        %p342 = pneg %p106
        %p343 = pneg %p130
        %p344 = pneg %p127
        %p345 = pneg %p151
        %p346 = pneg %p148
        %p347 = pneg %p172
        %p348 = pneg %p169
        %p349 = pneg %p193
        %p350 = pneg %p190
        %p351 = pneg %p214
        %p352 = pneg %p211
        %p353 = pneg %p240
        %p354 = pneg %p237
        %s355 = sand.u32 %s227, 1
        %s356 = scalar_lea.sflag [#allocation4], %s355
        %s357 = sand.u32 %s227, 1
        %s358 = smul.addr %s357, 16
        %s359 = scalar_lea.vmem [#allocation7], %s358
        %p360 = scmp.lt.s32.totalorder %s25, 1
        %s361 = scalar_select %p360, %s25, 1
        %s362 = smul.addr %s361, 8
        %s363 = smul.addr %s362, 4
        %s364 = scalar_lea.vmem %s0, %s363
        %v366 = vld [vmem:[%s364] sm:$0xf]
        %v367 = vld [vmem:[%s364 + $0x4] sm:$0xf]
        %v368 = vld [vmem:[%s364 + $0x8] sm:$0xf]
        %v369 = vld [vmem:[%s364 + $0xc] sm:$0xf]
        %v370 = vld [vmem:[%s364 + $0x10] sm:$0xf]
        %v371 = vld [vmem:[%s364 + $0x14] sm:$0xf]
        %v372 = vld [vmem:[%s364 + $0x18] sm:$0xf]
        %v373 = vld [vmem:[%s364 + $0x1c] sm:$0xf]
        %v374 = vld [vmem:[%s1] sm:$0xf]
        %v375 = vld [vmem:[%s1 + $0x4] sm:$0xf]
        %v376 = vld [vmem:[%s1 + $0x8] sm:$0xf]
        %v377 = vld [vmem:[%s1 + $0xc] sm:$0xf]
        %v378 = vld [vmem:[%s1 + $0x10] sm:$0xf]
        %v379 = vld [vmem:[%s1 + $0x14] sm:$0xf]
        %v380 = vld [vmem:[%s1 + $0x18] sm:$0xf]
        %v381 = vld [vmem:[%s1 + $0x1c] sm:$0xf]
        %v382 = vld [vmem:[%s1 + $0x20] sm:$0xf]
        %v383 = vld [vmem:[%s1 + $0x24] sm:$0xf]
        %v384 = vld [vmem:[%s1 + $0x28] sm:$0xf]
        %v385 = vld [vmem:[%s1 + $0x2c] sm:$0xf]
        %v386 = vld [vmem:[%s1 + $0x30] sm:$0xf]
        %v387 = vld [vmem:[%s1 + $0x34] sm:$0xf]
        %v388 = vld [vmem:[%s1 + $0x38] sm:$0xf]
        %v389 = vld [vmem:[%s1 + $0x3c] sm:$0xf]
        %v390 = vld [vmem:[%s2] sm:$0x1]
        %v392 = vperm.slane %v390, 0
        %v402 = vunpack.c.l.b16 %v366
        %v403 = vunpack.c.l.b16 %v367
        %v404 = vunpack.c.l.b16 %v368
        %v405 = vunpack.c.l.b16 %v369
        %v406 = vunpack.c.l.b16 %v370
        %v407 = vunpack.c.l.b16 %v371
        %v408 = vunpack.c.l.b16 %v372
        %v409 = vunpack.c.l.b16 %v373
        %v410 = vpack.c.b16 %v403, %v402
        %v411 = vpack.c.b16 %v405, %v404
        %v412 = vpack.c.b16 %v407, %v406
        %v413 = vpack.c.b16 %v409, %v408
        %v434 = vunpack.c.l.b16 %v374
        %v435 = vunpack.c.l.b16 %v375
        %v436 = vunpack.c.l.b16 %v376
        %v437 = vunpack.c.l.b16 %v377
        %v438 = vunpack.c.l.b16 %v378
        %v439 = vunpack.c.l.b16 %v379
        %v440 = vunpack.c.l.b16 %v380
        %v441 = vunpack.c.l.b16 %v381
        %v442 = vunpack.c.l.b16 %v382
        %v443 = vunpack.c.l.b16 %v383
        %v444 = vunpack.c.l.b16 %v384
        %v445 = vunpack.c.l.b16 %v385
        %v446 = vunpack.c.l.b16 %v386
        %v447 = vunpack.c.l.b16 %v387
        %v448 = vunpack.c.l.b16 %v388
        %v449 = vunpack.c.l.b16 %v389
        %v450 = vpack.c.b16 %v435, %v434
        %v451 = vpack.c.b16 %v437, %v436
        %v452 = vpack.c.b16 %v439, %v438
        %v453 = vpack.c.b16 %v441, %v440
        %v454 = vpack.c.b16 %v443, %v442
        %v455 = vpack.c.b16 %v445, %v444
        %v456 = vpack.c.b16 %v447, %v446
        %v457 = vpack.c.b16 %v449, %v448
        %466 = vmatpush.bf16.msra.mxu0 %v457
        %467 = vmatpush.bf16.msra.mxu0 %v456
        %468 = vmatpush.bf16.msra.mxu0 %v455
        %469 = vmatpush.bf16.msra.mxu0 %v454
        %470 = vmatpush.bf16.msra.mxu0 %v453
        %471 = vmatpush.bf16.msra.mxu0 %v452
        %472 = vmatpush.bf16.msra.mxu0 %v451
        %473 = vmatpush.bf16.msra.mxu0 %v450
        %474 = vmatmul.bf16.gmra.mxu0 %v410
        %v475 = vpop.f32.mrf.mxu0
        %v476 = vadd.f32 %v392, %v475
        %v477 = vpop.f32.mrf.mxu0
        %v478 = vadd.f32 %v392, %v477
        %479 = vmatmul.bf16.gmra.mxu0 %v411
        %v480 = vpop.f32.mrf.mxu0
        %v481 = vadd.f32 %v392, %v480
        %v482 = vpop.f32.mrf.mxu0
        %v483 = vadd.f32 %v392, %v482
        %484 = vmatmul.bf16.gmra.mxu0 %v412
        %v485 = vpop.f32.mrf.mxu0
        %v486 = vadd.f32 %v392, %v485
        %v487 = vpop.f32.mrf.mxu0
        %v488 = vadd.f32 %v392, %v487
        %489 = vmatmul.bf16.gmra.mxu0 %v413
        %v490 = vpop.f32.mrf.mxu0
        %v491 = vadd.f32 %v392, %v490
        %v492 = vpop.f32.mrf.mxu0
        %v493 = vadd.f32 %v392, %v492
        %494 = vdwg.mxu0
        %vm495 = vcmp.ge.f32.partialorder %v476, 0.0
        %vm496 = vcmp.ge.f32.partialorder %v478, 0.0
        %vm497 = vcmp.ge.f32.partialorder %v481, 0.0
        %vm498 = vcmp.ge.f32.partialorder %v483, 0.0
        %vm499 = vcmp.ge.f32.partialorder %v486, 0.0
        %vm500 = vcmp.ge.f32.partialorder %v488, 0.0
        %vm501 = vcmp.ge.f32.partialorder %v491, 0.0
        %vm502 = vcmp.ge.f32.partialorder %v493, 0.0
        %v503 = vmul.f32 %v476, 0.2
        %v504 = vmul.f32 %v478, 0.2
        %v505 = vmul.f32 %v481, 0.2
        %v506 = vmul.f32 %v483, 0.2
        %v507 = vmul.f32 %v486, 0.2
        %v508 = vmul.f32 %v488, 0.2
        %v509 = vmul.f32 %v491, 0.2
        %v510 = vmul.f32 %v493, 0.2
        %v511 = vsel %vm495, %v476, %v503
        %v512 = vsel %vm496, %v478, %v504
        %v513 = vsel %vm497, %v481, %v505
        %v514 = vsel %vm498, %v483, %v506
        %v515 = vsel %vm499, %v486, %v507
        %v516 = vsel %vm500, %v488, %v508
        %v517 = vsel %vm501, %v491, %v509
        %v518 = vsel %vm502, %v493, %v510
        %v519 = vpack.c.bf16 %v512, %v511
        %v520 = vpack.c.bf16 %v514, %v513
        %v521 = vpack.c.bf16 %v516, %v515
        %v522 = vpack.c.bf16 %v518, %v517
        %v523 = vld [vmem:[%s3] sm:$0xf]
        %v524 = vld [vmem:[%s3 + $0x4] sm:$0xf]
        %v527 = vunpack.c.l.b16 %v523
        %v528 = vunpack.c.l.b16 %v524
        %v529 = vpack.c.b16 %v528, %v527
        %vm530 = vcmask 523264
        %v532 = vsel %vm530, %v529, 0
        %534 = vmatpush.bf16.msra.mxu0 0
        %535 = vmatpush.bf16.msra.mxu0 0
        %536 = vmatpush.bf16.msra.mxu0 0
        %537 = vmatpush.bf16.msra.mxu0 0
        %538 = vmatpush.bf16.msra.mxu0 %v522
        %539 = vmatpush.bf16.msra.mxu0 %v521
        %540 = vmatpush.bf16.msra.mxu0 %v520
        %541 = vmatpush.bf16.msra.mxu0 %v519
        %542 = vmatmul.bf16.gmra.mxu0 %v532
        %v543 = vpop.f32.mrf.mxu0
        %v544 = vadd.f32 0.0, %v543
        %v545 = vpop.f32.mrf.mxu0
        %v546 = vadd.f32 0.0, %v545
        %547 = vdwg.mxu0
        %v548 = vpack.c.bf16 %v546, %v544
        %v549 = vld [vmem:[#allocation2] sm:$0xf]
        %v550 = vld [vmem:[#allocation2 + $0x4] sm:$0xf]
        %v551 = vld [vmem:[#allocation2 + $0x8] sm:$0xf]
        %v552 = vld [vmem:[#allocation2 + $0xc] sm:$0xf]
        %v553 = vld [vmem:[#allocation2 + $0x10] sm:$0xf]
        %v554 = vld [vmem:[#allocation2 + $0x14] sm:$0xf]
        %v555 = vld [vmem:[#allocation2 + $0x18] sm:$0xf]
        %v556 = vld [vmem:[#allocation2 + $0x1c] sm:$0xf]
        %v557 = vld [vmem:[#allocation2 + $0x20] sm:$0xf]
        %v558 = vld [vmem:[#allocation2 + $0x24] sm:$0xf]
        %v559 = vld [vmem:[#allocation2 + $0x28] sm:$0xf]
        %v560 = vld [vmem:[#allocation2 + $0x2c] sm:$0xf]
        %v561 = vld [vmem:[#allocation2 + $0x30] sm:$0xf]
        %v562 = vld [vmem:[#allocation2 + $0x34] sm:$0xf]
        %v563 = vld [vmem:[#allocation2 + $0x38] sm:$0xf]
        %v564 = vld [vmem:[#allocation2 + $0x3c] sm:$0xf]
        %v565 = vld [vmem:[%s3 + $0x8] sm:$0xf]
        %v566 = vld [vmem:[%s3 + $0xc] sm:$0xf]
        %v569 = vunpack.c.l.b16 %v565
        %v570 = vunpack.c.l.b16 %v566
        %v571 = vpack.c.b16 %v570, %v569
        %v573 = vsel %vm530, %v571, 0
        %575 = vmatpush.bf16.msra.mxu0 0
        %576 = vmatpush.bf16.msra.mxu0 0
        %577 = vmatpush.bf16.msra.mxu0 0
        %578 = vmatpush.bf16.msra.mxu0 0
        %579 = vmatpush.bf16.msra.mxu0 %v522
        %580 = vmatpush.bf16.msra.mxu0 %v521
        %581 = vmatpush.bf16.msra.mxu0 %v520
        %582 = vmatpush.bf16.msra.mxu0 %v519
        %583 = vmatmul.bf16.gmra.mxu0 %v573
        %v584 = vpop.f32.mrf.mxu0
        %v585 = vadd.f32 0.0, %v584
        %v586 = vpop.f32.mrf.mxu0
        %v587 = vadd.f32 0.0, %v586
        %588 = vdwg.mxu0
        %v589 = vpack.c.bf16 %v587, %v585
        %s590 = scalar_lea.vmem [#allocation2], 64
        %v591 = vld [vmem:[%s590] sm:$0xf]
        %v592 = vld [vmem:[%s590 + $0x4] sm:$0xf]
        %v593 = vld [vmem:[%s590 + $0x8] sm:$0xf]
        %v594 = vld [vmem:[%s590 + $0xc] sm:$0xf]
        %v595 = vld [vmem:[%s590 + $0x10] sm:$0xf]
        %v596 = vld [vmem:[%s590 + $0x14] sm:$0xf]
        %v597 = vld [vmem:[%s590 + $0x18] sm:$0xf]
        %v598 = vld [vmem:[%s590 + $0x1c] sm:$0xf]
        %v599 = vld [vmem:[%s590 + $0x20] sm:$0xf]
        %v600 = vld [vmem:[%s590 + $0x24] sm:$0xf]
        %v601 = vld [vmem:[%s590 + $0x28] sm:$0xf]
        %v602 = vld [vmem:[%s590 + $0x2c] sm:$0xf]
        %v603 = vld [vmem:[%s590 + $0x30] sm:$0xf]
        %v604 = vld [vmem:[%s590 + $0x34] sm:$0xf]
        %v605 = vld [vmem:[%s590 + $0x38] sm:$0xf]
        %v606 = vld [vmem:[%s590 + $0x3c] sm:$0xf]
        %v623 = vunpack.c.l.b16 %v591
        %v624 = vunpack.c.l.b16 %v592
        %v625 = vunpack.c.l.b16 %v593
        %v626 = vunpack.c.l.b16 %v594
        %v627 = vunpack.c.l.b16 %v595
        %v628 = vunpack.c.l.b16 %v596
        %v629 = vunpack.c.l.b16 %v597
        %v630 = vunpack.c.l.b16 %v598
        %v631 = vunpack.c.l.b16 %v599
        %v632 = vunpack.c.l.b16 %v600
        %v633 = vunpack.c.l.b16 %v601
        %v634 = vunpack.c.l.b16 %v602
        %v635 = vunpack.c.l.b16 %v603
        %v636 = vunpack.c.l.b16 %v604
        %v637 = vunpack.c.l.b16 %v605
        %v638 = vunpack.c.l.b16 %v606
        %v639 = vpack.c.b16 %v624, %v623
        %v640 = vpack.c.b16 %v626, %v625
        %v641 = vpack.c.b16 %v628, %v627
        %v642 = vpack.c.b16 %v630, %v629
        %v643 = vpack.c.b16 %v632, %v631
        %v644 = vpack.c.b16 %v634, %v633
        %v645 = vpack.c.b16 %v636, %v635
        %v646 = vpack.c.b16 %v638, %v637
        %655 = vmatpush.bf16.msra.mxu0 %v646
        %656 = vmatpush.bf16.msra.mxu0 %v645
        %657 = vmatpush.bf16.msra.mxu0 %v644
        %658 = vmatpush.bf16.msra.mxu0 %v643
        %659 = vmatpush.bf16.msra.mxu0 %v642
        %660 = vmatpush.bf16.msra.mxu0 %v641
        %661 = vmatpush.bf16.msra.mxu0 %v640
        %662 = vmatpush.bf16.msra.mxu0 %v639
        %663 = vmatmul.bf16.gmra.mxu0 %v589
        %v664 = vpop.f32.mrf.mxu0
        %v665 = vadd.f32 0.0, %v664
        %v666 = vpop.f32.mrf.mxu0
        %v667 = vadd.f32 0.0, %v666
        %668 = vdwg.mxu0
        %v685 = vunpack.c.l.b16 %v549
        %v686 = vunpack.c.l.b16 %v550
        %v687 = vunpack.c.l.b16 %v551
        %v688 = vunpack.c.l.b16 %v552
        %v689 = vunpack.c.l.b16 %v553
        %v690 = vunpack.c.l.b16 %v554
        %v691 = vunpack.c.l.b16 %v555
        %v692 = vunpack.c.l.b16 %v556
        %v693 = vunpack.c.l.b16 %v557
        %v694 = vunpack.c.l.b16 %v558
        %v695 = vunpack.c.l.b16 %v559
        %v696 = vunpack.c.l.b16 %v560
        %v697 = vunpack.c.l.b16 %v561
        %v698 = vunpack.c.l.b16 %v562
        %v699 = vunpack.c.l.b16 %v563
        %v700 = vunpack.c.l.b16 %v564
        %v701 = vpack.c.b16 %v686, %v685
        %v702 = vpack.c.b16 %v688, %v687
        %v703 = vpack.c.b16 %v690, %v689
        %v704 = vpack.c.b16 %v692, %v691
        %v705 = vpack.c.b16 %v694, %v693
        %v706 = vpack.c.b16 %v696, %v695
        %v707 = vpack.c.b16 %v698, %v697
        %v708 = vpack.c.b16 %v700, %v699
        %717 = vmatpush.bf16.msra.mxu0 %v708
        %718 = vmatpush.bf16.msra.mxu0 %v707
        %719 = vmatpush.bf16.msra.mxu0 %v706
        %720 = vmatpush.bf16.msra.mxu0 %v705
        %721 = vmatpush.bf16.msra.mxu0 %v704
        %722 = vmatpush.bf16.msra.mxu0 %v703
        %723 = vmatpush.bf16.msra.mxu0 %v702
        %724 = vmatpush.bf16.msra.mxu0 %v701
        %725 = vmatmul.bf16.gmra.mxu0 %v548
        %v726 = vpop.f32.mrf.mxu0
        %v727 = vadd.f32 %v665, %v726
        %v728 = vpop.f32.mrf.mxu0
        %v729 = vadd.f32 %v667, %v728
        %730 = vdwg.mxu0
        %v731 = vld [vmem:[%s3 + $0x10] sm:$0xf]
        %v732 = vld [vmem:[%s3 + $0x14] sm:$0xf]
        %v735 = vunpack.c.l.b16 %v731
        %v736 = vunpack.c.l.b16 %v732
        %v737 = vpack.c.b16 %v736, %v735
        %v739 = vsel %vm530, %v737, 0
        %741 = vmatpush.bf16.msra.mxu0 0
        %742 = vmatpush.bf16.msra.mxu0 0
        %743 = vmatpush.bf16.msra.mxu0 0
        %744 = vmatpush.bf16.msra.mxu0 0
        %745 = vmatpush.bf16.msra.mxu0 %v522
        %746 = vmatpush.bf16.msra.mxu0 %v521
        %747 = vmatpush.bf16.msra.mxu0 %v520
        %748 = vmatpush.bf16.msra.mxu0 %v519
        %749 = vmatmul.bf16.gmra.mxu0 %v739
        %v750 = vpop.f32.mrf.mxu0
        %v751 = vadd.f32 0.0, %v750
        %v752 = vpop.f32.mrf.mxu0
        %v753 = vadd.f32 0.0, %v752
        %754 = vdwg.mxu0
        %v755 = vpack.c.bf16 %v753, %v751
        %s756 = scalar_lea.vmem [#allocation2], 128
        %v757 = vld [vmem:[%s756] sm:$0xf]
        %v758 = vld [vmem:[%s756 + $0x4] sm:$0xf]
        %v759 = vld [vmem:[%s756 + $0x8] sm:$0xf]
        %v760 = vld [vmem:[%s756 + $0xc] sm:$0xf]
        %v761 = vld [vmem:[%s756 + $0x10] sm:$0xf]
        %v762 = vld [vmem:[%s756 + $0x14] sm:$0xf]
        %v763 = vld [vmem:[%s756 + $0x18] sm:$0xf]
        %v764 = vld [vmem:[%s756 + $0x1c] sm:$0xf]
        %v765 = vld [vmem:[%s756 + $0x20] sm:$0xf]
        %v766 = vld [vmem:[%s756 + $0x24] sm:$0xf]
        %v767 = vld [vmem:[%s756 + $0x28] sm:$0xf]
        %v768 = vld [vmem:[%s756 + $0x2c] sm:$0xf]
        %v769 = vld [vmem:[%s756 + $0x30] sm:$0xf]
        %v770 = vld [vmem:[%s756 + $0x34] sm:$0xf]
        %v771 = vld [vmem:[%s756 + $0x38] sm:$0xf]
        %v772 = vld [vmem:[%s756 + $0x3c] sm:$0xf]
        %v789 = vunpack.c.l.b16 %v757
        %v790 = vunpack.c.l.b16 %v758
        %v791 = vunpack.c.l.b16 %v759
        %v792 = vunpack.c.l.b16 %v760
        %v793 = vunpack.c.l.b16 %v761
        %v794 = vunpack.c.l.b16 %v762
        %v795 = vunpack.c.l.b16 %v763
        %v796 = vunpack.c.l.b16 %v764
        %v797 = vunpack.c.l.b16 %v765
        %v798 = vunpack.c.l.b16 %v766
        %v799 = vunpack.c.l.b16 %v767
        %v800 = vunpack.c.l.b16 %v768
        %v801 = vunpack.c.l.b16 %v769
        %v802 = vunpack.c.l.b16 %v770
        %v803 = vunpack.c.l.b16 %v771
        %v804 = vunpack.c.l.b16 %v772
        %v805 = vpack.c.b16 %v790, %v789
        %v806 = vpack.c.b16 %v792, %v791
        %v807 = vpack.c.b16 %v794, %v793
        %v808 = vpack.c.b16 %v796, %v795
        %v809 = vpack.c.b16 %v798, %v797
        %v810 = vpack.c.b16 %v800, %v799
        %v811 = vpack.c.b16 %v802, %v801
        %v812 = vpack.c.b16 %v804, %v803
        %821 = vmatpush.bf16.msra.mxu0 %v812
        %822 = vmatpush.bf16.msra.mxu0 %v811
        %823 = vmatpush.bf16.msra.mxu0 %v810
        %824 = vmatpush.bf16.msra.mxu0 %v809
        %825 = vmatpush.bf16.msra.mxu0 %v808
        %826 = vmatpush.bf16.msra.mxu0 %v807
        %827 = vmatpush.bf16.msra.mxu0 %v806
        %828 = vmatpush.bf16.msra.mxu0 %v805
        %829 = vmatmul.bf16.gmra.mxu0 %v755
        %v830 = vpop.f32.mrf.mxu0
        %v831 = vadd.f32 0.0, %v830
        %v832 = vpop.f32.mrf.mxu0
        %v833 = vadd.f32 0.0, %v832
        %834 = vdwg.mxu0
        %v835 = vadd.f32 %v727, %v831
        %v836 = vadd.f32 %v729, %v833
        %v837 = vld [vmem:[%s3 + $0x18] sm:$0xf]
        %v838 = vld [vmem:[%s3 + $0x1c] sm:$0xf]
        %v841 = vunpack.c.l.b16 %v837
        %v842 = vunpack.c.l.b16 %v838
        %v843 = vpack.c.b16 %v842, %v841
        %v845 = vsel %vm530, %v843, 0
        %847 = vmatpush.bf16.msra.mxu0 0
        %848 = vmatpush.bf16.msra.mxu0 0
        %849 = vmatpush.bf16.msra.mxu0 0
        %850 = vmatpush.bf16.msra.mxu0 0
        %851 = vmatpush.bf16.msra.mxu0 %v522
        %852 = vmatpush.bf16.msra.mxu0 %v521
        %853 = vmatpush.bf16.msra.mxu0 %v520
        %854 = vmatpush.bf16.msra.mxu0 %v519
        %855 = vmatmul.bf16.gmra.mxu0 %v845
        %v856 = vpop.f32.mrf.mxu0
        %v857 = vadd.f32 0.0, %v856
        %v858 = vpop.f32.mrf.mxu0
        %v859 = vadd.f32 0.0, %v858
        %860 = vdwg.mxu0
        %v861 = vpack.c.bf16 %v859, %v857
        %s862 = scalar_lea.vmem [#allocation2], 192
        %v863 = vld [vmem:[%s862] sm:$0xf]
        %v864 = vld [vmem:[%s862 + $0x4] sm:$0xf]
        %v865 = vld [vmem:[%s862 + $0x8] sm:$0xf]
        %v866 = vld [vmem:[%s862 + $0xc] sm:$0xf]
        %v867 = vld [vmem:[%s862 + $0x10] sm:$0xf]
        %v868 = vld [vmem:[%s862 + $0x14] sm:$0xf]
        %v869 = vld [vmem:[%s862 + $0x18] sm:$0xf]
        %v870 = vld [vmem:[%s862 + $0x1c] sm:$0xf]
        %v871 = vld [vmem:[%s862 + $0x20] sm:$0xf]
        %v872 = vld [vmem:[%s862 + $0x24] sm:$0xf]
        %v873 = vld [vmem:[%s862 + $0x28] sm:$0xf]
        %v874 = vld [vmem:[%s862 + $0x2c] sm:$0xf]
        %v875 = vld [vmem:[%s862 + $0x30] sm:$0xf]
        %v876 = vld [vmem:[%s862 + $0x34] sm:$0xf]
        %v877 = vld [vmem:[%s862 + $0x38] sm:$0xf]
        %v878 = vld [vmem:[%s862 + $0x3c] sm:$0xf]
        %v895 = vunpack.c.l.b16 %v863
        %v896 = vunpack.c.l.b16 %v864
        %v897 = vunpack.c.l.b16 %v865
        %v898 = vunpack.c.l.b16 %v866
        %v899 = vunpack.c.l.b16 %v867
        %v900 = vunpack.c.l.b16 %v868
        %v901 = vunpack.c.l.b16 %v869
        %v902 = vunpack.c.l.b16 %v870
        %v903 = vunpack.c.l.b16 %v871
        %v904 = vunpack.c.l.b16 %v872
        %v905 = vunpack.c.l.b16 %v873
        %v906 = vunpack.c.l.b16 %v874
        %v907 = vunpack.c.l.b16 %v875
        %v908 = vunpack.c.l.b16 %v876
        %v909 = vunpack.c.l.b16 %v877
        %v910 = vunpack.c.l.b16 %v878
        %v911 = vpack.c.b16 %v896, %v895
        %v912 = vpack.c.b16 %v898, %v897
        %v913 = vpack.c.b16 %v900, %v899
        %v914 = vpack.c.b16 %v902, %v901
        %v915 = vpack.c.b16 %v904, %v903
        %v916 = vpack.c.b16 %v906, %v905
        %v917 = vpack.c.b16 %v908, %v907
        %v918 = vpack.c.b16 %v910, %v909
        %927 = vmatpush.bf16.msra.mxu0 %v918
        %928 = vmatpush.bf16.msra.mxu0 %v917
        %929 = vmatpush.bf16.msra.mxu0 %v916
        %930 = vmatpush.bf16.msra.mxu0 %v915
        %931 = vmatpush.bf16.msra.mxu0 %v914
        %932 = vmatpush.bf16.msra.mxu0 %v913
        %933 = vmatpush.bf16.msra.mxu0 %v912
        %934 = vmatpush.bf16.msra.mxu0 %v911
        %935 = vmatmul.bf16.gmra.mxu0 %v861
        %v936 = vpop.f32.mrf.mxu0
        %v937 = vadd.f32 0.0, %v936
        %v938 = vpop.f32.mrf.mxu0
        %v939 = vadd.f32 0.0, %v938
        %940 = vdwg.mxu0
        %v941 = vadd.f32 %v835, %v937
        %v942 = vadd.f32 %v836, %v939
        %v943 = vld [vmem:[%s3 + $0x20] sm:$0xf]
        %v944 = vld [vmem:[%s3 + $0x24] sm:$0xf]
        %v947 = vunpack.c.l.b16 %v943
        %v948 = vunpack.c.l.b16 %v944
        %v949 = vpack.c.b16 %v948, %v947
        %v951 = vsel %vm530, %v949, 0
        %953 = vmatpush.bf16.msra.mxu0 0
        %954 = vmatpush.bf16.msra.mxu0 0
        %955 = vmatpush.bf16.msra.mxu0 0
        %956 = vmatpush.bf16.msra.mxu0 0
        %957 = vmatpush.bf16.msra.mxu0 %v522
        %958 = vmatpush.bf16.msra.mxu0 %v521
        %959 = vmatpush.bf16.msra.mxu0 %v520
        %960 = vmatpush.bf16.msra.mxu0 %v519
        %961 = vmatmul.bf16.gmra.mxu0 %v951
        %v962 = vpop.f32.mrf.mxu0
        %v963 = vadd.f32 0.0, %v962
        %v964 = vpop.f32.mrf.mxu0
        %v965 = vadd.f32 0.0, %v964
        %966 = vdwg.mxu0
        %v967 = vpack.c.bf16 %v965, %v963
        %s968 = scalar_lea.vmem [#allocation2], 256
        %v969 = vld [vmem:[%s968] sm:$0xf]
        %v970 = vld [vmem:[%s968 + $0x4] sm:$0xf]
        %v971 = vld [vmem:[%s968 + $0x8] sm:$0xf]
        %v972 = vld [vmem:[%s968 + $0xc] sm:$0xf]
        %v973 = vld [vmem:[%s968 + $0x10] sm:$0xf]
        %v974 = vld [vmem:[%s968 + $0x14] sm:$0xf]
        %v975 = vld [vmem:[%s968 + $0x18] sm:$0xf]
        %v976 = vld [vmem:[%s968 + $0x1c] sm:$0xf]
        %v977 = vld [vmem:[%s968 + $0x20] sm:$0xf]
        %v978 = vld [vmem:[%s968 + $0x24] sm:$0xf]
        %v979 = vld [vmem:[%s968 + $0x28] sm:$0xf]
        %v980 = vld [vmem:[%s968 + $0x2c] sm:$0xf]
        %v981 = vld [vmem:[%s968 + $0x30] sm:$0xf]
        %v982 = vld [vmem:[%s968 + $0x34] sm:$0xf]
        %v983 = vld [vmem:[%s968 + $0x38] sm:$0xf]
        %v984 = vld [vmem:[%s968 + $0x3c] sm:$0xf]
        %v1001 = vunpack.c.l.b16 %v969
        %v1002 = vunpack.c.l.b16 %v970
        %v1003 = vunpack.c.l.b16 %v971
        %v1004 = vunpack.c.l.b16 %v972
        %v1005 = vunpack.c.l.b16 %v973
        %v1006 = vunpack.c.l.b16 %v974
        %v1007 = vunpack.c.l.b16 %v975
        %v1008 = vunpack.c.l.b16 %v976
        %v1009 = vunpack.c.l.b16 %v977
        %v1010 = vunpack.c.l.b16 %v978
        %v1011 = vunpack.c.l.b16 %v979
        %v1012 = vunpack.c.l.b16 %v980
        %v1013 = vunpack.c.l.b16 %v981
        %v1014 = vunpack.c.l.b16 %v982
        %v1015 = vunpack.c.l.b16 %v983
        %v1016 = vunpack.c.l.b16 %v984
        %v1017 = vpack.c.b16 %v1002, %v1001
        %v1018 = vpack.c.b16 %v1004, %v1003
        %v1019 = vpack.c.b16 %v1006, %v1005
        %v1020 = vpack.c.b16 %v1008, %v1007
        %v1021 = vpack.c.b16 %v1010, %v1009
        %v1022 = vpack.c.b16 %v1012, %v1011
        %v1023 = vpack.c.b16 %v1014, %v1013
        %v1024 = vpack.c.b16 %v1016, %v1015
        %1033 = vmatpush.bf16.msra.mxu0 %v1024
        %1034 = vmatpush.bf16.msra.mxu0 %v1023
        %1035 = vmatpush.bf16.msra.mxu0 %v1022
        %1036 = vmatpush.bf16.msra.mxu0 %v1021
        %1037 = vmatpush.bf16.msra.mxu0 %v1020
        %1038 = vmatpush.bf16.msra.mxu0 %v1019
        %1039 = vmatpush.bf16.msra.mxu0 %v1018
        %1040 = vmatpush.bf16.msra.mxu0 %v1017
        %1041 = vmatmul.bf16.gmra.mxu0 %v967
        %v1042 = vpop.f32.mrf.mxu0
        %v1043 = vadd.f32 0.0, %v1042
        %v1044 = vpop.f32.mrf.mxu0
        %v1045 = vadd.f32 0.0, %v1044
        %1046 = vdwg.mxu0
        %v1047 = vadd.f32 %v941, %v1043
        %v1048 = vadd.f32 %v942, %v1045
        %v1049 = vld [vmem:[%s3 + $0x28] sm:$0xf]
        %v1050 = vld [vmem:[%s3 + $0x2c] sm:$0xf]
        %v1053 = vunpack.c.l.b16 %v1049
        %v1054 = vunpack.c.l.b16 %v1050
        %v1055 = vpack.c.b16 %v1054, %v1053
        %v1057 = vsel %vm530, %v1055, 0
        %1059 = vmatpush.bf16.msra.mxu0 0
        %1060 = vmatpush.bf16.msra.mxu0 0
        %1061 = vmatpush.bf16.msra.mxu0 0
        %1062 = vmatpush.bf16.msra.mxu0 0
        %1063 = vmatpush.bf16.msra.mxu0 %v522
        %1064 = vmatpush.bf16.msra.mxu0 %v521
        %1065 = vmatpush.bf16.msra.mxu0 %v520
        %1066 = vmatpush.bf16.msra.mxu0 %v519
        %1067 = vmatmul.bf16.gmra.mxu0 %v1057
        %v1068 = vpop.f32.mrf.mxu0
        %v1069 = vadd.f32 0.0, %v1068
        %v1070 = vpop.f32.mrf.mxu0
        %v1071 = vadd.f32 0.0, %v1070
        %1072 = vdwg.mxu0
        %v1073 = vpack.c.bf16 %v1071, %v1069
        %s1074 = scalar_lea.vmem [#allocation2], 320
        %v1075 = vld [vmem:[%s1074] sm:$0xf]
        %v1076 = vld [vmem:[%s1074 + $0x4] sm:$0xf]
        %v1077 = vld [vmem:[%s1074 + $0x8] sm:$0xf]
        %v1078 = vld [vmem:[%s1074 + $0xc] sm:$0xf]
        %v1079 = vld [vmem:[%s1074 + $0x10] sm:$0xf]
        %v1080 = vld [vmem:[%s1074 + $0x14] sm:$0xf]
        %v1081 = vld [vmem:[%s1074 + $0x18] sm:$0xf]
        %v1082 = vld [vmem:[%s1074 + $0x1c] sm:$0xf]
        %v1083 = vld [vmem:[%s1074 + $0x20] sm:$0xf]
        %v1084 = vld [vmem:[%s1074 + $0x24] sm:$0xf]
        %v1085 = vld [vmem:[%s1074 + $0x28] sm:$0xf]
        %v1086 = vld [vmem:[%s1074 + $0x2c] sm:$0xf]
        %v1087 = vld [vmem:[%s1074 + $0x30] sm:$0xf]
        %v1088 = vld [vmem:[%s1074 + $0x34] sm:$0xf]
        %v1089 = vld [vmem:[%s1074 + $0x38] sm:$0xf]
        %v1090 = vld [vmem:[%s1074 + $0x3c] sm:$0xf]
        %v1107 = vunpack.c.l.b16 %v1075
        %v1108 = vunpack.c.l.b16 %v1076
        %v1109 = vunpack.c.l.b16 %v1077
        %v1110 = vunpack.c.l.b16 %v1078
        %v1111 = vunpack.c.l.b16 %v1079
        %v1112 = vunpack.c.l.b16 %v1080
        %v1113 = vunpack.c.l.b16 %v1081
        %v1114 = vunpack.c.l.b16 %v1082
        %v1115 = vunpack.c.l.b16 %v1083
        %v1116 = vunpack.c.l.b16 %v1084
        %v1117 = vunpack.c.l.b16 %v1085
        %v1118 = vunpack.c.l.b16 %v1086
        %v1119 = vunpack.c.l.b16 %v1087
        %v1120 = vunpack.c.l.b16 %v1088
        %v1121 = vunpack.c.l.b16 %v1089
        %v1122 = vunpack.c.l.b16 %v1090
        %v1123 = vpack.c.b16 %v1108, %v1107
        %v1124 = vpack.c.b16 %v1110, %v1109
        %v1125 = vpack.c.b16 %v1112, %v1111
        %v1126 = vpack.c.b16 %v1114, %v1113
        %v1127 = vpack.c.b16 %v1116, %v1115
        %v1128 = vpack.c.b16 %v1118, %v1117
        %v1129 = vpack.c.b16 %v1120, %v1119
        %v1130 = vpack.c.b16 %v1122, %v1121
        %1139 = vmatpush.bf16.msra.mxu0 %v1130
        %1140 = vmatpush.bf16.msra.mxu0 %v1129
        %1141 = vmatpush.bf16.msra.mxu0 %v1128
        %1142 = vmatpush.bf16.msra.mxu0 %v1127
        %1143 = vmatpush.bf16.msra.mxu0 %v1126
        %1144 = vmatpush.bf16.msra.mxu0 %v1125
        %1145 = vmatpush.bf16.msra.mxu0 %v1124
        %1146 = vmatpush.bf16.msra.mxu0 %v1123
        %1147 = vmatmul.bf16.gmra.mxu0 %v1073
        %v1148 = vpop.f32.mrf.mxu0
        %v1149 = vadd.f32 0.0, %v1148
        %v1150 = vpop.f32.mrf.mxu0
        %v1151 = vadd.f32 0.0, %v1150
        %1152 = vdwg.mxu0
        %v1153 = vadd.f32 %v1047, %v1149
        %v1154 = vadd.f32 %v1048, %v1151
        %v1155 = vld [vmem:[%s3 + $0x30] sm:$0xf]
        %v1156 = vld [vmem:[%s3 + $0x34] sm:$0xf]
        %v1159 = vunpack.c.l.b16 %v1155
        %v1160 = vunpack.c.l.b16 %v1156
        %v1161 = vpack.c.b16 %v1160, %v1159
        %v1163 = vsel %vm530, %v1161, 0
        %1165 = vmatpush.bf16.msra.mxu0 0
        %1166 = vmatpush.bf16.msra.mxu0 0
        %1167 = vmatpush.bf16.msra.mxu0 0
        %1168 = vmatpush.bf16.msra.mxu0 0
        %1169 = vmatpush.bf16.msra.mxu0 %v522
        %1170 = vmatpush.bf16.msra.mxu0 %v521
        %1171 = vmatpush.bf16.msra.mxu0 %v520
        %1172 = vmatpush.bf16.msra.mxu0 %v519
        %1173 = vmatmul.bf16.gmra.mxu0 %v1163
        %v1174 = vpop.f32.mrf.mxu0
        %v1175 = vadd.f32 0.0, %v1174
        %v1176 = vpop.f32.mrf.mxu0
        %v1177 = vadd.f32 0.0, %v1176
        %1178 = vdwg.mxu0
        %v1179 = vpack.c.bf16 %v1177, %v1175
        %s1180 = scalar_lea.vmem [#allocation2], 384
        %v1181 = vld [vmem:[%s1180] sm:$0xf]
        %v1182 = vld [vmem:[%s1180 + $0x4] sm:$0xf]
        %v1183 = vld [vmem:[%s1180 + $0x8] sm:$0xf]
        %v1184 = vld [vmem:[%s1180 + $0xc] sm:$0xf]
        %v1185 = vld [vmem:[%s1180 + $0x10] sm:$0xf]
        %v1186 = vld [vmem:[%s1180 + $0x14] sm:$0xf]
        %v1187 = vld [vmem:[%s1180 + $0x18] sm:$0xf]
        %v1188 = vld [vmem:[%s1180 + $0x1c] sm:$0xf]
        %v1189 = vld [vmem:[%s1180 + $0x20] sm:$0xf]
        %v1190 = vld [vmem:[%s1180 + $0x24] sm:$0xf]
        %v1191 = vld [vmem:[%s1180 + $0x28] sm:$0xf]
        %v1192 = vld [vmem:[%s1180 + $0x2c] sm:$0xf]
        %v1193 = vld [vmem:[%s1180 + $0x30] sm:$0xf]
        %v1194 = vld [vmem:[%s1180 + $0x34] sm:$0xf]
        %v1195 = vld [vmem:[%s1180 + $0x38] sm:$0xf]
        %v1196 = vld [vmem:[%s1180 + $0x3c] sm:$0xf]
        %v1213 = vunpack.c.l.b16 %v1181
        %v1214 = vunpack.c.l.b16 %v1182
        %v1215 = vunpack.c.l.b16 %v1183
        %v1216 = vunpack.c.l.b16 %v1184
        %v1217 = vunpack.c.l.b16 %v1185
        %v1218 = vunpack.c.l.b16 %v1186
        %v1219 = vunpack.c.l.b16 %v1187
        %v1220 = vunpack.c.l.b16 %v1188
        %v1221 = vunpack.c.l.b16 %v1189
        %v1222 = vunpack.c.l.b16 %v1190
        %v1223 = vunpack.c.l.b16 %v1191
        %v1224 = vunpack.c.l.b16 %v1192
        %v1225 = vunpack.c.l.b16 %v1193
        %v1226 = vunpack.c.l.b16 %v1194
        %v1227 = vunpack.c.l.b16 %v1195
        %v1228 = vunpack.c.l.b16 %v1196
        %v1229 = vpack.c.b16 %v1214, %v1213
        %v1230 = vpack.c.b16 %v1216, %v1215
        %v1231 = vpack.c.b16 %v1218, %v1217
        %v1232 = vpack.c.b16 %v1220, %v1219
        %v1233 = vpack.c.b16 %v1222, %v1221
        %v1234 = vpack.c.b16 %v1224, %v1223
        %v1235 = vpack.c.b16 %v1226, %v1225
        %v1236 = vpack.c.b16 %v1228, %v1227
        %1245 = vmatpush.bf16.msra.mxu0 %v1236
        %1246 = vmatpush.bf16.msra.mxu0 %v1235
        %1247 = vmatpush.bf16.msra.mxu0 %v1234
        %1248 = vmatpush.bf16.msra.mxu0 %v1233
        %1249 = vmatpush.bf16.msra.mxu0 %v1232
        %1250 = vmatpush.bf16.msra.mxu0 %v1231
        %1251 = vmatpush.bf16.msra.mxu0 %v1230
        %1252 = vmatpush.bf16.msra.mxu0 %v1229
        %1253 = vmatmul.bf16.gmra.mxu0 %v1179
        %v1254 = vpop.f32.mrf.mxu0
        %v1255 = vadd.f32 0.0, %v1254
        %v1256 = vpop.f32.mrf.mxu0
        %v1257 = vadd.f32 0.0, %v1256
        %1258 = vdwg.mxu0
        %v1259 = vadd.f32 %v1153, %v1255
        %v1260 = vadd.f32 %v1154, %v1257
        %v1261 = vld [vmem:[%s3 + $0x38] sm:$0xf]
        %v1262 = vld [vmem:[%s3 + $0x3c] sm:$0xf]
        %v1265 = vunpack.c.l.b16 %v1261
        %v1266 = vunpack.c.l.b16 %v1262
        %v1267 = vpack.c.b16 %v1266, %v1265
        %v1269 = vsel %vm530, %v1267, 0
        %1271 = vmatpush.bf16.msra.mxu0 0
        %1272 = vmatpush.bf16.msra.mxu0 0
        %1273 = vmatpush.bf16.msra.mxu0 0
        %1274 = vmatpush.bf16.msra.mxu0 0
        %1275 = vmatpush.bf16.msra.mxu0 %v522
        %1276 = vmatpush.bf16.msra.mxu0 %v521
        %1277 = vmatpush.bf16.msra.mxu0 %v520
        %1278 = vmatpush.bf16.msra.mxu0 %v519
        %1279 = vmatmul.bf16.gmra.mxu0 %v1269
        %v1280 = vpop.f32.mrf.mxu0
        %v1281 = vadd.f32 0.0, %v1280
        %v1282 = vpop.f32.mrf.mxu0
        %v1283 = vadd.f32 0.0, %v1282
        %1284 = vdwg.mxu0
        %v1285 = vpack.c.bf16 %v1283, %v1281
        %s1286 = scalar_lea.vmem [#allocation2], 448
        %v1287 = vld [vmem:[%s1286] sm:$0xf]
        %v1288 = vld [vmem:[%s1286 + $0x4] sm:$0xf]
        %v1289 = vld [vmem:[%s1286 + $0x8] sm:$0xf]
        %v1290 = vld [vmem:[%s1286 + $0xc] sm:$0xf]
        %v1291 = vld [vmem:[%s1286 + $0x10] sm:$0xf]
        %v1292 = vld [vmem:[%s1286 + $0x14] sm:$0xf]
        %v1293 = vld [vmem:[%s1286 + $0x18] sm:$0xf]
        %v1294 = vld [vmem:[%s1286 + $0x1c] sm:$0xf]
        %v1295 = vld [vmem:[%s1286 + $0x20] sm:$0xf]
        %v1296 = vld [vmem:[%s1286 + $0x24] sm:$0xf]
        %v1297 = vld [vmem:[%s1286 + $0x28] sm:$0xf]
        %v1298 = vld [vmem:[%s1286 + $0x2c] sm:$0xf]
        %v1299 = vld [vmem:[%s1286 + $0x30] sm:$0xf]
        %v1300 = vld [vmem:[%s1286 + $0x34] sm:$0xf]
        %v1301 = vld [vmem:[%s1286 + $0x38] sm:$0xf]
        %v1302 = vld [vmem:[%s1286 + $0x3c] sm:$0xf]
        %v1319 = vunpack.c.l.b16 %v1287
        %v1320 = vunpack.c.l.b16 %v1288
        %v1321 = vunpack.c.l.b16 %v1289
        %v1322 = vunpack.c.l.b16 %v1290
        %v1323 = vunpack.c.l.b16 %v1291
        %v1324 = vunpack.c.l.b16 %v1292
        %v1325 = vunpack.c.l.b16 %v1293
        %v1326 = vunpack.c.l.b16 %v1294
        %v1327 = vunpack.c.l.b16 %v1295
        %v1328 = vunpack.c.l.b16 %v1296
        %v1329 = vunpack.c.l.b16 %v1297
        %v1330 = vunpack.c.l.b16 %v1298
        %v1331 = vunpack.c.l.b16 %v1299
        %v1332 = vunpack.c.l.b16 %v1300
        %v1333 = vunpack.c.l.b16 %v1301
        %v1334 = vunpack.c.l.b16 %v1302
        %v1335 = vpack.c.b16 %v1320, %v1319
        %v1336 = vpack.c.b16 %v1322, %v1321
        %v1337 = vpack.c.b16 %v1324, %v1323
        %v1338 = vpack.c.b16 %v1326, %v1325
        %v1339 = vpack.c.b16 %v1328, %v1327
        %v1340 = vpack.c.b16 %v1330, %v1329
        %v1341 = vpack.c.b16 %v1332, %v1331
        %v1342 = vpack.c.b16 %v1334, %v1333
        %1351 = vmatpush.bf16.msra.mxu0 %v1342
        %1352 = vmatpush.bf16.msra.mxu0 %v1341
        %1353 = vmatpush.bf16.msra.mxu0 %v1340
        %1354 = vmatpush.bf16.msra.mxu0 %v1339
        %1355 = vmatpush.bf16.msra.mxu0 %v1338
        %1356 = vmatpush.bf16.msra.mxu0 %v1337
        %1357 = vmatpush.bf16.msra.mxu0 %v1336
        %1358 = vmatpush.bf16.msra.mxu0 %v1335
        %1359 = vmatmul.bf16.gmra.mxu0 %v1285
        %v1360 = vpop.f32.mrf.mxu0
        %v1361 = vadd.f32 0.0, %v1360
        %v1362 = vpop.f32.mrf.mxu0
        %v1363 = vadd.f32 0.0, %v1362
        %1364 = vdwg.mxu0
        %v1365 = vadd.f32 %v1259, %v1361
        %v1366 = vadd.f32 %v1260, %v1363
        %v1367 = vld [vmem:[%s3 + $0x40] sm:$0xf]
        %v1368 = vld [vmem:[%s3 + $0x44] sm:$0xf]
        %v1371 = vunpack.c.l.b16 %v1367
        %v1372 = vunpack.c.l.b16 %v1368
        %v1373 = vpack.c.b16 %v1372, %v1371
        %v1375 = vsel %vm530, %v1373, 0
        %1377 = vmatpush.bf16.msra.mxu0 0
        %1378 = vmatpush.bf16.msra.mxu0 0
        %1379 = vmatpush.bf16.msra.mxu0 0
        %1380 = vmatpush.bf16.msra.mxu0 0
        %1381 = vmatpush.bf16.msra.mxu0 %v522
        %1382 = vmatpush.bf16.msra.mxu0 %v521
        %1383 = vmatpush.bf16.msra.mxu0 %v520
        %1384 = vmatpush.bf16.msra.mxu0 %v519
        %1385 = vmatmul.bf16.gmra.mxu0 %v1375
        %v1386 = vpop.f32.mrf.mxu0
        %v1387 = vadd.f32 0.0, %v1386
        %v1388 = vpop.f32.mrf.mxu0
        %v1389 = vadd.f32 0.0, %v1388
        %1390 = vdwg.mxu0
        %v1391 = vpack.c.bf16 %v1389, %v1387
        %s1392 = scalar_lea.vmem [#allocation2], 512
        %v1393 = vld [vmem:[%s1392] sm:$0xf]
        %v1394 = vld [vmem:[%s1392 + $0x4] sm:$0xf]
        %v1395 = vld [vmem:[%s1392 + $0x8] sm:$0xf]
        %v1396 = vld [vmem:[%s1392 + $0xc] sm:$0xf]
        %v1397 = vld [vmem:[%s1392 + $0x10] sm:$0xf]
        %v1398 = vld [vmem:[%s1392 + $0x14] sm:$0xf]
        %v1399 = vld [vmem:[%s1392 + $0x18] sm:$0xf]
        %v1400 = vld [vmem:[%s1392 + $0x1c] sm:$0xf]
        %v1401 = vld [vmem:[%s1392 + $0x20] sm:$0xf]
        %v1402 = vld [vmem:[%s1392 + $0x24] sm:$0xf]
        %v1403 = vld [vmem:[%s1392 + $0x28] sm:$0xf]
        %v1404 = vld [vmem:[%s1392 + $0x2c] sm:$0xf]
        %v1405 = vld [vmem:[%s1392 + $0x30] sm:$0xf]
        %v1406 = vld [vmem:[%s1392 + $0x34] sm:$0xf]
        %v1407 = vld [vmem:[%s1392 + $0x38] sm:$0xf]
        %v1408 = vld [vmem:[%s1392 + $0x3c] sm:$0xf]
        %v1425 = vunpack.c.l.b16 %v1393
        %v1426 = vunpack.c.l.b16 %v1394
        %v1427 = vunpack.c.l.b16 %v1395
        %v1428 = vunpack.c.l.b16 %v1396
        %v1429 = vunpack.c.l.b16 %v1397
        %v1430 = vunpack.c.l.b16 %v1398
        %v1431 = vunpack.c.l.b16 %v1399
        %v1432 = vunpack.c.l.b16 %v1400
        %v1433 = vunpack.c.l.b16 %v1401
        %v1434 = vunpack.c.l.b16 %v1402
        %v1435 = vunpack.c.l.b16 %v1403
        %v1436 = vunpack.c.l.b16 %v1404
        %v1437 = vunpack.c.l.b16 %v1405
        %v1438 = vunpack.c.l.b16 %v1406
        %v1439 = vunpack.c.l.b16 %v1407
        %v1440 = vunpack.c.l.b16 %v1408
        %v1441 = vpack.c.b16 %v1426, %v1425
        %v1442 = vpack.c.b16 %v1428, %v1427
        %v1443 = vpack.c.b16 %v1430, %v1429
        %v1444 = vpack.c.b16 %v1432, %v1431
        %v1445 = vpack.c.b16 %v1434, %v1433
        %v1446 = vpack.c.b16 %v1436, %v1435
        %v1447 = vpack.c.b16 %v1438, %v1437
        %v1448 = vpack.c.b16 %v1440, %v1439
        %1457 = vmatpush.bf16.msra.mxu0 %v1448
        %1458 = vmatpush.bf16.msra.mxu0 %v1447
        %1459 = vmatpush.bf16.msra.mxu0 %v1446
        %1460 = vmatpush.bf16.msra.mxu0 %v1445
        %1461 = vmatpush.bf16.msra.mxu0 %v1444
        %1462 = vmatpush.bf16.msra.mxu0 %v1443
        %1463 = vmatpush.bf16.msra.mxu0 %v1442
        %1464 = vmatpush.bf16.msra.mxu0 %v1441
        %1465 = vmatmul.bf16.gmra.mxu0 %v1391
        %v1466 = vpop.f32.mrf.mxu0
        %v1467 = vadd.f32 0.0, %v1466
        %v1468 = vpop.f32.mrf.mxu0
        %v1469 = vadd.f32 0.0, %v1468
        %1470 = vdwg.mxu0
        %v1471 = vadd.f32 %v1365, %v1467
        %v1472 = vadd.f32 %v1366, %v1469
        %v1473 = vld [vmem:[%s3 + $0x48] sm:$0xf]
        %v1474 = vld [vmem:[%s3 + $0x4c] sm:$0xf]
        %v1477 = vunpack.c.l.b16 %v1473
        %v1478 = vunpack.c.l.b16 %v1474
        %v1479 = vpack.c.b16 %v1478, %v1477
        %v1481 = vsel %vm530, %v1479, 0
        %1483 = vmatpush.bf16.msra.mxu0 0
        %1484 = vmatpush.bf16.msra.mxu0 0
        %1485 = vmatpush.bf16.msra.mxu0 0
        %1486 = vmatpush.bf16.msra.mxu0 0
        %1487 = vmatpush.bf16.msra.mxu0 %v522
        %1488 = vmatpush.bf16.msra.mxu0 %v521
        %1489 = vmatpush.bf16.msra.mxu0 %v520
        %1490 = vmatpush.bf16.msra.mxu0 %v519
        %1491 = vmatmul.bf16.gmra.mxu0 %v1481
        %v1492 = vpop.f32.mrf.mxu0
        %v1493 = vadd.f32 0.0, %v1492
        %v1494 = vpop.f32.mrf.mxu0
        %v1495 = vadd.f32 0.0, %v1494
        %1496 = vdwg.mxu0
        %v1497 = vpack.c.bf16 %v1495, %v1493
        %s1498 = scalar_lea.vmem [#allocation2], 576
        %v1499 = vld [vmem:[%s1498] sm:$0xf]
        %v1500 = vld [vmem:[%s1498 + $0x4] sm:$0xf]
        %v1501 = vld [vmem:[%s1498 + $0x8] sm:$0xf]
        %v1502 = vld [vmem:[%s1498 + $0xc] sm:$0xf]
        %v1503 = vld [vmem:[%s1498 + $0x10] sm:$0xf]
        %v1504 = vld [vmem:[%s1498 + $0x14] sm:$0xf]
        %v1505 = vld [vmem:[%s1498 + $0x18] sm:$0xf]
        %v1506 = vld [vmem:[%s1498 + $0x1c] sm:$0xf]
        %v1507 = vld [vmem:[%s1498 + $0x20] sm:$0xf]
        %v1508 = vld [vmem:[%s1498 + $0x24] sm:$0xf]
        %v1509 = vld [vmem:[%s1498 + $0x28] sm:$0xf]
        %v1510 = vld [vmem:[%s1498 + $0x2c] sm:$0xf]
        %v1511 = vld [vmem:[%s1498 + $0x30] sm:$0xf]
        %v1512 = vld [vmem:[%s1498 + $0x34] sm:$0xf]
        %v1513 = vld [vmem:[%s1498 + $0x38] sm:$0xf]
        %v1514 = vld [vmem:[%s1498 + $0x3c] sm:$0xf]
        %v1531 = vunpack.c.l.b16 %v1499
        %v1532 = vunpack.c.l.b16 %v1500
        %v1533 = vunpack.c.l.b16 %v1501
        %v1534 = vunpack.c.l.b16 %v1502
        %v1535 = vunpack.c.l.b16 %v1503
        %v1536 = vunpack.c.l.b16 %v1504
        %v1537 = vunpack.c.l.b16 %v1505
        %v1538 = vunpack.c.l.b16 %v1506
        %v1539 = vunpack.c.l.b16 %v1507
        %v1540 = vunpack.c.l.b16 %v1508
        %v1541 = vunpack.c.l.b16 %v1509
        %v1542 = vunpack.c.l.b16 %v1510
        %v1543 = vunpack.c.l.b16 %v1511
        %v1544 = vunpack.c.l.b16 %v1512
        %v1545 = vunpack.c.l.b16 %v1513
        %v1546 = vunpack.c.l.b16 %v1514
        %v1547 = vpack.c.b16 %v1532, %v1531
        %v1548 = vpack.c.b16 %v1534, %v1533
        %v1549 = vpack.c.b16 %v1536, %v1535
        %v1550 = vpack.c.b16 %v1538, %v1537
        %v1551 = vpack.c.b16 %v1540, %v1539
        %v1552 = vpack.c.b16 %v1542, %v1541
        %v1553 = vpack.c.b16 %v1544, %v1543
        %v1554 = vpack.c.b16 %v1546, %v1545
        %1563 = vmatpush.bf16.msra.mxu0 %v1554
        %1564 = vmatpush.bf16.msra.mxu0 %v1553
        %1565 = vmatpush.bf16.msra.mxu0 %v1552
        %1566 = vmatpush.bf16.msra.mxu0 %v1551
        %1567 = vmatpush.bf16.msra.mxu0 %v1550
        %1568 = vmatpush.bf16.msra.mxu0 %v1549
        %1569 = vmatpush.bf16.msra.mxu0 %v1548
        %1570 = vmatpush.bf16.msra.mxu0 %v1547
        %1571 = vmatmul.bf16.gmra.mxu0 %v1497
        %v1572 = vpop.f32.mrf.mxu0
        %v1573 = vadd.f32 0.0, %v1572
        %v1574 = vpop.f32.mrf.mxu0
        %v1575 = vadd.f32 0.0, %v1574
        %1576 = vdwg.mxu0
        %v1577 = vadd.f32 %v1471, %v1573
        %v1578 = vadd.f32 %v1472, %v1575
        %v1579 = vld [vmem:[%s3 + $0x50] sm:$0xf]
        %v1580 = vld [vmem:[%s3 + $0x54] sm:$0xf]
        %v1583 = vunpack.c.l.b16 %v1579
        %v1584 = vunpack.c.l.b16 %v1580
        %v1585 = vpack.c.b16 %v1584, %v1583
        %v1587 = vsel %vm530, %v1585, 0
        %1589 = vmatpush.bf16.msra.mxu0 0
        %1590 = vmatpush.bf16.msra.mxu0 0
        %1591 = vmatpush.bf16.msra.mxu0 0
        %1592 = vmatpush.bf16.msra.mxu0 0
        %1593 = vmatpush.bf16.msra.mxu0 %v522
        %1594 = vmatpush.bf16.msra.mxu0 %v521
        %1595 = vmatpush.bf16.msra.mxu0 %v520
        %1596 = vmatpush.bf16.msra.mxu0 %v519
        %1597 = vmatmul.bf16.gmra.mxu0 %v1587
        %v1598 = vpop.f32.mrf.mxu0
        %v1599 = vadd.f32 0.0, %v1598
        %v1600 = vpop.f32.mrf.mxu0
        %v1601 = vadd.f32 0.0, %v1600
        %1602 = vdwg.mxu0
        %v1603 = vpack.c.bf16 %v1601, %v1599
        %s1604 = scalar_lea.vmem [#allocation2], 640
        %v1605 = vld [vmem:[%s1604] sm:$0xf]
        %v1606 = vld [vmem:[%s1604 + $0x4] sm:$0xf]
        %v1607 = vld [vmem:[%s1604 + $0x8] sm:$0xf]
        %v1608 = vld [vmem:[%s1604 + $0xc] sm:$0xf]
        %v1609 = vld [vmem:[%s1604 + $0x10] sm:$0xf]
        %v1610 = vld [vmem:[%s1604 + $0x14] sm:$0xf]
        %v1611 = vld [vmem:[%s1604 + $0x18] sm:$0xf]
        %v1612 = vld [vmem:[%s1604 + $0x1c] sm:$0xf]
        %v1613 = vld [vmem:[%s1604 + $0x20] sm:$0xf]
        %v1614 = vld [vmem:[%s1604 + $0x24] sm:$0xf]
        %v1615 = vld [vmem:[%s1604 + $0x28] sm:$0xf]
        %v1616 = vld [vmem:[%s1604 + $0x2c] sm:$0xf]
        %v1617 = vld [vmem:[%s1604 + $0x30] sm:$0xf]
        %v1618 = vld [vmem:[%s1604 + $0x34] sm:$0xf]
        %v1619 = vld [vmem:[%s1604 + $0x38] sm:$0xf]
        %v1620 = vld [vmem:[%s1604 + $0x3c] sm:$0xf]
        %v1637 = vunpack.c.l.b16 %v1605
        %v1638 = vunpack.c.l.b16 %v1606
        %v1639 = vunpack.c.l.b16 %v1607
        %v1640 = vunpack.c.l.b16 %v1608
        %v1641 = vunpack.c.l.b16 %v1609
        %v1642 = vunpack.c.l.b16 %v1610
        %v1643 = vunpack.c.l.b16 %v1611
        %v1644 = vunpack.c.l.b16 %v1612
        %v1645 = vunpack.c.l.b16 %v1613
        %v1646 = vunpack.c.l.b16 %v1614
        %v1647 = vunpack.c.l.b16 %v1615
        %v1648 = vunpack.c.l.b16 %v1616
        %v1649 = vunpack.c.l.b16 %v1617
        %v1650 = vunpack.c.l.b16 %v1618
        %v1651 = vunpack.c.l.b16 %v1619
        %v1652 = vunpack.c.l.b16 %v1620
        %v1653 = vpack.c.b16 %v1638, %v1637
        %v1654 = vpack.c.b16 %v1640, %v1639
        %v1655 = vpack.c.b16 %v1642, %v1641
        %v1656 = vpack.c.b16 %v1644, %v1643
        %v1657 = vpack.c.b16 %v1646, %v1645
        %v1658 = vpack.c.b16 %v1648, %v1647
        %v1659 = vpack.c.b16 %v1650, %v1649
        %v1660 = vpack.c.b16 %v1652, %v1651
        %1669 = vmatpush.bf16.msra.mxu0 %v1660
        %1670 = vmatpush.bf16.msra.mxu0 %v1659
        %1671 = vmatpush.bf16.msra.mxu0 %v1658
        %1672 = vmatpush.bf16.msra.mxu0 %v1657
        %1673 = vmatpush.bf16.msra.mxu0 %v1656
        %1674 = vmatpush.bf16.msra.mxu0 %v1655
        %1675 = vmatpush.bf16.msra.mxu0 %v1654
        %1676 = vmatpush.bf16.msra.mxu0 %v1653
        %1677 = vmatmul.bf16.gmra.mxu0 %v1603
        %v1678 = vpop.f32.mrf.mxu0
        %v1679 = vadd.f32 0.0, %v1678
        %v1680 = vpop.f32.mrf.mxu0
        %v1681 = vadd.f32 0.0, %v1680
        %1682 = vdwg.mxu0
        %v1683 = vadd.f32 %v1577, %v1679
        %v1684 = vadd.f32 %v1578, %v1681
        %v1685 = vld [vmem:[%s3 + $0x58] sm:$0xf]
        %v1686 = vld [vmem:[%s3 + $0x5c] sm:$0xf]
        %v1689 = vunpack.c.l.b16 %v1685
        %v1690 = vunpack.c.l.b16 %v1686
        %v1691 = vpack.c.b16 %v1690, %v1689
        %v1693 = vsel %vm530, %v1691, 0
        %1695 = vmatpush.bf16.msra.mxu0 0
        %1696 = vmatpush.bf16.msra.mxu0 0
        %1697 = vmatpush.bf16.msra.mxu0 0
        %1698 = vmatpush.bf16.msra.mxu0 0
        %1699 = vmatpush.bf16.msra.mxu0 %v522
        %1700 = vmatpush.bf16.msra.mxu0 %v521
        %1701 = vmatpush.bf16.msra.mxu0 %v520
        %1702 = vmatpush.bf16.msra.mxu0 %v519
        %1703 = vmatmul.bf16.gmra.mxu0 %v1693
        %v1704 = vpop.f32.mrf.mxu0
        %v1705 = vadd.f32 0.0, %v1704
        %v1706 = vpop.f32.mrf.mxu0
        %v1707 = vadd.f32 0.0, %v1706
        %1708 = vdwg.mxu0
        %v1709 = vpack.c.bf16 %v1707, %v1705
        %s1710 = scalar_lea.vmem [#allocation2], 704
        %v1711 = vld [vmem:[%s1710] sm:$0xf]
        %v1712 = vld [vmem:[%s1710 + $0x4] sm:$0xf]
        %v1713 = vld [vmem:[%s1710 + $0x8] sm:$0xf]
        %v1714 = vld [vmem:[%s1710 + $0xc] sm:$0xf]
        %v1715 = vld [vmem:[%s1710 + $0x10] sm:$0xf]
        %v1716 = vld [vmem:[%s1710 + $0x14] sm:$0xf]
        %v1717 = vld [vmem:[%s1710 + $0x18] sm:$0xf]
        %v1718 = vld [vmem:[%s1710 + $0x1c] sm:$0xf]
        %v1719 = vld [vmem:[%s1710 + $0x20] sm:$0xf]
        %v1720 = vld [vmem:[%s1710 + $0x24] sm:$0xf]
        %v1721 = vld [vmem:[%s1710 + $0x28] sm:$0xf]
        %v1722 = vld [vmem:[%s1710 + $0x2c] sm:$0xf]
        %v1723 = vld [vmem:[%s1710 + $0x30] sm:$0xf]
        %v1724 = vld [vmem:[%s1710 + $0x34] sm:$0xf]
        %v1725 = vld [vmem:[%s1710 + $0x38] sm:$0xf]
        %v1726 = vld [vmem:[%s1710 + $0x3c] sm:$0xf]
        %v1743 = vunpack.c.l.b16 %v1711
        %v1744 = vunpack.c.l.b16 %v1712
        %v1745 = vunpack.c.l.b16 %v1713
        %v1746 = vunpack.c.l.b16 %v1714
        %v1747 = vunpack.c.l.b16 %v1715
        %v1748 = vunpack.c.l.b16 %v1716
        %v1749 = vunpack.c.l.b16 %v1717
        %v1750 = vunpack.c.l.b16 %v1718
        %v1751 = vunpack.c.l.b16 %v1719
        %v1752 = vunpack.c.l.b16 %v1720
        %v1753 = vunpack.c.l.b16 %v1721
        %v1754 = vunpack.c.l.b16 %v1722
        %v1755 = vunpack.c.l.b16 %v1723
        %v1756 = vunpack.c.l.b16 %v1724
        %v1757 = vunpack.c.l.b16 %v1725
        %v1758 = vunpack.c.l.b16 %v1726
        %v1759 = vpack.c.b16 %v1744, %v1743
        %v1760 = vpack.c.b16 %v1746, %v1745
        %v1761 = vpack.c.b16 %v1748, %v1747
        %v1762 = vpack.c.b16 %v1750, %v1749
        %v1763 = vpack.c.b16 %v1752, %v1751
        %v1764 = vpack.c.b16 %v1754, %v1753
        %v1765 = vpack.c.b16 %v1756, %v1755
        %v1766 = vpack.c.b16 %v1758, %v1757
        %1775 = vmatpush.bf16.msra.mxu0 %v1766
        %1776 = vmatpush.bf16.msra.mxu0 %v1765
        %1777 = vmatpush.bf16.msra.mxu0 %v1764
        %1778 = vmatpush.bf16.msra.mxu0 %v1763
        %1779 = vmatpush.bf16.msra.mxu0 %v1762
        %1780 = vmatpush.bf16.msra.mxu0 %v1761
        %1781 = vmatpush.bf16.msra.mxu0 %v1760
        %1782 = vmatpush.bf16.msra.mxu0 %v1759
        %1783 = vmatmul.bf16.gmra.mxu0 %v1709
        %v1784 = vpop.f32.mrf.mxu0
        %v1785 = vadd.f32 0.0, %v1784
        %v1786 = vpop.f32.mrf.mxu0
        %v1787 = vadd.f32 0.0, %v1786
        %1788 = vdwg.mxu0
        %v1789 = vadd.f32 %v1683, %v1785
        %v1790 = vadd.f32 %v1684, %v1787
        %v1791 = vld [vmem:[%s3 + $0x60] sm:$0xf]
        %v1792 = vld [vmem:[%s3 + $0x64] sm:$0xf]
        %v1795 = vunpack.c.l.b16 %v1791
        %v1796 = vunpack.c.l.b16 %v1792
        %v1797 = vpack.c.b16 %v1796, %v1795
        %v1799 = vsel %vm530, %v1797, 0
        %1801 = vmatpush.bf16.msra.mxu0 0
        %1802 = vmatpush.bf16.msra.mxu0 0
        %1803 = vmatpush.bf16.msra.mxu0 0
        %1804 = vmatpush.bf16.msra.mxu0 0
        %1805 = vmatpush.bf16.msra.mxu0 %v522
        %1806 = vmatpush.bf16.msra.mxu0 %v521
        %1807 = vmatpush.bf16.msra.mxu0 %v520
        %1808 = vmatpush.bf16.msra.mxu0 %v519
        %1809 = vmatmul.bf16.gmra.mxu0 %v1799
        %v1810 = vpop.f32.mrf.mxu0
        %v1811 = vadd.f32 0.0, %v1810
        %v1812 = vpop.f32.mrf.mxu0
        %v1813 = vadd.f32 0.0, %v1812
        %1814 = vdwg.mxu0
        %v1815 = vpack.c.bf16 %v1813, %v1811
        %s1816 = scalar_lea.vmem [#allocation2], 768
        %v1817 = vld [vmem:[%s1816] sm:$0xf]
        %v1818 = vld [vmem:[%s1816 + $0x4] sm:$0xf]
        %v1819 = vld [vmem:[%s1816 + $0x8] sm:$0xf]
        %v1820 = vld [vmem:[%s1816 + $0xc] sm:$0xf]
        %v1821 = vld [vmem:[%s1816 + $0x10] sm:$0xf]
        %v1822 = vld [vmem:[%s1816 + $0x14] sm:$0xf]
        %v1823 = vld [vmem:[%s1816 + $0x18] sm:$0xf]
        %v1824 = vld [vmem:[%s1816 + $0x1c] sm:$0xf]
        %v1825 = vld [vmem:[%s1816 + $0x20] sm:$0xf]
        %v1826 = vld [vmem:[%s1816 + $0x24] sm:$0xf]
        %v1827 = vld [vmem:[%s1816 + $0x28] sm:$0xf]
        %v1828 = vld [vmem:[%s1816 + $0x2c] sm:$0xf]
        %v1829 = vld [vmem:[%s1816 + $0x30] sm:$0xf]
        %v1830 = vld [vmem:[%s1816 + $0x34] sm:$0xf]
        %v1831 = vld [vmem:[%s1816 + $0x38] sm:$0xf]
        %v1832 = vld [vmem:[%s1816 + $0x3c] sm:$0xf]
        %v1849 = vunpack.c.l.b16 %v1817
        %v1850 = vunpack.c.l.b16 %v1818
        %v1851 = vunpack.c.l.b16 %v1819
        %v1852 = vunpack.c.l.b16 %v1820
        %v1853 = vunpack.c.l.b16 %v1821
        %v1854 = vunpack.c.l.b16 %v1822
        %v1855 = vunpack.c.l.b16 %v1823
        %v1856 = vunpack.c.l.b16 %v1824
        %v1857 = vunpack.c.l.b16 %v1825
        %v1858 = vunpack.c.l.b16 %v1826
        %v1859 = vunpack.c.l.b16 %v1827
        %v1860 = vunpack.c.l.b16 %v1828
        %v1861 = vunpack.c.l.b16 %v1829
        %v1862 = vunpack.c.l.b16 %v1830
        %v1863 = vunpack.c.l.b16 %v1831
        %v1864 = vunpack.c.l.b16 %v1832
        %v1865 = vpack.c.b16 %v1850, %v1849
        %v1866 = vpack.c.b16 %v1852, %v1851
        %v1867 = vpack.c.b16 %v1854, %v1853
        %v1868 = vpack.c.b16 %v1856, %v1855
        %v1869 = vpack.c.b16 %v1858, %v1857
        %v1870 = vpack.c.b16 %v1860, %v1859
        %v1871 = vpack.c.b16 %v1862, %v1861
        %v1872 = vpack.c.b16 %v1864, %v1863
        %1881 = vmatpush.bf16.msra.mxu0 %v1872
        %1882 = vmatpush.bf16.msra.mxu0 %v1871
        %1883 = vmatpush.bf16.msra.mxu0 %v1870
        %1884 = vmatpush.bf16.msra.mxu0 %v1869
        %1885 = vmatpush.bf16.msra.mxu0 %v1868
        %1886 = vmatpush.bf16.msra.mxu0 %v1867
        %1887 = vmatpush.bf16.msra.mxu0 %v1866
        %1888 = vmatpush.bf16.msra.mxu0 %v1865
        %1889 = vmatmul.bf16.gmra.mxu0 %v1815
        %v1890 = vpop.f32.mrf.mxu0
        %v1891 = vadd.f32 0.0, %v1890
        %v1892 = vpop.f32.mrf.mxu0
        %v1893 = vadd.f32 0.0, %v1892
        %1894 = vdwg.mxu0
        %v1895 = vadd.f32 %v1789, %v1891
        %v1896 = vadd.f32 %v1790, %v1893
        %v1897 = vld [vmem:[%s3 + $0x68] sm:$0xf]
        %v1898 = vld [vmem:[%s3 + $0x6c] sm:$0xf]
        %v1901 = vunpack.c.l.b16 %v1897
        %v1902 = vunpack.c.l.b16 %v1898
        %v1903 = vpack.c.b16 %v1902, %v1901
        %v1905 = vsel %vm530, %v1903, 0
        %1907 = vmatpush.bf16.msra.mxu0 0
        %1908 = vmatpush.bf16.msra.mxu0 0
        %1909 = vmatpush.bf16.msra.mxu0 0
        %1910 = vmatpush.bf16.msra.mxu0 0
        %1911 = vmatpush.bf16.msra.mxu0 %v522
        %1912 = vmatpush.bf16.msra.mxu0 %v521
        %1913 = vmatpush.bf16.msra.mxu0 %v520
        %1914 = vmatpush.bf16.msra.mxu0 %v519
        %1915 = vmatmul.bf16.gmra.mxu0 %v1905
        %v1916 = vpop.f32.mrf.mxu0
        %v1917 = vadd.f32 0.0, %v1916
        %v1918 = vpop.f32.mrf.mxu0
        %v1919 = vadd.f32 0.0, %v1918
        %1920 = vdwg.mxu0
        %v1921 = vpack.c.bf16 %v1919, %v1917
        %s1922 = scalar_lea.vmem [#allocation2], 832
        %v1923 = vld [vmem:[%s1922] sm:$0xf]
        %v1924 = vld [vmem:[%s1922 + $0x4] sm:$0xf]
        %v1925 = vld [vmem:[%s1922 + $0x8] sm:$0xf]
        %v1926 = vld [vmem:[%s1922 + $0xc] sm:$0xf]
        %v1927 = vld [vmem:[%s1922 + $0x10] sm:$0xf]
        %v1928 = vld [vmem:[%s1922 + $0x14] sm:$0xf]
        %v1929 = vld [vmem:[%s1922 + $0x18] sm:$0xf]
        %v1930 = vld [vmem:[%s1922 + $0x1c] sm:$0xf]
        %v1931 = vld [vmem:[%s1922 + $0x20] sm:$0xf]
        %v1932 = vld [vmem:[%s1922 + $0x24] sm:$0xf]
        %v1933 = vld [vmem:[%s1922 + $0x28] sm:$0xf]
        %v1934 = vld [vmem:[%s1922 + $0x2c] sm:$0xf]
        %v1935 = vld [vmem:[%s1922 + $0x30] sm:$0xf]
        %v1936 = vld [vmem:[%s1922 + $0x34] sm:$0xf]
        %v1937 = vld [vmem:[%s1922 + $0x38] sm:$0xf]
        %v1938 = vld [vmem:[%s1922 + $0x3c] sm:$0xf]
        %v1955 = vunpack.c.l.b16 %v1923
        %v1956 = vunpack.c.l.b16 %v1924
        %v1957 = vunpack.c.l.b16 %v1925
        %v1958 = vunpack.c.l.b16 %v1926
        %v1959 = vunpack.c.l.b16 %v1927
        %v1960 = vunpack.c.l.b16 %v1928
        %v1961 = vunpack.c.l.b16 %v1929
        %v1962 = vunpack.c.l.b16 %v1930
        %v1963 = vunpack.c.l.b16 %v1931
        %v1964 = vunpack.c.l.b16 %v1932
        %v1965 = vunpack.c.l.b16 %v1933
        %v1966 = vunpack.c.l.b16 %v1934
        %v1967 = vunpack.c.l.b16 %v1935
        %v1968 = vunpack.c.l.b16 %v1936
        %v1969 = vunpack.c.l.b16 %v1937
        %v1970 = vunpack.c.l.b16 %v1938
        %v1971 = vpack.c.b16 %v1956, %v1955
        %v1972 = vpack.c.b16 %v1958, %v1957
        %v1973 = vpack.c.b16 %v1960, %v1959
        %v1974 = vpack.c.b16 %v1962, %v1961
        %v1975 = vpack.c.b16 %v1964, %v1963
        %v1976 = vpack.c.b16 %v1966, %v1965
        %v1977 = vpack.c.b16 %v1968, %v1967
        %v1978 = vpack.c.b16 %v1970, %v1969
        %1987 = vmatpush.bf16.msra.mxu0 %v1978
        %1988 = vmatpush.bf16.msra.mxu0 %v1977
        %1989 = vmatpush.bf16.msra.mxu0 %v1976
        %1990 = vmatpush.bf16.msra.mxu0 %v1975
        %1991 = vmatpush.bf16.msra.mxu0 %v1974
        %1992 = vmatpush.bf16.msra.mxu0 %v1973
        %1993 = vmatpush.bf16.msra.mxu0 %v1972
        %1994 = vmatpush.bf16.msra.mxu0 %v1971
        %1995 = vmatmul.bf16.gmra.mxu0 %v1921
        %v1996 = vpop.f32.mrf.mxu0
        %v1997 = vadd.f32 0.0, %v1996
        %v1998 = vpop.f32.mrf.mxu0
        %v1999 = vadd.f32 0.0, %v1998
        %2000 = vdwg.mxu0
        %v2001 = vadd.f32 %v1895, %v1997
        %v2002 = vadd.f32 %v1896, %v1999
        %v2003 = vld [vmem:[%s3 + $0x70] sm:$0xf]
        %v2004 = vld [vmem:[%s3 + $0x74] sm:$0xf]
        %v2007 = vunpack.c.l.b16 %v2003
        %v2008 = vunpack.c.l.b16 %v2004
        %v2009 = vpack.c.b16 %v2008, %v2007
        %v2011 = vsel %vm530, %v2009, 0
        %2013 = vmatpush.bf16.msra.mxu0 0
        %2014 = vmatpush.bf16.msra.mxu0 0
        %2015 = vmatpush.bf16.msra.mxu0 0
        %2016 = vmatpush.bf16.msra.mxu0 0
        %2017 = vmatpush.bf16.msra.mxu0 %v522
        %2018 = vmatpush.bf16.msra.mxu0 %v521
        %2019 = vmatpush.bf16.msra.mxu0 %v520
        %2020 = vmatpush.bf16.msra.mxu0 %v519
        %2021 = vmatmul.bf16.gmra.mxu0 %v2011
        %v2022 = vpop.f32.mrf.mxu0
        %v2023 = vadd.f32 0.0, %v2022
        %v2024 = vpop.f32.mrf.mxu0
        %v2025 = vadd.f32 0.0, %v2024
        %2026 = vdwg.mxu0
        %v2027 = vpack.c.bf16 %v2025, %v2023
        %s2028 = scalar_lea.vmem [#allocation2], 896
        %v2029 = vld [vmem:[%s2028] sm:$0xf]
        %v2030 = vld [vmem:[%s2028 + $0x4] sm:$0xf]
        %v2031 = vld [vmem:[%s2028 + $0x8] sm:$0xf]
        %v2032 = vld [vmem:[%s2028 + $0xc] sm:$0xf]
        %v2033 = vld [vmem:[%s2028 + $0x10] sm:$0xf]
        %v2034 = vld [vmem:[%s2028 + $0x14] sm:$0xf]
        %v2035 = vld [vmem:[%s2028 + $0x18] sm:$0xf]
        %v2036 = vld [vmem:[%s2028 + $0x1c] sm:$0xf]
        %v2037 = vld [vmem:[%s2028 + $0x20] sm:$0xf]
        %v2038 = vld [vmem:[%s2028 + $0x24] sm:$0xf]
        %v2039 = vld [vmem:[%s2028 + $0x28] sm:$0xf]
        %v2040 = vld [vmem:[%s2028 + $0x2c] sm:$0xf]
        %v2041 = vld [vmem:[%s2028 + $0x30] sm:$0xf]
        %v2042 = vld [vmem:[%s2028 + $0x34] sm:$0xf]
        %v2043 = vld [vmem:[%s2028 + $0x38] sm:$0xf]
        %v2044 = vld [vmem:[%s2028 + $0x3c] sm:$0xf]
        %v2061 = vunpack.c.l.b16 %v2029
        %v2062 = vunpack.c.l.b16 %v2030
        %v2063 = vunpack.c.l.b16 %v2031
        %v2064 = vunpack.c.l.b16 %v2032
        %v2065 = vunpack.c.l.b16 %v2033
        %v2066 = vunpack.c.l.b16 %v2034
        %v2067 = vunpack.c.l.b16 %v2035
        %v2068 = vunpack.c.l.b16 %v2036
        %v2069 = vunpack.c.l.b16 %v2037
        %v2070 = vunpack.c.l.b16 %v2038
        %v2071 = vunpack.c.l.b16 %v2039
        %v2072 = vunpack.c.l.b16 %v2040
        %v2073 = vunpack.c.l.b16 %v2041
        %v2074 = vunpack.c.l.b16 %v2042
        %v2075 = vunpack.c.l.b16 %v2043
        %v2076 = vunpack.c.l.b16 %v2044
        %v2077 = vpack.c.b16 %v2062, %v2061
        %v2078 = vpack.c.b16 %v2064, %v2063
        %v2079 = vpack.c.b16 %v2066, %v2065
        %v2080 = vpack.c.b16 %v2068, %v2067
        %v2081 = vpack.c.b16 %v2070, %v2069
        %v2082 = vpack.c.b16 %v2072, %v2071
        %v2083 = vpack.c.b16 %v2074, %v2073
        %v2084 = vpack.c.b16 %v2076, %v2075
        %2093 = vmatpush.bf16.msra.mxu0 %v2084
        %2094 = vmatpush.bf16.msra.mxu0 %v2083
        %2095 = vmatpush.bf16.msra.mxu0 %v2082
        %2096 = vmatpush.bf16.msra.mxu0 %v2081
        %2097 = vmatpush.bf16.msra.mxu0 %v2080
        %2098 = vmatpush.bf16.msra.mxu0 %v2079
        %2099 = vmatpush.bf16.msra.mxu0 %v2078
        %2100 = vmatpush.bf16.msra.mxu0 %v2077
        %2101 = vmatmul.bf16.gmra.mxu0 %v2027
        %v2102 = vpop.f32.mrf.mxu0
        %v2103 = vadd.f32 0.0, %v2102
        %v2104 = vpop.f32.mrf.mxu0
        %v2105 = vadd.f32 0.0, %v2104
        %2106 = vdwg.mxu0
        %v2107 = vadd.f32 %v2001, %v2103
        %v2108 = vadd.f32 %v2002, %v2105
        %v2109 = vld [vmem:[%s3 + $0x78] sm:$0xf]
        %v2110 = vld [vmem:[%s3 + $0x7c] sm:$0xf]
        %v2113 = vunpack.c.l.b16 %v2109
        %v2114 = vunpack.c.l.b16 %v2110
        %v2115 = vpack.c.b16 %v2114, %v2113
        %v2117 = vsel %vm530, %v2115, 0
        %2119 = vmatpush.bf16.msra.mxu0 0
        %2120 = vmatpush.bf16.msra.mxu0 0
        %2121 = vmatpush.bf16.msra.mxu0 0
        %2122 = vmatpush.bf16.msra.mxu0 0
        %2123 = vmatpush.bf16.msra.mxu0 %v522
        %2124 = vmatpush.bf16.msra.mxu0 %v521
        %2125 = vmatpush.bf16.msra.mxu0 %v520
        %2126 = vmatpush.bf16.msra.mxu0 %v519
        %2127 = vmatmul.bf16.gmra.mxu0 %v2117
        %v2128 = vpop.f32.mrf.mxu0
        %v2129 = vadd.f32 0.0, %v2128
        %v2130 = vpop.f32.mrf.mxu0
        %v2131 = vadd.f32 0.0, %v2130
        %2132 = vdwg.mxu0
        %v2133 = vpack.c.bf16 %v2131, %v2129
        %s2134 = scalar_lea.vmem [#allocation2], 960
        %v2135 = vld [vmem:[%s2134] sm:$0xf]
        %v2136 = vld [vmem:[%s2134 + $0x4] sm:$0xf]
        %v2137 = vld [vmem:[%s2134 + $0x8] sm:$0xf]
        %v2138 = vld [vmem:[%s2134 + $0xc] sm:$0xf]
        %v2139 = vld [vmem:[%s2134 + $0x10] sm:$0xf]
        %v2140 = vld [vmem:[%s2134 + $0x14] sm:$0xf]
        %v2141 = vld [vmem:[%s2134 + $0x18] sm:$0xf]
        %v2142 = vld [vmem:[%s2134 + $0x1c] sm:$0xf]
        %v2143 = vld [vmem:[%s2134 + $0x20] sm:$0xf]
        %v2144 = vld [vmem:[%s2134 + $0x24] sm:$0xf]
        %v2145 = vld [vmem:[%s2134 + $0x28] sm:$0xf]
        %v2146 = vld [vmem:[%s2134 + $0x2c] sm:$0xf]
        %v2147 = vld [vmem:[%s2134 + $0x30] sm:$0xf]
        %v2148 = vld [vmem:[%s2134 + $0x34] sm:$0xf]
        %v2149 = vld [vmem:[%s2134 + $0x38] sm:$0xf]
        %v2150 = vld [vmem:[%s2134 + $0x3c] sm:$0xf]
        %v2167 = vunpack.c.l.b16 %v2135
        %v2168 = vunpack.c.l.b16 %v2136
        %v2169 = vunpack.c.l.b16 %v2137
        %v2170 = vunpack.c.l.b16 %v2138
        %v2171 = vunpack.c.l.b16 %v2139
        %v2172 = vunpack.c.l.b16 %v2140
        %v2173 = vunpack.c.l.b16 %v2141
        %v2174 = vunpack.c.l.b16 %v2142
        %v2175 = vunpack.c.l.b16 %v2143
        %v2176 = vunpack.c.l.b16 %v2144
        %v2177 = vunpack.c.l.b16 %v2145
        %v2178 = vunpack.c.l.b16 %v2146
        %v2179 = vunpack.c.l.b16 %v2147
        %v2180 = vunpack.c.l.b16 %v2148
        %v2181 = vunpack.c.l.b16 %v2149
        %v2182 = vunpack.c.l.b16 %v2150
        %v2183 = vpack.c.b16 %v2168, %v2167
        %v2184 = vpack.c.b16 %v2170, %v2169
        %v2185 = vpack.c.b16 %v2172, %v2171
        %v2186 = vpack.c.b16 %v2174, %v2173
        %v2187 = vpack.c.b16 %v2176, %v2175
        %v2188 = vpack.c.b16 %v2178, %v2177
        %v2189 = vpack.c.b16 %v2180, %v2179
        %v2190 = vpack.c.b16 %v2182, %v2181
        %2199 = vmatpush.bf16.msra.mxu0 %v2190
        %2200 = vmatpush.bf16.msra.mxu0 %v2189
        %2201 = vmatpush.bf16.msra.mxu0 %v2188
        %2202 = vmatpush.bf16.msra.mxu0 %v2187
        %2203 = vmatpush.bf16.msra.mxu0 %v2186
        %2204 = vmatpush.bf16.msra.mxu0 %v2185
        %2205 = vmatpush.bf16.msra.mxu0 %v2184
        %2206 = vmatpush.bf16.msra.mxu0 %v2183
        %2207 = vmatmul.bf16.gmra.mxu0 %v2133
        %v2208 = vpop.f32.mrf.mxu0
        %v2209 = vadd.f32 0.0, %v2208
        %v2210 = vpop.f32.mrf.mxu0
        %v2211 = vadd.f32 0.0, %v2210
        %2212 = vdwg.mxu0
        %v2213 = vadd.f32 %v2107, %v2209
        %v2214 = vadd.f32 %v2108, %v2211
        %v2215 = vld [vmem:[%s5] sm:$0x1]
        %v2217 = vperm.slane %v2215, 0
        %v2219 = vadd.f32 %v2213, %v2217
        %v2220 = vadd.f32 %v2214, %v2217
        %vm2221 = vcmp.ge.f32.partialorder %v2219, 0.0
        %vm2222 = vcmp.ge.f32.partialorder %v2220, 0.0
        %v2223 = vmul.f32 %v2219, 0.2
        %v2224 = vmul.f32 %v2220, 0.2
        %v2225 = vsel %vm2221, %v2219, %v2223
        %v2226 = vsel %vm2222, %v2220, %v2224
        %v2227 = vpack.c.bf16 %v2226, %v2225
        %v2228 = vld [vmem:[%s6] sm:$0xf]
        %v2229 = vld [vmem:[%s6 + $0x4] sm:$0xf]
        %v2232 = vunpack.c.l.b16 %v2228
        %v2233 = vunpack.c.l.b16 %v2229
        %v2234 = vpack.c.b16 %v2233, %v2232
        %vm2235 = vcmask 130048
        %v2237 = vsel %vm2235, %v2234, 0
        %2239 = vmatpush.bf16.msra.mxu0 0
        %2240 = vmatpush.bf16.msra.mxu0 0
        %2241 = vmatpush.bf16.msra.mxu0 0
        %2242 = vmatpush.bf16.msra.mxu0 0
        %2243 = vmatpush.bf16.msra.mxu0 0
        %2244 = vmatpush.bf16.msra.mxu0 0
        %2245 = vmatpush.bf16.msra.mxu0 0
        %2246 = vmatpush.bf16.msra.mxu0 %v2227
        %2247 = vmatmul.bf16.gmra.mxu0 %v2237
        %v2248 = vpop.f32.mrf.mxu0
        %v2249 = vadd.f32 0.0, %v2248
        %v2250 = vpop.f32.mrf.mxu0
        %v2251 = vadd.f32 0.0, %v2250
        %2252 = vdwg.mxu0
        %v2253 = vpack.c.bf16 %v2251, %v2249
        %v2254 = vld [vmem:[#allocation5] sm:$0xf]
        %v2255 = vld [vmem:[#allocation5 + $0x4] sm:$0xf]
        %v2256 = vld [vmem:[#allocation5 + $0x8] sm:$0xf]
        %v2257 = vld [vmem:[#allocation5 + $0xc] sm:$0xf]
        %v2258 = vld [vmem:[#allocation5 + $0x10] sm:$0xf]
        %v2259 = vld [vmem:[#allocation5 + $0x14] sm:$0xf]
        %v2260 = vld [vmem:[#allocation5 + $0x18] sm:$0xf]
        %v2261 = vld [vmem:[#allocation5 + $0x1c] sm:$0xf]
        %v2262 = vld [vmem:[#allocation5 + $0x20] sm:$0xf]
        %v2263 = vld [vmem:[#allocation5 + $0x24] sm:$0xf]
        %v2264 = vld [vmem:[#allocation5 + $0x28] sm:$0xf]
        %v2265 = vld [vmem:[#allocation5 + $0x2c] sm:$0xf]
        %v2266 = vld [vmem:[#allocation5 + $0x30] sm:$0xf]
        %v2267 = vld [vmem:[#allocation5 + $0x34] sm:$0xf]
        %v2268 = vld [vmem:[#allocation5 + $0x38] sm:$0xf]
        %v2269 = vld [vmem:[#allocation5 + $0x3c] sm:$0xf]
        %v2270 = vld [vmem:[%s6 + $0x8] sm:$0xf]
        %v2271 = vld [vmem:[%s6 + $0xc] sm:$0xf]
        %v2274 = vunpack.c.l.b16 %v2270
        %v2275 = vunpack.c.l.b16 %v2271
        %v2276 = vpack.c.b16 %v2275, %v2274
        %v2278 = vsel %vm2235, %v2276, 0
        %2280 = vmatpush.bf16.msra.mxu0 0
        %2281 = vmatpush.bf16.msra.mxu0 0
        %2282 = vmatpush.bf16.msra.mxu0 0
        %2283 = vmatpush.bf16.msra.mxu0 0
        %2284 = vmatpush.bf16.msra.mxu0 0
        %2285 = vmatpush.bf16.msra.mxu0 0
        %2286 = vmatpush.bf16.msra.mxu0 0
        %2287 = vmatpush.bf16.msra.mxu0 %v2227
        %2288 = vmatmul.bf16.gmra.mxu0 %v2278
        %v2289 = vpop.f32.mrf.mxu0
        %v2290 = vadd.f32 0.0, %v2289
        %v2291 = vpop.f32.mrf.mxu0
        %v2292 = vadd.f32 0.0, %v2291
        %2293 = vdwg.mxu0
        %v2294 = vpack.c.bf16 %v2292, %v2290
        %s2295 = scalar_lea.vmem [#allocation5], 64
        %v2296 = vld [vmem:[%s2295] sm:$0xf]
        %v2297 = vld [vmem:[%s2295 + $0x4] sm:$0xf]
        %v2298 = vld [vmem:[%s2295 + $0x8] sm:$0xf]
        %v2299 = vld [vmem:[%s2295 + $0xc] sm:$0xf]
        %v2300 = vld [vmem:[%s2295 + $0x10] sm:$0xf]
        %v2301 = vld [vmem:[%s2295 + $0x14] sm:$0xf]
        %v2302 = vld [vmem:[%s2295 + $0x18] sm:$0xf]
        %v2303 = vld [vmem:[%s2295 + $0x1c] sm:$0xf]
        %v2304 = vld [vmem:[%s2295 + $0x20] sm:$0xf]
        %v2305 = vld [vmem:[%s2295 + $0x24] sm:$0xf]
        %v2306 = vld [vmem:[%s2295 + $0x28] sm:$0xf]
        %v2307 = vld [vmem:[%s2295 + $0x2c] sm:$0xf]
        %v2308 = vld [vmem:[%s2295 + $0x30] sm:$0xf]
        %v2309 = vld [vmem:[%s2295 + $0x34] sm:$0xf]
        %v2310 = vld [vmem:[%s2295 + $0x38] sm:$0xf]
        %v2311 = vld [vmem:[%s2295 + $0x3c] sm:$0xf]
        %v2328 = vunpack.c.l.b16 %v2296
        %v2329 = vunpack.c.l.b16 %v2297
        %v2330 = vunpack.c.l.b16 %v2298
        %v2331 = vunpack.c.l.b16 %v2299
        %v2332 = vunpack.c.l.b16 %v2300
        %v2333 = vunpack.c.l.b16 %v2301
        %v2334 = vunpack.c.l.b16 %v2302
        %v2335 = vunpack.c.l.b16 %v2303
        %v2336 = vunpack.c.l.b16 %v2304
        %v2337 = vunpack.c.l.b16 %v2305
        %v2338 = vunpack.c.l.b16 %v2306
        %v2339 = vunpack.c.l.b16 %v2307
        %v2340 = vunpack.c.l.b16 %v2308
        %v2341 = vunpack.c.l.b16 %v2309
        %v2342 = vunpack.c.l.b16 %v2310
        %v2343 = vunpack.c.l.b16 %v2311
        %v2344 = vpack.c.b16 %v2329, %v2328
        %v2345 = vpack.c.b16 %v2331, %v2330
        %v2346 = vpack.c.b16 %v2333, %v2332
        %v2347 = vpack.c.b16 %v2335, %v2334
        %v2348 = vpack.c.b16 %v2337, %v2336
        %v2349 = vpack.c.b16 %v2339, %v2338
        %v2350 = vpack.c.b16 %v2341, %v2340
        %v2351 = vpack.c.b16 %v2343, %v2342
        %2360 = vmatpush.bf16.msra.mxu0 %v2351
        %2361 = vmatpush.bf16.msra.mxu0 %v2350
        %2362 = vmatpush.bf16.msra.mxu0 %v2349
        %2363 = vmatpush.bf16.msra.mxu0 %v2348
        %2364 = vmatpush.bf16.msra.mxu0 %v2347
        %2365 = vmatpush.bf16.msra.mxu0 %v2346
        %2366 = vmatpush.bf16.msra.mxu0 %v2345
        %2367 = vmatpush.bf16.msra.mxu0 %v2344
        %2368 = vmatmul.bf16.gmra.mxu0 %v2294
        %v2369 = vpop.f32.mrf.mxu0
        %v2370 = vadd.f32 0.0, %v2369
        %v2371 = vpop.f32.mrf.mxu0
        %v2372 = vadd.f32 0.0, %v2371
        %2373 = vdwg.mxu0
        %v2390 = vunpack.c.l.b16 %v2254
        %v2391 = vunpack.c.l.b16 %v2255
        %v2392 = vunpack.c.l.b16 %v2256
        %v2393 = vunpack.c.l.b16 %v2257
        %v2394 = vunpack.c.l.b16 %v2258
        %v2395 = vunpack.c.l.b16 %v2259
        %v2396 = vunpack.c.l.b16 %v2260
        %v2397 = vunpack.c.l.b16 %v2261
        %v2398 = vunpack.c.l.b16 %v2262
        %v2399 = vunpack.c.l.b16 %v2263
        %v2400 = vunpack.c.l.b16 %v2264
        %v2401 = vunpack.c.l.b16 %v2265
        %v2402 = vunpack.c.l.b16 %v2266
        %v2403 = vunpack.c.l.b16 %v2267
        %v2404 = vunpack.c.l.b16 %v2268
        %v2405 = vunpack.c.l.b16 %v2269
        %v2406 = vpack.c.b16 %v2391, %v2390
        %v2407 = vpack.c.b16 %v2393, %v2392
        %v2408 = vpack.c.b16 %v2395, %v2394
        %v2409 = vpack.c.b16 %v2397, %v2396
        %v2410 = vpack.c.b16 %v2399, %v2398
        %v2411 = vpack.c.b16 %v2401, %v2400
        %v2412 = vpack.c.b16 %v2403, %v2402
        %v2413 = vpack.c.b16 %v2405, %v2404
        %2422 = vmatpush.bf16.msra.mxu0 %v2413
        %2423 = vmatpush.bf16.msra.mxu0 %v2412
        %2424 = vmatpush.bf16.msra.mxu0 %v2411
        %2425 = vmatpush.bf16.msra.mxu0 %v2410
        %2426 = vmatpush.bf16.msra.mxu0 %v2409
        %2427 = vmatpush.bf16.msra.mxu0 %v2408
        %2428 = vmatpush.bf16.msra.mxu0 %v2407
        %2429 = vmatpush.bf16.msra.mxu0 %v2406
        %2430 = vmatmul.bf16.gmra.mxu0 %v2253
        %v2431 = vpop.f32.mrf.mxu0
        %v2432 = vadd.f32 %v2370, %v2431
        %v2433 = vpop.f32.mrf.mxu0
        %v2434 = vadd.f32 %v2372, %v2433
        %2435 = vdwg.mxu0
        %v2436 = vld [vmem:[%s6 + $0x10] sm:$0xf]
        %v2437 = vld [vmem:[%s6 + $0x14] sm:$0xf]
        %v2440 = vunpack.c.l.b16 %v2436
        %v2441 = vunpack.c.l.b16 %v2437
        %v2442 = vpack.c.b16 %v2441, %v2440
        %v2444 = vsel %vm2235, %v2442, 0
        %2446 = vmatpush.bf16.msra.mxu0 0
        %2447 = vmatpush.bf16.msra.mxu0 0
        %2448 = vmatpush.bf16.msra.mxu0 0
        %2449 = vmatpush.bf16.msra.mxu0 0
        %2450 = vmatpush.bf16.msra.mxu0 0
        %2451 = vmatpush.bf16.msra.mxu0 0
        %2452 = vmatpush.bf16.msra.mxu0 0
        %2453 = vmatpush.bf16.msra.mxu0 %v2227
        %2454 = vmatmul.bf16.gmra.mxu0 %v2444
        %v2455 = vpop.f32.mrf.mxu0
        %v2456 = vadd.f32 0.0, %v2455
        %v2457 = vpop.f32.mrf.mxu0
        %v2458 = vadd.f32 0.0, %v2457
        %2459 = vdwg.mxu0
        %v2460 = vpack.c.bf16 %v2458, %v2456
        %s2461 = scalar_lea.vmem [#allocation5], 128
        %v2462 = vld [vmem:[%s2461] sm:$0xf]
        %v2463 = vld [vmem:[%s2461 + $0x4] sm:$0xf]
        %v2464 = vld [vmem:[%s2461 + $0x8] sm:$0xf]
        %v2465 = vld [vmem:[%s2461 + $0xc] sm:$0xf]
        %v2466 = vld [vmem:[%s2461 + $0x10] sm:$0xf]
        %v2467 = vld [vmem:[%s2461 + $0x14] sm:$0xf]
        %v2468 = vld [vmem:[%s2461 + $0x18] sm:$0xf]
        %v2469 = vld [vmem:[%s2461 + $0x1c] sm:$0xf]
        %v2470 = vld [vmem:[%s2461 + $0x20] sm:$0xf]
        %v2471 = vld [vmem:[%s2461 + $0x24] sm:$0xf]
        %v2472 = vld [vmem:[%s2461 + $0x28] sm:$0xf]
        %v2473 = vld [vmem:[%s2461 + $0x2c] sm:$0xf]
        %v2474 = vld [vmem:[%s2461 + $0x30] sm:$0xf]
        %v2475 = vld [vmem:[%s2461 + $0x34] sm:$0xf]
        %v2476 = vld [vmem:[%s2461 + $0x38] sm:$0xf]
        %v2477 = vld [vmem:[%s2461 + $0x3c] sm:$0xf]
        %v2494 = vunpack.c.l.b16 %v2462
        %v2495 = vunpack.c.l.b16 %v2463
        %v2496 = vunpack.c.l.b16 %v2464
        %v2497 = vunpack.c.l.b16 %v2465
        %v2498 = vunpack.c.l.b16 %v2466
        %v2499 = vunpack.c.l.b16 %v2467
        %v2500 = vunpack.c.l.b16 %v2468
        %v2501 = vunpack.c.l.b16 %v2469
        %v2502 = vunpack.c.l.b16 %v2470
        %v2503 = vunpack.c.l.b16 %v2471
        %v2504 = vunpack.c.l.b16 %v2472
        %v2505 = vunpack.c.l.b16 %v2473
        %v2506 = vunpack.c.l.b16 %v2474
        %v2507 = vunpack.c.l.b16 %v2475
        %v2508 = vunpack.c.l.b16 %v2476
        %v2509 = vunpack.c.l.b16 %v2477
        %v2510 = vpack.c.b16 %v2495, %v2494
        %v2511 = vpack.c.b16 %v2497, %v2496
        %v2512 = vpack.c.b16 %v2499, %v2498
        %v2513 = vpack.c.b16 %v2501, %v2500
        %v2514 = vpack.c.b16 %v2503, %v2502
        %v2515 = vpack.c.b16 %v2505, %v2504
        %v2516 = vpack.c.b16 %v2507, %v2506
        %v2517 = vpack.c.b16 %v2509, %v2508
        %2526 = vmatpush.bf16.msra.mxu0 %v2517
        %2527 = vmatpush.bf16.msra.mxu0 %v2516
        %2528 = vmatpush.bf16.msra.mxu0 %v2515
        %2529 = vmatpush.bf16.msra.mxu0 %v2514
        %2530 = vmatpush.bf16.msra.mxu0 %v2513
        %2531 = vmatpush.bf16.msra.mxu0 %v2512
        %2532 = vmatpush.bf16.msra.mxu0 %v2511
        %2533 = vmatpush.bf16.msra.mxu0 %v2510
        %2534 = vmatmul.bf16.gmra.mxu0 %v2460
        %v2535 = vpop.f32.mrf.mxu0
        %v2536 = vadd.f32 0.0, %v2535
        %v2537 = vpop.f32.mrf.mxu0
        %v2538 = vadd.f32 0.0, %v2537
        %2539 = vdwg.mxu0
        %v2540 = vadd.f32 %v2432, %v2536
        %v2541 = vadd.f32 %v2434, %v2538
        %v2542 = vld [vmem:[%s6 + $0x18] sm:$0xf]
        %v2543 = vld [vmem:[%s6 + $0x1c] sm:$0xf]
        %v2546 = vunpack.c.l.b16 %v2542
        %v2547 = vunpack.c.l.b16 %v2543
        %v2548 = vpack.c.b16 %v2547, %v2546
        %v2550 = vsel %vm2235, %v2548, 0
        %2552 = vmatpush.bf16.msra.mxu0 0
        %2553 = vmatpush.bf16.msra.mxu0 0
        %2554 = vmatpush.bf16.msra.mxu0 0
        %2555 = vmatpush.bf16.msra.mxu0 0
        %2556 = vmatpush.bf16.msra.mxu0 0
        %2557 = vmatpush.bf16.msra.mxu0 0
        %2558 = vmatpush.bf16.msra.mxu0 0
        %2559 = vmatpush.bf16.msra.mxu0 %v2227
        %2560 = vmatmul.bf16.gmra.mxu0 %v2550
        %v2561 = vpop.f32.mrf.mxu0
        %v2562 = vadd.f32 0.0, %v2561
        %v2563 = vpop.f32.mrf.mxu0
        %v2564 = vadd.f32 0.0, %v2563
        %2565 = vdwg.mxu0
        %v2566 = vpack.c.bf16 %v2564, %v2562
        %s2567 = scalar_lea.vmem [#allocation5], 192
        %v2568 = vld [vmem:[%s2567] sm:$0xf]
        %v2569 = vld [vmem:[%s2567 + $0x4] sm:$0xf]
        %v2570 = vld [vmem:[%s2567 + $0x8] sm:$0xf]
        %v2571 = vld [vmem:[%s2567 + $0xc] sm:$0xf]
        %v2572 = vld [vmem:[%s2567 + $0x10] sm:$0xf]
        %v2573 = vld [vmem:[%s2567 + $0x14] sm:$0xf]
        %v2574 = vld [vmem:[%s2567 + $0x18] sm:$0xf]
        %v2575 = vld [vmem:[%s2567 + $0x1c] sm:$0xf]
        %v2576 = vld [vmem:[%s2567 + $0x20] sm:$0xf]
        %v2577 = vld [vmem:[%s2567 + $0x24] sm:$0xf]
        %v2578 = vld [vmem:[%s2567 + $0x28] sm:$0xf]
        %v2579 = vld [vmem:[%s2567 + $0x2c] sm:$0xf]
        %v2580 = vld [vmem:[%s2567 + $0x30] sm:$0xf]
        %v2581 = vld [vmem:[%s2567 + $0x34] sm:$0xf]
        %v2582 = vld [vmem:[%s2567 + $0x38] sm:$0xf]
        %v2583 = vld [vmem:[%s2567 + $0x3c] sm:$0xf]
        %v2600 = vunpack.c.l.b16 %v2568
        %v2601 = vunpack.c.l.b16 %v2569
        %v2602 = vunpack.c.l.b16 %v2570
        %v2603 = vunpack.c.l.b16 %v2571
        %v2604 = vunpack.c.l.b16 %v2572
        %v2605 = vunpack.c.l.b16 %v2573
        %v2606 = vunpack.c.l.b16 %v2574
        %v2607 = vunpack.c.l.b16 %v2575
        %v2608 = vunpack.c.l.b16 %v2576
        %v2609 = vunpack.c.l.b16 %v2577
        %v2610 = vunpack.c.l.b16 %v2578
        %v2611 = vunpack.c.l.b16 %v2579
        %v2612 = vunpack.c.l.b16 %v2580
        %v2613 = vunpack.c.l.b16 %v2581
        %v2614 = vunpack.c.l.b16 %v2582
        %v2615 = vunpack.c.l.b16 %v2583
        %v2616 = vpack.c.b16 %v2601, %v2600
        %v2617 = vpack.c.b16 %v2603, %v2602
        %v2618 = vpack.c.b16 %v2605, %v2604
        %v2619 = vpack.c.b16 %v2607, %v2606
        %v2620 = vpack.c.b16 %v2609, %v2608
        %v2621 = vpack.c.b16 %v2611, %v2610
        %v2622 = vpack.c.b16 %v2613, %v2612
        %v2623 = vpack.c.b16 %v2615, %v2614
        %2632 = vmatpush.bf16.msra.mxu0 %v2623
        %2633 = vmatpush.bf16.msra.mxu0 %v2622
        %2634 = vmatpush.bf16.msra.mxu0 %v2621
        %2635 = vmatpush.bf16.msra.mxu0 %v2620
        %2636 = vmatpush.bf16.msra.mxu0 %v2619
        %2637 = vmatpush.bf16.msra.mxu0 %v2618
        %2638 = vmatpush.bf16.msra.mxu0 %v2617
        %2639 = vmatpush.bf16.msra.mxu0 %v2616
        %2640 = vmatmul.bf16.gmra.mxu0 %v2566
        %v2641 = vpop.f32.mrf.mxu0
        %v2642 = vadd.f32 0.0, %v2641
        %v2643 = vpop.f32.mrf.mxu0
        %v2644 = vadd.f32 0.0, %v2643
        %2645 = vdwg.mxu0
        %v2646 = vadd.f32 %v2540, %v2642
        %v2647 = vadd.f32 %v2541, %v2644
        %v2648 = vld [vmem:[%s6 + $0x20] sm:$0xf]
        %v2649 = vld [vmem:[%s6 + $0x24] sm:$0xf]
        %v2652 = vunpack.c.l.b16 %v2648
        %v2653 = vunpack.c.l.b16 %v2649
        %v2654 = vpack.c.b16 %v2653, %v2652
        %v2656 = vsel %vm2235, %v2654, 0
        %2658 = vmatpush.bf16.msra.mxu0 0
        %2659 = vmatpush.bf16.msra.mxu0 0
        %2660 = vmatpush.bf16.msra.mxu0 0
        %2661 = vmatpush.bf16.msra.mxu0 0
        %2662 = vmatpush.bf16.msra.mxu0 0
        %2663 = vmatpush.bf16.msra.mxu0 0
        %2664 = vmatpush.bf16.msra.mxu0 0
        %2665 = vmatpush.bf16.msra.mxu0 %v2227
        %2666 = vmatmul.bf16.gmra.mxu0 %v2656
        %v2667 = vpop.f32.mrf.mxu0
        %v2668 = vadd.f32 0.0, %v2667
        %v2669 = vpop.f32.mrf.mxu0
        %v2670 = vadd.f32 0.0, %v2669
        %2671 = vdwg.mxu0
        %v2672 = vpack.c.bf16 %v2670, %v2668
        %s2673 = scalar_lea.vmem [#allocation5], 256
        %v2674 = vld [vmem:[%s2673] sm:$0xf]
        %v2675 = vld [vmem:[%s2673 + $0x4] sm:$0xf]
        %v2676 = vld [vmem:[%s2673 + $0x8] sm:$0xf]
        %v2677 = vld [vmem:[%s2673 + $0xc] sm:$0xf]
        %v2678 = vld [vmem:[%s2673 + $0x10] sm:$0xf]
        %v2679 = vld [vmem:[%s2673 + $0x14] sm:$0xf]
        %v2680 = vld [vmem:[%s2673 + $0x18] sm:$0xf]
        %v2681 = vld [vmem:[%s2673 + $0x1c] sm:$0xf]
        %v2682 = vld [vmem:[%s2673 + $0x20] sm:$0xf]
        %v2683 = vld [vmem:[%s2673 + $0x24] sm:$0xf]
        %v2684 = vld [vmem:[%s2673 + $0x28] sm:$0xf]
        %v2685 = vld [vmem:[%s2673 + $0x2c] sm:$0xf]
        %v2686 = vld [vmem:[%s2673 + $0x30] sm:$0xf]
        %v2687 = vld [vmem:[%s2673 + $0x34] sm:$0xf]
        %v2688 = vld [vmem:[%s2673 + $0x38] sm:$0xf]
        %v2689 = vld [vmem:[%s2673 + $0x3c] sm:$0xf]
        %v2706 = vunpack.c.l.b16 %v2674
        %v2707 = vunpack.c.l.b16 %v2675
        %v2708 = vunpack.c.l.b16 %v2676
        %v2709 = vunpack.c.l.b16 %v2677
        %v2710 = vunpack.c.l.b16 %v2678
        %v2711 = vunpack.c.l.b16 %v2679
        %v2712 = vunpack.c.l.b16 %v2680
        %v2713 = vunpack.c.l.b16 %v2681
        %v2714 = vunpack.c.l.b16 %v2682
        %v2715 = vunpack.c.l.b16 %v2683
        %v2716 = vunpack.c.l.b16 %v2684
        %v2717 = vunpack.c.l.b16 %v2685
        %v2718 = vunpack.c.l.b16 %v2686
        %v2719 = vunpack.c.l.b16 %v2687
        %v2720 = vunpack.c.l.b16 %v2688
        %v2721 = vunpack.c.l.b16 %v2689
        %v2722 = vpack.c.b16 %v2707, %v2706
        %v2723 = vpack.c.b16 %v2709, %v2708
        %v2724 = vpack.c.b16 %v2711, %v2710
        %v2725 = vpack.c.b16 %v2713, %v2712
        %v2726 = vpack.c.b16 %v2715, %v2714
        %v2727 = vpack.c.b16 %v2717, %v2716
        %v2728 = vpack.c.b16 %v2719, %v2718
        %v2729 = vpack.c.b16 %v2721, %v2720
        %2738 = vmatpush.bf16.msra.mxu0 %v2729
        %2739 = vmatpush.bf16.msra.mxu0 %v2728
        %2740 = vmatpush.bf16.msra.mxu0 %v2727
        %2741 = vmatpush.bf16.msra.mxu0 %v2726
        %2742 = vmatpush.bf16.msra.mxu0 %v2725
        %2743 = vmatpush.bf16.msra.mxu0 %v2724
        %2744 = vmatpush.bf16.msra.mxu0 %v2723
        %2745 = vmatpush.bf16.msra.mxu0 %v2722
        %2746 = vmatmul.bf16.gmra.mxu0 %v2672
        %v2747 = vpop.f32.mrf.mxu0
        %v2748 = vadd.f32 0.0, %v2747
        %v2749 = vpop.f32.mrf.mxu0
        %v2750 = vadd.f32 0.0, %v2749
        %2751 = vdwg.mxu0
        %v2752 = vadd.f32 %v2646, %v2748
        %v2753 = vadd.f32 %v2647, %v2750
        %v2754 = vld [vmem:[%s6 + $0x28] sm:$0xf]
        %v2755 = vld [vmem:[%s6 + $0x2c] sm:$0xf]
        %v2758 = vunpack.c.l.b16 %v2754
        %v2759 = vunpack.c.l.b16 %v2755
        %v2760 = vpack.c.b16 %v2759, %v2758
        %v2762 = vsel %vm2235, %v2760, 0
        %2764 = vmatpush.bf16.msra.mxu0 0
        %2765 = vmatpush.bf16.msra.mxu0 0
        %2766 = vmatpush.bf16.msra.mxu0 0
        %2767 = vmatpush.bf16.msra.mxu0 0
        %2768 = vmatpush.bf16.msra.mxu0 0
        %2769 = vmatpush.bf16.msra.mxu0 0
        %2770 = vmatpush.bf16.msra.mxu0 0
        %2771 = vmatpush.bf16.msra.mxu0 %v2227
        %2772 = vmatmul.bf16.gmra.mxu0 %v2762
        %v2773 = vpop.f32.mrf.mxu0
        %v2774 = vadd.f32 0.0, %v2773
        %v2775 = vpop.f32.mrf.mxu0
        %v2776 = vadd.f32 0.0, %v2775
        %2777 = vdwg.mxu0
        %v2778 = vpack.c.bf16 %v2776, %v2774
        %s2779 = scalar_lea.vmem [#allocation5], 320
        %v2780 = vld [vmem:[%s2779] sm:$0xf]
        %v2781 = vld [vmem:[%s2779 + $0x4] sm:$0xf]
        %v2782 = vld [vmem:[%s2779 + $0x8] sm:$0xf]
        %v2783 = vld [vmem:[%s2779 + $0xc] sm:$0xf]
        %v2784 = vld [vmem:[%s2779 + $0x10] sm:$0xf]
        %v2785 = vld [vmem:[%s2779 + $0x14] sm:$0xf]
        %v2786 = vld [vmem:[%s2779 + $0x18] sm:$0xf]
        %v2787 = vld [vmem:[%s2779 + $0x1c] sm:$0xf]
        %v2788 = vld [vmem:[%s2779 + $0x20] sm:$0xf]
        %v2789 = vld [vmem:[%s2779 + $0x24] sm:$0xf]
        %v2790 = vld [vmem:[%s2779 + $0x28] sm:$0xf]
        %v2791 = vld [vmem:[%s2779 + $0x2c] sm:$0xf]
        %v2792 = vld [vmem:[%s2779 + $0x30] sm:$0xf]
        %v2793 = vld [vmem:[%s2779 + $0x34] sm:$0xf]
        %v2794 = vld [vmem:[%s2779 + $0x38] sm:$0xf]
        %v2795 = vld [vmem:[%s2779 + $0x3c] sm:$0xf]
        %v2812 = vunpack.c.l.b16 %v2780
        %v2813 = vunpack.c.l.b16 %v2781
        %v2814 = vunpack.c.l.b16 %v2782
        %v2815 = vunpack.c.l.b16 %v2783
        %v2816 = vunpack.c.l.b16 %v2784
        %v2817 = vunpack.c.l.b16 %v2785
        %v2818 = vunpack.c.l.b16 %v2786
        %v2819 = vunpack.c.l.b16 %v2787
        %v2820 = vunpack.c.l.b16 %v2788
        %v2821 = vunpack.c.l.b16 %v2789
        %v2822 = vunpack.c.l.b16 %v2790
        %v2823 = vunpack.c.l.b16 %v2791
        %v2824 = vunpack.c.l.b16 %v2792
        %v2825 = vunpack.c.l.b16 %v2793
        %v2826 = vunpack.c.l.b16 %v2794
        %v2827 = vunpack.c.l.b16 %v2795
        %v2828 = vpack.c.b16 %v2813, %v2812
        %v2829 = vpack.c.b16 %v2815, %v2814
        %v2830 = vpack.c.b16 %v2817, %v2816
        %v2831 = vpack.c.b16 %v2819, %v2818
        %v2832 = vpack.c.b16 %v2821, %v2820
        %v2833 = vpack.c.b16 %v2823, %v2822
        %v2834 = vpack.c.b16 %v2825, %v2824
        %v2835 = vpack.c.b16 %v2827, %v2826
        %2844 = vmatpush.bf16.msra.mxu0 %v2835
        %2845 = vmatpush.bf16.msra.mxu0 %v2834
        %2846 = vmatpush.bf16.msra.mxu0 %v2833
        %2847 = vmatpush.bf16.msra.mxu0 %v2832
        %2848 = vmatpush.bf16.msra.mxu0 %v2831
        %2849 = vmatpush.bf16.msra.mxu0 %v2830
        %2850 = vmatpush.bf16.msra.mxu0 %v2829
        %2851 = vmatpush.bf16.msra.mxu0 %v2828
        %2852 = vmatmul.bf16.gmra.mxu0 %v2778
        %v2853 = vpop.f32.mrf.mxu0
        %v2854 = vadd.f32 0.0, %v2853
        %v2855 = vpop.f32.mrf.mxu0
        %v2856 = vadd.f32 0.0, %v2855
        %2857 = vdwg.mxu0
        %v2858 = vadd.f32 %v2752, %v2854
        %v2859 = vadd.f32 %v2753, %v2856
        %v2860 = vld [vmem:[%s6 + $0x30] sm:$0xf]
        %v2861 = vld [vmem:[%s6 + $0x34] sm:$0xf]
        %v2864 = vunpack.c.l.b16 %v2860
        %v2865 = vunpack.c.l.b16 %v2861
        %v2866 = vpack.c.b16 %v2865, %v2864
        %v2868 = vsel %vm2235, %v2866, 0
        %2870 = vmatpush.bf16.msra.mxu0 0
        %2871 = vmatpush.bf16.msra.mxu0 0
        %2872 = vmatpush.bf16.msra.mxu0 0
        %2873 = vmatpush.bf16.msra.mxu0 0
        %2874 = vmatpush.bf16.msra.mxu0 0
        %2875 = vmatpush.bf16.msra.mxu0 0
        %2876 = vmatpush.bf16.msra.mxu0 0
        %2877 = vmatpush.bf16.msra.mxu0 %v2227
        %2878 = vmatmul.bf16.gmra.mxu0 %v2868
        %v2879 = vpop.f32.mrf.mxu0
        %v2880 = vadd.f32 0.0, %v2879
        %v2881 = vpop.f32.mrf.mxu0
        %v2882 = vadd.f32 0.0, %v2881
        %2883 = vdwg.mxu0
        %v2884 = vpack.c.bf16 %v2882, %v2880
        %s2885 = scalar_lea.vmem [#allocation5], 384
        %v2886 = vld [vmem:[%s2885] sm:$0xf]
        %v2887 = vld [vmem:[%s2885 + $0x4] sm:$0xf]
        %v2888 = vld [vmem:[%s2885 + $0x8] sm:$0xf]
        %v2889 = vld [vmem:[%s2885 + $0xc] sm:$0xf]
        %v2890 = vld [vmem:[%s2885 + $0x10] sm:$0xf]
        %v2891 = vld [vmem:[%s2885 + $0x14] sm:$0xf]
        %v2892 = vld [vmem:[%s2885 + $0x18] sm:$0xf]
        %v2893 = vld [vmem:[%s2885 + $0x1c] sm:$0xf]
        %v2894 = vld [vmem:[%s2885 + $0x20] sm:$0xf]
        %v2895 = vld [vmem:[%s2885 + $0x24] sm:$0xf]
        %v2896 = vld [vmem:[%s2885 + $0x28] sm:$0xf]
        %v2897 = vld [vmem:[%s2885 + $0x2c] sm:$0xf]
        %v2898 = vld [vmem:[%s2885 + $0x30] sm:$0xf]
        %v2899 = vld [vmem:[%s2885 + $0x34] sm:$0xf]
        %v2900 = vld [vmem:[%s2885 + $0x38] sm:$0xf]
        %v2901 = vld [vmem:[%s2885 + $0x3c] sm:$0xf]
        %v2918 = vunpack.c.l.b16 %v2886
        %v2919 = vunpack.c.l.b16 %v2887
        %v2920 = vunpack.c.l.b16 %v2888
        %v2921 = vunpack.c.l.b16 %v2889
        %v2922 = vunpack.c.l.b16 %v2890
        %v2923 = vunpack.c.l.b16 %v2891
        %v2924 = vunpack.c.l.b16 %v2892
        %v2925 = vunpack.c.l.b16 %v2893
        %v2926 = vunpack.c.l.b16 %v2894
        %v2927 = vunpack.c.l.b16 %v2895
        %v2928 = vunpack.c.l.b16 %v2896
        %v2929 = vunpack.c.l.b16 %v2897
        %v2930 = vunpack.c.l.b16 %v2898
        %v2931 = vunpack.c.l.b16 %v2899
        %v2932 = vunpack.c.l.b16 %v2900
        %v2933 = vunpack.c.l.b16 %v2901
        %v2934 = vpack.c.b16 %v2919, %v2918
        %v2935 = vpack.c.b16 %v2921, %v2920
        %v2936 = vpack.c.b16 %v2923, %v2922
        %v2937 = vpack.c.b16 %v2925, %v2924
        %v2938 = vpack.c.b16 %v2927, %v2926
        %v2939 = vpack.c.b16 %v2929, %v2928
        %v2940 = vpack.c.b16 %v2931, %v2930
        %v2941 = vpack.c.b16 %v2933, %v2932
        %2950 = vmatpush.bf16.msra.mxu0 %v2941
        %2951 = vmatpush.bf16.msra.mxu0 %v2940
        %2952 = vmatpush.bf16.msra.mxu0 %v2939
        %2953 = vmatpush.bf16.msra.mxu0 %v2938
        %2954 = vmatpush.bf16.msra.mxu0 %v2937
        %2955 = vmatpush.bf16.msra.mxu0 %v2936
        %2956 = vmatpush.bf16.msra.mxu0 %v2935
        %2957 = vmatpush.bf16.msra.mxu0 %v2934
        %2958 = vmatmul.bf16.gmra.mxu0 %v2884
        %v2959 = vpop.f32.mrf.mxu0
        %v2960 = vadd.f32 0.0, %v2959
        %v2961 = vpop.f32.mrf.mxu0
        %v2962 = vadd.f32 0.0, %v2961
        %2963 = vdwg.mxu0
        %v2964 = vadd.f32 %v2858, %v2960
        %v2965 = vadd.f32 %v2859, %v2962
        %v2966 = vld [vmem:[%s6 + $0x38] sm:$0xf]
        %v2967 = vld [vmem:[%s6 + $0x3c] sm:$0xf]
        %v2970 = vunpack.c.l.b16 %v2966
        %v2971 = vunpack.c.l.b16 %v2967
        %v2972 = vpack.c.b16 %v2971, %v2970
        %v2974 = vsel %vm2235, %v2972, 0
        %2976 = vmatpush.bf16.msra.mxu0 0
        %2977 = vmatpush.bf16.msra.mxu0 0
        %2978 = vmatpush.bf16.msra.mxu0 0
        %2979 = vmatpush.bf16.msra.mxu0 0
        %2980 = vmatpush.bf16.msra.mxu0 0
        %2981 = vmatpush.bf16.msra.mxu0 0
        %2982 = vmatpush.bf16.msra.mxu0 0
        %2983 = vmatpush.bf16.msra.mxu0 %v2227
        %2984 = vmatmul.bf16.gmra.mxu0 %v2974
        %v2985 = vpop.f32.mrf.mxu0
        %v2986 = vadd.f32 0.0, %v2985
        %v2987 = vpop.f32.mrf.mxu0
        %v2988 = vadd.f32 0.0, %v2987
        %2989 = vdwg.mxu0
        %v2990 = vpack.c.bf16 %v2988, %v2986
        %s2991 = scalar_lea.vmem [#allocation5], 448
        %v2992 = vld [vmem:[%s2991] sm:$0xf]
        %v2993 = vld [vmem:[%s2991 + $0x4] sm:$0xf]
        %v2994 = vld [vmem:[%s2991 + $0x8] sm:$0xf]
        %v2995 = vld [vmem:[%s2991 + $0xc] sm:$0xf]
        %v2996 = vld [vmem:[%s2991 + $0x10] sm:$0xf]
        %v2997 = vld [vmem:[%s2991 + $0x14] sm:$0xf]
        %v2998 = vld [vmem:[%s2991 + $0x18] sm:$0xf]
        %v2999 = vld [vmem:[%s2991 + $0x1c] sm:$0xf]
        %v3000 = vld [vmem:[%s2991 + $0x20] sm:$0xf]
        %v3001 = vld [vmem:[%s2991 + $0x24] sm:$0xf]
        %v3002 = vld [vmem:[%s2991 + $0x28] sm:$0xf]
        %v3003 = vld [vmem:[%s2991 + $0x2c] sm:$0xf]
        %v3004 = vld [vmem:[%s2991 + $0x30] sm:$0xf]
        %v3005 = vld [vmem:[%s2991 + $0x34] sm:$0xf]
        %v3006 = vld [vmem:[%s2991 + $0x38] sm:$0xf]
        %v3007 = vld [vmem:[%s2991 + $0x3c] sm:$0xf]
        %v3024 = vunpack.c.l.b16 %v2992
        %v3025 = vunpack.c.l.b16 %v2993
        %v3026 = vunpack.c.l.b16 %v2994
        %v3027 = vunpack.c.l.b16 %v2995
        %v3028 = vunpack.c.l.b16 %v2996
        %v3029 = vunpack.c.l.b16 %v2997
        %v3030 = vunpack.c.l.b16 %v2998
        %v3031 = vunpack.c.l.b16 %v2999
        %v3032 = vunpack.c.l.b16 %v3000
        %v3033 = vunpack.c.l.b16 %v3001
        %v3034 = vunpack.c.l.b16 %v3002
        %v3035 = vunpack.c.l.b16 %v3003
        %v3036 = vunpack.c.l.b16 %v3004
        %v3037 = vunpack.c.l.b16 %v3005
        %v3038 = vunpack.c.l.b16 %v3006
        %v3039 = vunpack.c.l.b16 %v3007
        %v3040 = vpack.c.b16 %v3025, %v3024
        %v3041 = vpack.c.b16 %v3027, %v3026
        %v3042 = vpack.c.b16 %v3029, %v3028
        %v3043 = vpack.c.b16 %v3031, %v3030
        %v3044 = vpack.c.b16 %v3033, %v3032
        %v3045 = vpack.c.b16 %v3035, %v3034
        %v3046 = vpack.c.b16 %v3037, %v3036
        %v3047 = vpack.c.b16 %v3039, %v3038
        %3056 = vmatpush.bf16.msra.mxu0 %v3047
        %3057 = vmatpush.bf16.msra.mxu0 %v3046
        %3058 = vmatpush.bf16.msra.mxu0 %v3045
        %3059 = vmatpush.bf16.msra.mxu0 %v3044
        %3060 = vmatpush.bf16.msra.mxu0 %v3043
        %3061 = vmatpush.bf16.msra.mxu0 %v3042
        %3062 = vmatpush.bf16.msra.mxu0 %v3041
        %3063 = vmatpush.bf16.msra.mxu0 %v3040
        %3064 = vmatmul.bf16.gmra.mxu0 %v2990
        %v3065 = vpop.f32.mrf.mxu0
        %v3066 = vadd.f32 0.0, %v3065
        %v3067 = vpop.f32.mrf.mxu0
        %v3068 = vadd.f32 0.0, %v3067
        %3069 = vdwg.mxu0
        %v3070 = vadd.f32 %v2964, %v3066
        %v3071 = vadd.f32 %v2965, %v3068
        %v3072 = vld [vmem:[%s6 + $0x40] sm:$0xf]
        %v3073 = vld [vmem:[%s6 + $0x44] sm:$0xf]
        %v3076 = vunpack.c.l.b16 %v3072
        %v3077 = vunpack.c.l.b16 %v3073
        %v3078 = vpack.c.b16 %v3077, %v3076
        %v3080 = vsel %vm2235, %v3078, 0
        %3082 = vmatpush.bf16.msra.mxu0 0
        %3083 = vmatpush.bf16.msra.mxu0 0
        %3084 = vmatpush.bf16.msra.mxu0 0
        %3085 = vmatpush.bf16.msra.mxu0 0
        %3086 = vmatpush.bf16.msra.mxu0 0
        %3087 = vmatpush.bf16.msra.mxu0 0
        %3088 = vmatpush.bf16.msra.mxu0 0
        %3089 = vmatpush.bf16.msra.mxu0 %v2227
        %3090 = vmatmul.bf16.gmra.mxu0 %v3080
        %v3091 = vpop.f32.mrf.mxu0
        %v3092 = vadd.f32 0.0, %v3091
        %v3093 = vpop.f32.mrf.mxu0
        %v3094 = vadd.f32 0.0, %v3093
        %3095 = vdwg.mxu0
        %v3096 = vpack.c.bf16 %v3094, %v3092
        %s3097 = scalar_lea.vmem [#allocation5], 512
        %v3098 = vld [vmem:[%s3097] sm:$0xf]
        %v3099 = vld [vmem:[%s3097 + $0x4] sm:$0xf]
        %v3100 = vld [vmem:[%s3097 + $0x8] sm:$0xf]
        %v3101 = vld [vmem:[%s3097 + $0xc] sm:$0xf]
        %v3102 = vld [vmem:[%s3097 + $0x10] sm:$0xf]
        %v3103 = vld [vmem:[%s3097 + $0x14] sm:$0xf]
        %v3104 = vld [vmem:[%s3097 + $0x18] sm:$0xf]
        %v3105 = vld [vmem:[%s3097 + $0x1c] sm:$0xf]
        %v3106 = vld [vmem:[%s3097 + $0x20] sm:$0xf]
        %v3107 = vld [vmem:[%s3097 + $0x24] sm:$0xf]
        %v3108 = vld [vmem:[%s3097 + $0x28] sm:$0xf]
        %v3109 = vld [vmem:[%s3097 + $0x2c] sm:$0xf]
        %v3110 = vld [vmem:[%s3097 + $0x30] sm:$0xf]
        %v3111 = vld [vmem:[%s3097 + $0x34] sm:$0xf]
        %v3112 = vld [vmem:[%s3097 + $0x38] sm:$0xf]
        %v3113 = vld [vmem:[%s3097 + $0x3c] sm:$0xf]
        %v3130 = vunpack.c.l.b16 %v3098
        %v3131 = vunpack.c.l.b16 %v3099
        %v3132 = vunpack.c.l.b16 %v3100
        %v3133 = vunpack.c.l.b16 %v3101
        %v3134 = vunpack.c.l.b16 %v3102
        %v3135 = vunpack.c.l.b16 %v3103
        %v3136 = vunpack.c.l.b16 %v3104
        %v3137 = vunpack.c.l.b16 %v3105
        %v3138 = vunpack.c.l.b16 %v3106
        %v3139 = vunpack.c.l.b16 %v3107
        %v3140 = vunpack.c.l.b16 %v3108
        %v3141 = vunpack.c.l.b16 %v3109
        %v3142 = vunpack.c.l.b16 %v3110
        %v3143 = vunpack.c.l.b16 %v3111
        %v3144 = vunpack.c.l.b16 %v3112
        %v3145 = vunpack.c.l.b16 %v3113
        %v3146 = vpack.c.b16 %v3131, %v3130
        %v3147 = vpack.c.b16 %v3133, %v3132
        %v3148 = vpack.c.b16 %v3135, %v3134
        %v3149 = vpack.c.b16 %v3137, %v3136
        %v3150 = vpack.c.b16 %v3139, %v3138
        %v3151 = vpack.c.b16 %v3141, %v3140
        %v3152 = vpack.c.b16 %v3143, %v3142
        %v3153 = vpack.c.b16 %v3145, %v3144
        %3162 = vmatpush.bf16.msra.mxu0 %v3153
        %3163 = vmatpush.bf16.msra.mxu0 %v3152
        %3164 = vmatpush.bf16.msra.mxu0 %v3151
        %3165 = vmatpush.bf16.msra.mxu0 %v3150
        %3166 = vmatpush.bf16.msra.mxu0 %v3149
        %3167 = vmatpush.bf16.msra.mxu0 %v3148
        %3168 = vmatpush.bf16.msra.mxu0 %v3147
        %3169 = vmatpush.bf16.msra.mxu0 %v3146
        %3170 = vmatmul.bf16.gmra.mxu0 %v3096
        %v3171 = vpop.f32.mrf.mxu0
        %v3172 = vadd.f32 0.0, %v3171
        %v3173 = vpop.f32.mrf.mxu0
        %v3174 = vadd.f32 0.0, %v3173
        %3175 = vdwg.mxu0
        %v3176 = vadd.f32 %v3070, %v3172
        %v3177 = vadd.f32 %v3071, %v3174
        %v3178 = vld [vmem:[%s6 + $0x48] sm:$0xf]
        %v3179 = vld [vmem:[%s6 + $0x4c] sm:$0xf]
        %v3182 = vunpack.c.l.b16 %v3178
        %v3183 = vunpack.c.l.b16 %v3179
        %v3184 = vpack.c.b16 %v3183, %v3182
        %v3186 = vsel %vm2235, %v3184, 0
        %3188 = vmatpush.bf16.msra.mxu0 0
        %3189 = vmatpush.bf16.msra.mxu0 0
        %3190 = vmatpush.bf16.msra.mxu0 0
        %3191 = vmatpush.bf16.msra.mxu0 0
        %3192 = vmatpush.bf16.msra.mxu0 0
        %3193 = vmatpush.bf16.msra.mxu0 0
        %3194 = vmatpush.bf16.msra.mxu0 0
        %3195 = vmatpush.bf16.msra.mxu0 %v2227
        %3196 = vmatmul.bf16.gmra.mxu0 %v3186
        %v3197 = vpop.f32.mrf.mxu0
        %v3198 = vadd.f32 0.0, %v3197
        %v3199 = vpop.f32.mrf.mxu0
        %v3200 = vadd.f32 0.0, %v3199
        %3201 = vdwg.mxu0
        %v3202 = vpack.c.bf16 %v3200, %v3198
        %s3203 = scalar_lea.vmem [#allocation5], 576
        %v3204 = vld [vmem:[%s3203] sm:$0xf]
        %v3205 = vld [vmem:[%s3203 + $0x4] sm:$0xf]
        %v3206 = vld [vmem:[%s3203 + $0x8] sm:$0xf]
        %v3207 = vld [vmem:[%s3203 + $0xc] sm:$0xf]
        %v3208 = vld [vmem:[%s3203 + $0x10] sm:$0xf]
        %v3209 = vld [vmem:[%s3203 + $0x14] sm:$0xf]
        %v3210 = vld [vmem:[%s3203 + $0x18] sm:$0xf]
        %v3211 = vld [vmem:[%s3203 + $0x1c] sm:$0xf]
        %v3212 = vld [vmem:[%s3203 + $0x20] sm:$0xf]
        %v3213 = vld [vmem:[%s3203 + $0x24] sm:$0xf]
        %v3214 = vld [vmem:[%s3203 + $0x28] sm:$0xf]
        %v3215 = vld [vmem:[%s3203 + $0x2c] sm:$0xf]
        %v3216 = vld [vmem:[%s3203 + $0x30] sm:$0xf]
        %v3217 = vld [vmem:[%s3203 + $0x34] sm:$0xf]
        %v3218 = vld [vmem:[%s3203 + $0x38] sm:$0xf]
        %v3219 = vld [vmem:[%s3203 + $0x3c] sm:$0xf]
        %v3236 = vunpack.c.l.b16 %v3204
        %v3237 = vunpack.c.l.b16 %v3205
        %v3238 = vunpack.c.l.b16 %v3206
        %v3239 = vunpack.c.l.b16 %v3207
        %v3240 = vunpack.c.l.b16 %v3208
        %v3241 = vunpack.c.l.b16 %v3209
        %v3242 = vunpack.c.l.b16 %v3210
        %v3243 = vunpack.c.l.b16 %v3211
        %v3244 = vunpack.c.l.b16 %v3212
        %v3245 = vunpack.c.l.b16 %v3213
        %v3246 = vunpack.c.l.b16 %v3214
        %v3247 = vunpack.c.l.b16 %v3215
        %v3248 = vunpack.c.l.b16 %v3216
        %v3249 = vunpack.c.l.b16 %v3217
        %v3250 = vunpack.c.l.b16 %v3218
        %v3251 = vunpack.c.l.b16 %v3219
        %v3252 = vpack.c.b16 %v3237, %v3236
        %v3253 = vpack.c.b16 %v3239, %v3238
        %v3254 = vpack.c.b16 %v3241, %v3240
        %v3255 = vpack.c.b16 %v3243, %v3242
        %v3256 = vpack.c.b16 %v3245, %v3244
        %v3257 = vpack.c.b16 %v3247, %v3246
        %v3258 = vpack.c.b16 %v3249, %v3248
        %v3259 = vpack.c.b16 %v3251, %v3250
        %3268 = vmatpush.bf16.msra.mxu0 %v3259
        %3269 = vmatpush.bf16.msra.mxu0 %v3258
        %3270 = vmatpush.bf16.msra.mxu0 %v3257
        %3271 = vmatpush.bf16.msra.mxu0 %v3256
        %3272 = vmatpush.bf16.msra.mxu0 %v3255
        %3273 = vmatpush.bf16.msra.mxu0 %v3254
        %3274 = vmatpush.bf16.msra.mxu0 %v3253
        %3275 = vmatpush.bf16.msra.mxu0 %v3252
        %3276 = vmatmul.bf16.gmra.mxu0 %v3202
        %v3277 = vpop.f32.mrf.mxu0
        %v3278 = vadd.f32 0.0, %v3277
        %v3279 = vpop.f32.mrf.mxu0
        %v3280 = vadd.f32 0.0, %v3279
        %3281 = vdwg.mxu0
        %v3282 = vadd.f32 %v3176, %v3278
        %v3283 = vadd.f32 %v3177, %v3280
        %v3284 = vld [vmem:[%s6 + $0x50] sm:$0xf]
        %v3285 = vld [vmem:[%s6 + $0x54] sm:$0xf]
        %v3288 = vunpack.c.l.b16 %v3284
        %v3289 = vunpack.c.l.b16 %v3285
        %v3290 = vpack.c.b16 %v3289, %v3288
        %v3292 = vsel %vm2235, %v3290, 0
        %3294 = vmatpush.bf16.msra.mxu0 0
        %3295 = vmatpush.bf16.msra.mxu0 0
        %3296 = vmatpush.bf16.msra.mxu0 0
        %3297 = vmatpush.bf16.msra.mxu0 0
        %3298 = vmatpush.bf16.msra.mxu0 0
        %3299 = vmatpush.bf16.msra.mxu0 0
        %3300 = vmatpush.bf16.msra.mxu0 0
        %3301 = vmatpush.bf16.msra.mxu0 %v2227
        %3302 = vmatmul.bf16.gmra.mxu0 %v3292
        %v3303 = vpop.f32.mrf.mxu0
        %v3304 = vadd.f32 0.0, %v3303
        %v3305 = vpop.f32.mrf.mxu0
        %v3306 = vadd.f32 0.0, %v3305
        %3307 = vdwg.mxu0
        %v3308 = vpack.c.bf16 %v3306, %v3304
        %s3309 = scalar_lea.vmem [#allocation5], 640
        %v3310 = vld [vmem:[%s3309] sm:$0xf]
        %v3311 = vld [vmem:[%s3309 + $0x4] sm:$0xf]
        %v3312 = vld [vmem:[%s3309 + $0x8] sm:$0xf]
        %v3313 = vld [vmem:[%s3309 + $0xc] sm:$0xf]
        %v3314 = vld [vmem:[%s3309 + $0x10] sm:$0xf]
        %v3315 = vld [vmem:[%s3309 + $0x14] sm:$0xf]
        %v3316 = vld [vmem:[%s3309 + $0x18] sm:$0xf]
        %v3317 = vld [vmem:[%s3309 + $0x1c] sm:$0xf]
        %v3318 = vld [vmem:[%s3309 + $0x20] sm:$0xf]
        %v3319 = vld [vmem:[%s3309 + $0x24] sm:$0xf]
        %v3320 = vld [vmem:[%s3309 + $0x28] sm:$0xf]
        %v3321 = vld [vmem:[%s3309 + $0x2c] sm:$0xf]
        %v3322 = vld [vmem:[%s3309 + $0x30] sm:$0xf]
        %v3323 = vld [vmem:[%s3309 + $0x34] sm:$0xf]
        %v3324 = vld [vmem:[%s3309 + $0x38] sm:$0xf]
        %v3325 = vld [vmem:[%s3309 + $0x3c] sm:$0xf]
        %v3342 = vunpack.c.l.b16 %v3310
        %v3343 = vunpack.c.l.b16 %v3311
        %v3344 = vunpack.c.l.b16 %v3312
        %v3345 = vunpack.c.l.b16 %v3313
        %v3346 = vunpack.c.l.b16 %v3314
        %v3347 = vunpack.c.l.b16 %v3315
        %v3348 = vunpack.c.l.b16 %v3316
        %v3349 = vunpack.c.l.b16 %v3317
        %v3350 = vunpack.c.l.b16 %v3318
        %v3351 = vunpack.c.l.b16 %v3319
        %v3352 = vunpack.c.l.b16 %v3320
        %v3353 = vunpack.c.l.b16 %v3321
        %v3354 = vunpack.c.l.b16 %v3322
        %v3355 = vunpack.c.l.b16 %v3323
        %v3356 = vunpack.c.l.b16 %v3324
        %v3357 = vunpack.c.l.b16 %v3325
        %v3358 = vpack.c.b16 %v3343, %v3342
        %v3359 = vpack.c.b16 %v3345, %v3344
        %v3360 = vpack.c.b16 %v3347, %v3346
        %v3361 = vpack.c.b16 %v3349, %v3348
        %v3362 = vpack.c.b16 %v3351, %v3350
        %v3363 = vpack.c.b16 %v3353, %v3352
        %v3364 = vpack.c.b16 %v3355, %v3354
        %v3365 = vpack.c.b16 %v3357, %v3356
        %3374 = vmatpush.bf16.msra.mxu0 %v3365
        %3375 = vmatpush.bf16.msra.mxu0 %v3364
        %3376 = vmatpush.bf16.msra.mxu0 %v3363
        %3377 = vmatpush.bf16.msra.mxu0 %v3362
        %3378 = vmatpush.bf16.msra.mxu0 %v3361
        %3379 = vmatpush.bf16.msra.mxu0 %v3360
        %3380 = vmatpush.bf16.msra.mxu0 %v3359
        %3381 = vmatpush.bf16.msra.mxu0 %v3358
        %3382 = vmatmul.bf16.gmra.mxu0 %v3308
        %v3383 = vpop.f32.mrf.mxu0
        %v3384 = vadd.f32 0.0, %v3383
        %v3385 = vpop.f32.mrf.mxu0
        %v3386 = vadd.f32 0.0, %v3385
        %3387 = vdwg.mxu0
        %v3388 = vadd.f32 %v3282, %v3384
        %v3389 = vadd.f32 %v3283, %v3386
        %v3390 = vld [vmem:[%s6 + $0x58] sm:$0xf]
        %v3391 = vld [vmem:[%s6 + $0x5c] sm:$0xf]
        %v3394 = vunpack.c.l.b16 %v3390
        %v3395 = vunpack.c.l.b16 %v3391
        %v3396 = vpack.c.b16 %v3395, %v3394
        %v3398 = vsel %vm2235, %v3396, 0
        %3400 = vmatpush.bf16.msra.mxu0 0
        %3401 = vmatpush.bf16.msra.mxu0 0
        %3402 = vmatpush.bf16.msra.mxu0 0
        %3403 = vmatpush.bf16.msra.mxu0 0
        %3404 = vmatpush.bf16.msra.mxu0 0
        %3405 = vmatpush.bf16.msra.mxu0 0
        %3406 = vmatpush.bf16.msra.mxu0 0
        %3407 = vmatpush.bf16.msra.mxu0 %v2227
        %3408 = vmatmul.bf16.gmra.mxu0 %v3398
        %v3409 = vpop.f32.mrf.mxu0
        %v3410 = vadd.f32 0.0, %v3409
        %v3411 = vpop.f32.mrf.mxu0
        %v3412 = vadd.f32 0.0, %v3411
        %3413 = vdwg.mxu0
        %v3414 = vpack.c.bf16 %v3412, %v3410
        %s3415 = scalar_lea.vmem [#allocation5], 704
        %v3416 = vld [vmem:[%s3415] sm:$0xf]
        %v3417 = vld [vmem:[%s3415 + $0x4] sm:$0xf]
        %v3418 = vld [vmem:[%s3415 + $0x8] sm:$0xf]
        %v3419 = vld [vmem:[%s3415 + $0xc] sm:$0xf]
        %v3420 = vld [vmem:[%s3415 + $0x10] sm:$0xf]
        %v3421 = vld [vmem:[%s3415 + $0x14] sm:$0xf]
        %v3422 = vld [vmem:[%s3415 + $0x18] sm:$0xf]
        %v3423 = vld [vmem:[%s3415 + $0x1c] sm:$0xf]
        %v3424 = vld [vmem:[%s3415 + $0x20] sm:$0xf]
        %v3425 = vld [vmem:[%s3415 + $0x24] sm:$0xf]
        %v3426 = vld [vmem:[%s3415 + $0x28] sm:$0xf]
        %v3427 = vld [vmem:[%s3415 + $0x2c] sm:$0xf]
        %v3428 = vld [vmem:[%s3415 + $0x30] sm:$0xf]
        %v3429 = vld [vmem:[%s3415 + $0x34] sm:$0xf]
        %v3430 = vld [vmem:[%s3415 + $0x38] sm:$0xf]
        %v3431 = vld [vmem:[%s3415 + $0x3c] sm:$0xf]
        %v3448 = vunpack.c.l.b16 %v3416
        %v3449 = vunpack.c.l.b16 %v3417
        %v3450 = vunpack.c.l.b16 %v3418
        %v3451 = vunpack.c.l.b16 %v3419
        %v3452 = vunpack.c.l.b16 %v3420
        %v3453 = vunpack.c.l.b16 %v3421
        %v3454 = vunpack.c.l.b16 %v3422
        %v3455 = vunpack.c.l.b16 %v3423
        %v3456 = vunpack.c.l.b16 %v3424
        %v3457 = vunpack.c.l.b16 %v3425
        %v3458 = vunpack.c.l.b16 %v3426
        %v3459 = vunpack.c.l.b16 %v3427
        %v3460 = vunpack.c.l.b16 %v3428
        %v3461 = vunpack.c.l.b16 %v3429
        %v3462 = vunpack.c.l.b16 %v3430
        %v3463 = vunpack.c.l.b16 %v3431
        %v3464 = vpack.c.b16 %v3449, %v3448
        %v3465 = vpack.c.b16 %v3451, %v3450
        %v3466 = vpack.c.b16 %v3453, %v3452
        %v3467 = vpack.c.b16 %v3455, %v3454
        %v3468 = vpack.c.b16 %v3457, %v3456
        %v3469 = vpack.c.b16 %v3459, %v3458
        %v3470 = vpack.c.b16 %v3461, %v3460
        %v3471 = vpack.c.b16 %v3463, %v3462
        %3480 = vmatpush.bf16.msra.mxu0 %v3471
        %3481 = vmatpush.bf16.msra.mxu0 %v3470
        %3482 = vmatpush.bf16.msra.mxu0 %v3469
        %3483 = vmatpush.bf16.msra.mxu0 %v3468
        %3484 = vmatpush.bf16.msra.mxu0 %v3467
        %3485 = vmatpush.bf16.msra.mxu0 %v3466
        %3486 = vmatpush.bf16.msra.mxu0 %v3465
        %3487 = vmatpush.bf16.msra.mxu0 %v3464
        %3488 = vmatmul.bf16.gmra.mxu0 %v3414
        %v3489 = vpop.f32.mrf.mxu0
        %v3490 = vadd.f32 0.0, %v3489
        %v3491 = vpop.f32.mrf.mxu0
        %v3492 = vadd.f32 0.0, %v3491
        %3493 = vdwg.mxu0
        %v3494 = vadd.f32 %v3388, %v3490
        %v3495 = vadd.f32 %v3389, %v3492
        %v3496 = vld [vmem:[%s6 + $0x60] sm:$0xf]
        %v3497 = vld [vmem:[%s6 + $0x64] sm:$0xf]
        %v3500 = vunpack.c.l.b16 %v3496
        %v3501 = vunpack.c.l.b16 %v3497
        %v3502 = vpack.c.b16 %v3501, %v3500
        %v3504 = vsel %vm2235, %v3502, 0
        %3506 = vmatpush.bf16.msra.mxu0 0
        %3507 = vmatpush.bf16.msra.mxu0 0
        %3508 = vmatpush.bf16.msra.mxu0 0
        %3509 = vmatpush.bf16.msra.mxu0 0
        %3510 = vmatpush.bf16.msra.mxu0 0
        %3511 = vmatpush.bf16.msra.mxu0 0
        %3512 = vmatpush.bf16.msra.mxu0 0
        %3513 = vmatpush.bf16.msra.mxu0 %v2227
        %3514 = vmatmul.bf16.gmra.mxu0 %v3504
        %v3515 = vpop.f32.mrf.mxu0
        %v3516 = vadd.f32 0.0, %v3515
        %v3517 = vpop.f32.mrf.mxu0
        %v3518 = vadd.f32 0.0, %v3517
        %3519 = vdwg.mxu0
        %v3520 = vpack.c.bf16 %v3518, %v3516
        %s3521 = scalar_lea.vmem [#allocation5], 768
        %v3522 = vld [vmem:[%s3521] sm:$0xf]
        %v3523 = vld [vmem:[%s3521 + $0x4] sm:$0xf]
        %v3524 = vld [vmem:[%s3521 + $0x8] sm:$0xf]
        %v3525 = vld [vmem:[%s3521 + $0xc] sm:$0xf]
        %v3526 = vld [vmem:[%s3521 + $0x10] sm:$0xf]
        %v3527 = vld [vmem:[%s3521 + $0x14] sm:$0xf]
        %v3528 = vld [vmem:[%s3521 + $0x18] sm:$0xf]
        %v3529 = vld [vmem:[%s3521 + $0x1c] sm:$0xf]
        %v3530 = vld [vmem:[%s3521 + $0x20] sm:$0xf]
        %v3531 = vld [vmem:[%s3521 + $0x24] sm:$0xf]
        %v3532 = vld [vmem:[%s3521 + $0x28] sm:$0xf]
        %v3533 = vld [vmem:[%s3521 + $0x2c] sm:$0xf]
        %v3534 = vld [vmem:[%s3521 + $0x30] sm:$0xf]
        %v3535 = vld [vmem:[%s3521 + $0x34] sm:$0xf]
        %v3536 = vld [vmem:[%s3521 + $0x38] sm:$0xf]
        %v3537 = vld [vmem:[%s3521 + $0x3c] sm:$0xf]
        %v3554 = vunpack.c.l.b16 %v3522
        %v3555 = vunpack.c.l.b16 %v3523
        %v3556 = vunpack.c.l.b16 %v3524
        %v3557 = vunpack.c.l.b16 %v3525
        %v3558 = vunpack.c.l.b16 %v3526
        %v3559 = vunpack.c.l.b16 %v3527
        %v3560 = vunpack.c.l.b16 %v3528
        %v3561 = vunpack.c.l.b16 %v3529
        %v3562 = vunpack.c.l.b16 %v3530
        %v3563 = vunpack.c.l.b16 %v3531
        %v3564 = vunpack.c.l.b16 %v3532
        %v3565 = vunpack.c.l.b16 %v3533
        %v3566 = vunpack.c.l.b16 %v3534
        %v3567 = vunpack.c.l.b16 %v3535
        %v3568 = vunpack.c.l.b16 %v3536
        %v3569 = vunpack.c.l.b16 %v3537
        %v3570 = vpack.c.b16 %v3555, %v3554
        %v3571 = vpack.c.b16 %v3557, %v3556
        %v3572 = vpack.c.b16 %v3559, %v3558
        %v3573 = vpack.c.b16 %v3561, %v3560
        %v3574 = vpack.c.b16 %v3563, %v3562
        %v3575 = vpack.c.b16 %v3565, %v3564
        %v3576 = vpack.c.b16 %v3567, %v3566
        %v3577 = vpack.c.b16 %v3569, %v3568
        %3586 = vmatpush.bf16.msra.mxu0 %v3577
        %3587 = vmatpush.bf16.msra.mxu0 %v3576
        %3588 = vmatpush.bf16.msra.mxu0 %v3575
        %3589 = vmatpush.bf16.msra.mxu0 %v3574
        %3590 = vmatpush.bf16.msra.mxu0 %v3573
        %3591 = vmatpush.bf16.msra.mxu0 %v3572
        %3592 = vmatpush.bf16.msra.mxu0 %v3571
        %3593 = vmatpush.bf16.msra.mxu0 %v3570
        %3594 = vmatmul.bf16.gmra.mxu0 %v3520
        %v3595 = vpop.f32.mrf.mxu0
        %v3596 = vadd.f32 0.0, %v3595
        %v3597 = vpop.f32.mrf.mxu0
        %v3598 = vadd.f32 0.0, %v3597
        %3599 = vdwg.mxu0
        %v3600 = vadd.f32 %v3494, %v3596
        %v3601 = vadd.f32 %v3495, %v3598
        %v3602 = vld [vmem:[%s6 + $0x68] sm:$0xf]
        %v3603 = vld [vmem:[%s6 + $0x6c] sm:$0xf]
        %v3606 = vunpack.c.l.b16 %v3602
        %v3607 = vunpack.c.l.b16 %v3603
        %v3608 = vpack.c.b16 %v3607, %v3606
        %v3610 = vsel %vm2235, %v3608, 0
        %3612 = vmatpush.bf16.msra.mxu0 0
        %3613 = vmatpush.bf16.msra.mxu0 0
        %3614 = vmatpush.bf16.msra.mxu0 0
        %3615 = vmatpush.bf16.msra.mxu0 0
        %3616 = vmatpush.bf16.msra.mxu0 0
        %3617 = vmatpush.bf16.msra.mxu0 0
        %3618 = vmatpush.bf16.msra.mxu0 0
        %3619 = vmatpush.bf16.msra.mxu0 %v2227
        %3620 = vmatmul.bf16.gmra.mxu0 %v3610
        %v3621 = vpop.f32.mrf.mxu0
        %v3622 = vadd.f32 0.0, %v3621
        %v3623 = vpop.f32.mrf.mxu0
        %v3624 = vadd.f32 0.0, %v3623
        %3625 = vdwg.mxu0
        %v3626 = vpack.c.bf16 %v3624, %v3622
        %s3627 = scalar_lea.vmem [#allocation5], 832
        %v3628 = vld [vmem:[%s3627] sm:$0xf]
        %v3629 = vld [vmem:[%s3627 + $0x4] sm:$0xf]
        %v3630 = vld [vmem:[%s3627 + $0x8] sm:$0xf]
        %v3631 = vld [vmem:[%s3627 + $0xc] sm:$0xf]
        %v3632 = vld [vmem:[%s3627 + $0x10] sm:$0xf]
        %v3633 = vld [vmem:[%s3627 + $0x14] sm:$0xf]
        %v3634 = vld [vmem:[%s3627 + $0x18] sm:$0xf]
        %v3635 = vld [vmem:[%s3627 + $0x1c] sm:$0xf]
        %v3636 = vld [vmem:[%s3627 + $0x20] sm:$0xf]
        %v3637 = vld [vmem:[%s3627 + $0x24] sm:$0xf]
        %v3638 = vld [vmem:[%s3627 + $0x28] sm:$0xf]
        %v3639 = vld [vmem:[%s3627 + $0x2c] sm:$0xf]
        %v3640 = vld [vmem:[%s3627 + $0x30] sm:$0xf]
        %v3641 = vld [vmem:[%s3627 + $0x34] sm:$0xf]
        %v3642 = vld [vmem:[%s3627 + $0x38] sm:$0xf]
        %v3643 = vld [vmem:[%s3627 + $0x3c] sm:$0xf]
        %v3660 = vunpack.c.l.b16 %v3628
        %v3661 = vunpack.c.l.b16 %v3629
        %v3662 = vunpack.c.l.b16 %v3630
        %v3663 = vunpack.c.l.b16 %v3631
        %v3664 = vunpack.c.l.b16 %v3632
        %v3665 = vunpack.c.l.b16 %v3633
        %v3666 = vunpack.c.l.b16 %v3634
        %v3667 = vunpack.c.l.b16 %v3635
        %v3668 = vunpack.c.l.b16 %v3636
        %v3669 = vunpack.c.l.b16 %v3637
        %v3670 = vunpack.c.l.b16 %v3638
        %v3671 = vunpack.c.l.b16 %v3639
        %v3672 = vunpack.c.l.b16 %v3640
        %v3673 = vunpack.c.l.b16 %v3641
        %v3674 = vunpack.c.l.b16 %v3642
        %v3675 = vunpack.c.l.b16 %v3643
        %v3676 = vpack.c.b16 %v3661, %v3660
        %v3677 = vpack.c.b16 %v3663, %v3662
        %v3678 = vpack.c.b16 %v3665, %v3664
        %v3679 = vpack.c.b16 %v3667, %v3666
        %v3680 = vpack.c.b16 %v3669, %v3668
        %v3681 = vpack.c.b16 %v3671, %v3670
        %v3682 = vpack.c.b16 %v3673, %v3672
        %v3683 = vpack.c.b16 %v3675, %v3674
        %3692 = vmatpush.bf16.msra.mxu0 %v3683
        %3693 = vmatpush.bf16.msra.mxu0 %v3682
        %3694 = vmatpush.bf16.msra.mxu0 %v3681
        %3695 = vmatpush.bf16.msra.mxu0 %v3680
        %3696 = vmatpush.bf16.msra.mxu0 %v3679
        %3697 = vmatpush.bf16.msra.mxu0 %v3678
        %3698 = vmatpush.bf16.msra.mxu0 %v3677
        %3699 = vmatpush.bf16.msra.mxu0 %v3676
        %3700 = vmatmul.bf16.gmra.mxu0 %v3626
        %v3701 = vpop.f32.mrf.mxu0
        %v3702 = vadd.f32 0.0, %v3701
        %v3703 = vpop.f32.mrf.mxu0
        %v3704 = vadd.f32 0.0, %v3703
        %3705 = vdwg.mxu0
        %v3706 = vadd.f32 %v3600, %v3702
        %v3707 = vadd.f32 %v3601, %v3704
        %v3708 = vld [vmem:[%s6 + $0x70] sm:$0xf]
        %v3709 = vld [vmem:[%s6 + $0x74] sm:$0xf]
        %v3712 = vunpack.c.l.b16 %v3708
        %v3713 = vunpack.c.l.b16 %v3709
        %v3714 = vpack.c.b16 %v3713, %v3712
        %v3716 = vsel %vm2235, %v3714, 0
        %3718 = vmatpush.bf16.msra.mxu0 0
        %3719 = vmatpush.bf16.msra.mxu0 0
        %3720 = vmatpush.bf16.msra.mxu0 0
        %3721 = vmatpush.bf16.msra.mxu0 0
        %3722 = vmatpush.bf16.msra.mxu0 0
        %3723 = vmatpush.bf16.msra.mxu0 0
        %3724 = vmatpush.bf16.msra.mxu0 0
        %3725 = vmatpush.bf16.msra.mxu0 %v2227
        %3726 = vmatmul.bf16.gmra.mxu0 %v3716
        %v3727 = vpop.f32.mrf.mxu0
        %v3728 = vadd.f32 0.0, %v3727
        %v3729 = vpop.f32.mrf.mxu0
        %v3730 = vadd.f32 0.0, %v3729
        %3731 = vdwg.mxu0
        %v3732 = vpack.c.bf16 %v3730, %v3728
        %s3733 = scalar_lea.vmem [#allocation5], 896
        %v3734 = vld [vmem:[%s3733] sm:$0xf]
        %v3735 = vld [vmem:[%s3733 + $0x4] sm:$0xf]
        %v3736 = vld [vmem:[%s3733 + $0x8] sm:$0xf]
        %v3737 = vld [vmem:[%s3733 + $0xc] sm:$0xf]
        %v3738 = vld [vmem:[%s3733 + $0x10] sm:$0xf]
        %v3739 = vld [vmem:[%s3733 + $0x14] sm:$0xf]
        %v3740 = vld [vmem:[%s3733 + $0x18] sm:$0xf]
        %v3741 = vld [vmem:[%s3733 + $0x1c] sm:$0xf]
        %v3742 = vld [vmem:[%s3733 + $0x20] sm:$0xf]
        %v3743 = vld [vmem:[%s3733 + $0x24] sm:$0xf]
        %v3744 = vld [vmem:[%s3733 + $0x28] sm:$0xf]
        %v3745 = vld [vmem:[%s3733 + $0x2c] sm:$0xf]
        %v3746 = vld [vmem:[%s3733 + $0x30] sm:$0xf]
        %v3747 = vld [vmem:[%s3733 + $0x34] sm:$0xf]
        %v3748 = vld [vmem:[%s3733 + $0x38] sm:$0xf]
        %v3749 = vld [vmem:[%s3733 + $0x3c] sm:$0xf]
        %v3766 = vunpack.c.l.b16 %v3734
        %v3767 = vunpack.c.l.b16 %v3735
        %v3768 = vunpack.c.l.b16 %v3736
        %v3769 = vunpack.c.l.b16 %v3737
        %v3770 = vunpack.c.l.b16 %v3738
        %v3771 = vunpack.c.l.b16 %v3739
        %v3772 = vunpack.c.l.b16 %v3740
        %v3773 = vunpack.c.l.b16 %v3741
        %v3774 = vunpack.c.l.b16 %v3742
        %v3775 = vunpack.c.l.b16 %v3743
        %v3776 = vunpack.c.l.b16 %v3744
        %v3777 = vunpack.c.l.b16 %v3745
        %v3778 = vunpack.c.l.b16 %v3746
        %v3779 = vunpack.c.l.b16 %v3747
        %v3780 = vunpack.c.l.b16 %v3748
        %v3781 = vunpack.c.l.b16 %v3749
        %v3782 = vpack.c.b16 %v3767, %v3766
        %v3783 = vpack.c.b16 %v3769, %v3768
        %v3784 = vpack.c.b16 %v3771, %v3770
        %v3785 = vpack.c.b16 %v3773, %v3772
        %v3786 = vpack.c.b16 %v3775, %v3774
        %v3787 = vpack.c.b16 %v3777, %v3776
        %v3788 = vpack.c.b16 %v3779, %v3778
        %v3789 = vpack.c.b16 %v3781, %v3780
        %3798 = vmatpush.bf16.msra.mxu0 %v3789
        %3799 = vmatpush.bf16.msra.mxu0 %v3788
        %3800 = vmatpush.bf16.msra.mxu0 %v3787
        %3801 = vmatpush.bf16.msra.mxu0 %v3786
        %3802 = vmatpush.bf16.msra.mxu0 %v3785
        %3803 = vmatpush.bf16.msra.mxu0 %v3784
        %3804 = vmatpush.bf16.msra.mxu0 %v3783
        %3805 = vmatpush.bf16.msra.mxu0 %v3782
        %3806 = vmatmul.bf16.gmra.mxu0 %v3732
        %v3807 = vpop.f32.mrf.mxu0
        %v3808 = vadd.f32 0.0, %v3807
        %v3809 = vpop.f32.mrf.mxu0
        %v3810 = vadd.f32 0.0, %v3809
        %3811 = vdwg.mxu0
        %v3812 = vadd.f32 %v3706, %v3808
        %v3813 = vadd.f32 %v3707, %v3810
        %v3814 = vld [vmem:[%s6 + $0x78] sm:$0xf]
        %v3815 = vld [vmem:[%s6 + $0x7c] sm:$0xf]
        %v3818 = vunpack.c.l.b16 %v3814
        %v3819 = vunpack.c.l.b16 %v3815
        %v3820 = vpack.c.b16 %v3819, %v3818
        %v3822 = vsel %vm2235, %v3820, 0
        %3824 = vmatpush.bf16.msra.mxu0 0
        %3825 = vmatpush.bf16.msra.mxu0 0
        %3826 = vmatpush.bf16.msra.mxu0 0
        %3827 = vmatpush.bf16.msra.mxu0 0
        %3828 = vmatpush.bf16.msra.mxu0 0
        %3829 = vmatpush.bf16.msra.mxu0 0
        %3830 = vmatpush.bf16.msra.mxu0 0
        %3831 = vmatpush.bf16.msra.mxu0 %v2227
        %3832 = vmatmul.bf16.gmra.mxu0 %v3822
        %v3833 = vpop.f32.mrf.mxu0
        %v3834 = vadd.f32 0.0, %v3833
        %v3835 = vpop.f32.mrf.mxu0
        %v3836 = vadd.f32 0.0, %v3835
        %3837 = vdwg.mxu0
        %v3838 = vpack.c.bf16 %v3836, %v3834
        %s3839 = scalar_lea.vmem [#allocation5], 960
        %v3840 = vld [vmem:[%s3839] sm:$0xf]
        %v3841 = vld [vmem:[%s3839 + $0x4] sm:$0xf]
        %v3842 = vld [vmem:[%s3839 + $0x8] sm:$0xf]
        %v3843 = vld [vmem:[%s3839 + $0xc] sm:$0xf]
        %v3844 = vld [vmem:[%s3839 + $0x10] sm:$0xf]
        %v3845 = vld [vmem:[%s3839 + $0x14] sm:$0xf]
        %v3846 = vld [vmem:[%s3839 + $0x18] sm:$0xf]
        %v3847 = vld [vmem:[%s3839 + $0x1c] sm:$0xf]
        %v3848 = vld [vmem:[%s3839 + $0x20] sm:$0xf]
        %v3849 = vld [vmem:[%s3839 + $0x24] sm:$0xf]
        %v3850 = vld [vmem:[%s3839 + $0x28] sm:$0xf]
        %v3851 = vld [vmem:[%s3839 + $0x2c] sm:$0xf]
        %v3852 = vld [vmem:[%s3839 + $0x30] sm:$0xf]
        %v3853 = vld [vmem:[%s3839 + $0x34] sm:$0xf]
        %v3854 = vld [vmem:[%s3839 + $0x38] sm:$0xf]
        %v3855 = vld [vmem:[%s3839 + $0x3c] sm:$0xf]
        %v3872 = vunpack.c.l.b16 %v3840
        %v3873 = vunpack.c.l.b16 %v3841
        %v3874 = vunpack.c.l.b16 %v3842
        %v3875 = vunpack.c.l.b16 %v3843
        %v3876 = vunpack.c.l.b16 %v3844
        %v3877 = vunpack.c.l.b16 %v3845
        %v3878 = vunpack.c.l.b16 %v3846
        %v3879 = vunpack.c.l.b16 %v3847
        %v3880 = vunpack.c.l.b16 %v3848
        %v3881 = vunpack.c.l.b16 %v3849
        %v3882 = vunpack.c.l.b16 %v3850
        %v3883 = vunpack.c.l.b16 %v3851
        %v3884 = vunpack.c.l.b16 %v3852
        %v3885 = vunpack.c.l.b16 %v3853
        %v3886 = vunpack.c.l.b16 %v3854
        %v3887 = vunpack.c.l.b16 %v3855
        %v3888 = vpack.c.b16 %v3873, %v3872
        %v3889 = vpack.c.b16 %v3875, %v3874
        %v3890 = vpack.c.b16 %v3877, %v3876
        %v3891 = vpack.c.b16 %v3879, %v3878
        %v3892 = vpack.c.b16 %v3881, %v3880
        %v3893 = vpack.c.b16 %v3883, %v3882
        %v3894 = vpack.c.b16 %v3885, %v3884
        %v3895 = vpack.c.b16 %v3887, %v3886
        %3904 = vmatpush.bf16.msra.mxu0 %v3895
        %3905 = vmatpush.bf16.msra.mxu0 %v3894
        %3906 = vmatpush.bf16.msra.mxu0 %v3893
        %3907 = vmatpush.bf16.msra.mxu0 %v3892
        %3908 = vmatpush.bf16.msra.mxu0 %v3891
        %3909 = vmatpush.bf16.msra.mxu0 %v3890
        %3910 = vmatpush.bf16.msra.mxu0 %v3889
        %3911 = vmatpush.bf16.msra.mxu0 %v3888
        %3912 = vmatmul.bf16.gmra.mxu0 %v3838
        %v3913 = vpop.f32.mrf.mxu0
        %v3914 = vadd.f32 0.0, %v3913
        %v3915 = vpop.f32.mrf.mxu0
        %v3916 = vadd.f32 0.0, %v3915
        %3917 = vdwg.mxu0
        %v3918 = vadd.f32 %v3812, %v3914
        %v3919 = vadd.f32 %v3813, %v3916
        %v3920 = vld [vmem:[%s6 + $0x80] sm:$0xf]
        %v3921 = vld [vmem:[%s6 + $0x84] sm:$0xf]
        %v3924 = vunpack.c.l.b16 %v3920
        %v3925 = vunpack.c.l.b16 %v3921
        %v3926 = vpack.c.b16 %v3925, %v3924
        %v3928 = vsel %vm2235, %v3926, 0
        %3930 = vmatpush.bf16.msra.mxu0 0
        %3931 = vmatpush.bf16.msra.mxu0 0
        %3932 = vmatpush.bf16.msra.mxu0 0
        %3933 = vmatpush.bf16.msra.mxu0 0
        %3934 = vmatpush.bf16.msra.mxu0 0
        %3935 = vmatpush.bf16.msra.mxu0 0
        %3936 = vmatpush.bf16.msra.mxu0 0
        %3937 = vmatpush.bf16.msra.mxu0 %v2227
        %3938 = vmatmul.bf16.gmra.mxu0 %v3928
        %v3939 = vpop.f32.mrf.mxu0
        %v3940 = vadd.f32 0.0, %v3939
        %v3941 = vpop.f32.mrf.mxu0
        %v3942 = vadd.f32 0.0, %v3941
        %3943 = vdwg.mxu0
        %v3944 = vpack.c.bf16 %v3942, %v3940
        %s3945 = scalar_lea.vmem [#allocation5], 1024
        %v3946 = vld [vmem:[%s3945] sm:$0xf]
        %v3947 = vld [vmem:[%s3945 + $0x4] sm:$0xf]
        %v3948 = vld [vmem:[%s3945 + $0x8] sm:$0xf]
        %v3949 = vld [vmem:[%s3945 + $0xc] sm:$0xf]
        %v3950 = vld [vmem:[%s3945 + $0x10] sm:$0xf]
        %v3951 = vld [vmem:[%s3945 + $0x14] sm:$0xf]
        %v3952 = vld [vmem:[%s3945 + $0x18] sm:$0xf]
        %v3953 = vld [vmem:[%s3945 + $0x1c] sm:$0xf]
        %v3954 = vld [vmem:[%s3945 + $0x20] sm:$0xf]
        %v3955 = vld [vmem:[%s3945 + $0x24] sm:$0xf]
        %v3956 = vld [vmem:[%s3945 + $0x28] sm:$0xf]
        %v3957 = vld [vmem:[%s3945 + $0x2c] sm:$0xf]
        %v3958 = vld [vmem:[%s3945 + $0x30] sm:$0xf]
        %v3959 = vld [vmem:[%s3945 + $0x34] sm:$0xf]
        %v3960 = vld [vmem:[%s3945 + $0x38] sm:$0xf]
        %v3961 = vld [vmem:[%s3945 + $0x3c] sm:$0xf]
        %v3978 = vunpack.c.l.b16 %v3946
        %v3979 = vunpack.c.l.b16 %v3947
        %v3980 = vunpack.c.l.b16 %v3948
        %v3981 = vunpack.c.l.b16 %v3949
        %v3982 = vunpack.c.l.b16 %v3950
        %v3983 = vunpack.c.l.b16 %v3951
        %v3984 = vunpack.c.l.b16 %v3952
        %v3985 = vunpack.c.l.b16 %v3953
        %v3986 = vunpack.c.l.b16 %v3954
        %v3987 = vunpack.c.l.b16 %v3955
        %v3988 = vunpack.c.l.b16 %v3956
        %v3989 = vunpack.c.l.b16 %v3957
        %v3990 = vunpack.c.l.b16 %v3958
        %v3991 = vunpack.c.l.b16 %v3959
        %v3992 = vunpack.c.l.b16 %v3960
        %v3993 = vunpack.c.l.b16 %v3961
        %v3994 = vpack.c.b16 %v3979, %v3978
        %v3995 = vpack.c.b16 %v3981, %v3980
        %v3996 = vpack.c.b16 %v3983, %v3982
        %v3997 = vpack.c.b16 %v3985, %v3984
        %v3998 = vpack.c.b16 %v3987, %v3986
        %v3999 = vpack.c.b16 %v3989, %v3988
        %v4000 = vpack.c.b16 %v3991, %v3990
        %v4001 = vpack.c.b16 %v3993, %v3992
        %4010 = vmatpush.bf16.msra.mxu0 %v4001
        %4011 = vmatpush.bf16.msra.mxu0 %v4000
        %4012 = vmatpush.bf16.msra.mxu0 %v3999
        %4013 = vmatpush.bf16.msra.mxu0 %v3998
        %4014 = vmatpush.bf16.msra.mxu0 %v3997
        %4015 = vmatpush.bf16.msra.mxu0 %v3996
        %4016 = vmatpush.bf16.msra.mxu0 %v3995
        %4017 = vmatpush.bf16.msra.mxu0 %v3994
        %4018 = vmatmul.bf16.gmra.mxu0 %v3944
        %v4019 = vpop.f32.mrf.mxu0
        %v4020 = vadd.f32 0.0, %v4019
        %v4021 = vpop.f32.mrf.mxu0
        %v4022 = vadd.f32 0.0, %v4021
        %4023 = vdwg.mxu0
        %v4024 = vadd.f32 %v3918, %v4020
        %v4025 = vadd.f32 %v3919, %v4022
        %v4026 = vld [vmem:[%s6 + $0x88] sm:$0xf]
        %v4027 = vld [vmem:[%s6 + $0x8c] sm:$0xf]
        %v4030 = vunpack.c.l.b16 %v4026
        %v4031 = vunpack.c.l.b16 %v4027
        %v4032 = vpack.c.b16 %v4031, %v4030
        %v4034 = vsel %vm2235, %v4032, 0
        %4036 = vmatpush.bf16.msra.mxu0 0
        %4037 = vmatpush.bf16.msra.mxu0 0
        %4038 = vmatpush.bf16.msra.mxu0 0
        %4039 = vmatpush.bf16.msra.mxu0 0
        %4040 = vmatpush.bf16.msra.mxu0 0
        %4041 = vmatpush.bf16.msra.mxu0 0
        %4042 = vmatpush.bf16.msra.mxu0 0
        %4043 = vmatpush.bf16.msra.mxu0 %v2227
        %4044 = vmatmul.bf16.gmra.mxu0 %v4034
        %v4045 = vpop.f32.mrf.mxu0
        %v4046 = vadd.f32 0.0, %v4045
        %v4047 = vpop.f32.mrf.mxu0
        %v4048 = vadd.f32 0.0, %v4047
        %4049 = vdwg.mxu0
        %v4050 = vpack.c.bf16 %v4048, %v4046
        %s4051 = scalar_lea.vmem [#allocation5], 1088
        %v4052 = vld [vmem:[%s4051] sm:$0xf]
        %v4053 = vld [vmem:[%s4051 + $0x4] sm:$0xf]
        %v4054 = vld [vmem:[%s4051 + $0x8] sm:$0xf]
        %v4055 = vld [vmem:[%s4051 + $0xc] sm:$0xf]
        %v4056 = vld [vmem:[%s4051 + $0x10] sm:$0xf]
        %v4057 = vld [vmem:[%s4051 + $0x14] sm:$0xf]
        %v4058 = vld [vmem:[%s4051 + $0x18] sm:$0xf]
        %v4059 = vld [vmem:[%s4051 + $0x1c] sm:$0xf]
        %v4060 = vld [vmem:[%s4051 + $0x20] sm:$0xf]
        %v4061 = vld [vmem:[%s4051 + $0x24] sm:$0xf]
        %v4062 = vld [vmem:[%s4051 + $0x28] sm:$0xf]
        %v4063 = vld [vmem:[%s4051 + $0x2c] sm:$0xf]
        %v4064 = vld [vmem:[%s4051 + $0x30] sm:$0xf]
        %v4065 = vld [vmem:[%s4051 + $0x34] sm:$0xf]
        %v4066 = vld [vmem:[%s4051 + $0x38] sm:$0xf]
        %v4067 = vld [vmem:[%s4051 + $0x3c] sm:$0xf]
        %v4084 = vunpack.c.l.b16 %v4052
        %v4085 = vunpack.c.l.b16 %v4053
        %v4086 = vunpack.c.l.b16 %v4054
        %v4087 = vunpack.c.l.b16 %v4055
        %v4088 = vunpack.c.l.b16 %v4056
        %v4089 = vunpack.c.l.b16 %v4057
        %v4090 = vunpack.c.l.b16 %v4058
        %v4091 = vunpack.c.l.b16 %v4059
        %v4092 = vunpack.c.l.b16 %v4060
        %v4093 = vunpack.c.l.b16 %v4061
        %v4094 = vunpack.c.l.b16 %v4062
        %v4095 = vunpack.c.l.b16 %v4063
        %v4096 = vunpack.c.l.b16 %v4064
        %v4097 = vunpack.c.l.b16 %v4065
        %v4098 = vunpack.c.l.b16 %v4066
        %v4099 = vunpack.c.l.b16 %v4067
        %v4100 = vpack.c.b16 %v4085, %v4084
        %v4101 = vpack.c.b16 %v4087, %v4086
        %v4102 = vpack.c.b16 %v4089, %v4088
        %v4103 = vpack.c.b16 %v4091, %v4090
        %v4104 = vpack.c.b16 %v4093, %v4092
        %v4105 = vpack.c.b16 %v4095, %v4094
        %v4106 = vpack.c.b16 %v4097, %v4096
        %v4107 = vpack.c.b16 %v4099, %v4098
        %4116 = vmatpush.bf16.msra.mxu0 %v4107
        %4117 = vmatpush.bf16.msra.mxu0 %v4106
        %4118 = vmatpush.bf16.msra.mxu0 %v4105
        %4119 = vmatpush.bf16.msra.mxu0 %v4104
        %4120 = vmatpush.bf16.msra.mxu0 %v4103
        %4121 = vmatpush.bf16.msra.mxu0 %v4102
        %4122 = vmatpush.bf16.msra.mxu0 %v4101
        %4123 = vmatpush.bf16.msra.mxu0 %v4100
        %4124 = vmatmul.bf16.gmra.mxu0 %v4050
        %v4125 = vpop.f32.mrf.mxu0
        %v4126 = vadd.f32 0.0, %v4125
        %v4127 = vpop.f32.mrf.mxu0
        %v4128 = vadd.f32 0.0, %v4127
        %4129 = vdwg.mxu0
        %v4130 = vadd.f32 %v4024, %v4126
        %v4131 = vadd.f32 %v4025, %v4128
        %v4132 = vld [vmem:[%s6 + $0x90] sm:$0xf]
        %v4133 = vld [vmem:[%s6 + $0x94] sm:$0xf]
        %v4136 = vunpack.c.l.b16 %v4132
        %v4137 = vunpack.c.l.b16 %v4133
        %v4138 = vpack.c.b16 %v4137, %v4136
        %v4140 = vsel %vm2235, %v4138, 0
        %4142 = vmatpush.bf16.msra.mxu0 0
        %4143 = vmatpush.bf16.msra.mxu0 0
        %4144 = vmatpush.bf16.msra.mxu0 0
        %4145 = vmatpush.bf16.msra.mxu0 0
        %4146 = vmatpush.bf16.msra.mxu0 0
        %4147 = vmatpush.bf16.msra.mxu0 0
        %4148 = vmatpush.bf16.msra.mxu0 0
        %4149 = vmatpush.bf16.msra.mxu0 %v2227
        %4150 = vmatmul.bf16.gmra.mxu0 %v4140
        %v4151 = vpop.f32.mrf.mxu0
        %v4152 = vadd.f32 0.0, %v4151
        %v4153 = vpop.f32.mrf.mxu0
        %v4154 = vadd.f32 0.0, %v4153
        %4155 = vdwg.mxu0
        %v4156 = vpack.c.bf16 %v4154, %v4152
        %s4157 = scalar_lea.vmem [#allocation5], 1152
        %v4158 = vld [vmem:[%s4157] sm:$0xf]
        %v4159 = vld [vmem:[%s4157 + $0x4] sm:$0xf]
        %v4160 = vld [vmem:[%s4157 + $0x8] sm:$0xf]
        %v4161 = vld [vmem:[%s4157 + $0xc] sm:$0xf]
        %v4162 = vld [vmem:[%s4157 + $0x10] sm:$0xf]
        %v4163 = vld [vmem:[%s4157 + $0x14] sm:$0xf]
        %v4164 = vld [vmem:[%s4157 + $0x18] sm:$0xf]
        %v4165 = vld [vmem:[%s4157 + $0x1c] sm:$0xf]
        %v4166 = vld [vmem:[%s4157 + $0x20] sm:$0xf]
        %v4167 = vld [vmem:[%s4157 + $0x24] sm:$0xf]
        %v4168 = vld [vmem:[%s4157 + $0x28] sm:$0xf]
        %v4169 = vld [vmem:[%s4157 + $0x2c] sm:$0xf]
        %v4170 = vld [vmem:[%s4157 + $0x30] sm:$0xf]
        %v4171 = vld [vmem:[%s4157 + $0x34] sm:$0xf]
        %v4172 = vld [vmem:[%s4157 + $0x38] sm:$0xf]
        %v4173 = vld [vmem:[%s4157 + $0x3c] sm:$0xf]
        %v4190 = vunpack.c.l.b16 %v4158
        %v4191 = vunpack.c.l.b16 %v4159
        %v4192 = vunpack.c.l.b16 %v4160
        %v4193 = vunpack.c.l.b16 %v4161
        %v4194 = vunpack.c.l.b16 %v4162
        %v4195 = vunpack.c.l.b16 %v4163
        %v4196 = vunpack.c.l.b16 %v4164
        %v4197 = vunpack.c.l.b16 %v4165
        %v4198 = vunpack.c.l.b16 %v4166
        %v4199 = vunpack.c.l.b16 %v4167
        %v4200 = vunpack.c.l.b16 %v4168
        %v4201 = vunpack.c.l.b16 %v4169
        %v4202 = vunpack.c.l.b16 %v4170
        %v4203 = vunpack.c.l.b16 %v4171
        %v4204 = vunpack.c.l.b16 %v4172
        %v4205 = vunpack.c.l.b16 %v4173
        %v4206 = vpack.c.b16 %v4191, %v4190
        %v4207 = vpack.c.b16 %v4193, %v4192
        %v4208 = vpack.c.b16 %v4195, %v4194
        %v4209 = vpack.c.b16 %v4197, %v4196
        %v4210 = vpack.c.b16 %v4199, %v4198
        %v4211 = vpack.c.b16 %v4201, %v4200
        %v4212 = vpack.c.b16 %v4203, %v4202
        %v4213 = vpack.c.b16 %v4205, %v4204
        %4222 = vmatpush.bf16.msra.mxu0 %v4213
        %4223 = vmatpush.bf16.msra.mxu0 %v4212
        %4224 = vmatpush.bf16.msra.mxu0 %v4211
        %4225 = vmatpush.bf16.msra.mxu0 %v4210
        %4226 = vmatpush.bf16.msra.mxu0 %v4209
        %4227 = vmatpush.bf16.msra.mxu0 %v4208
        %4228 = vmatpush.bf16.msra.mxu0 %v4207
        %4229 = vmatpush.bf16.msra.mxu0 %v4206
        %4230 = vmatmul.bf16.gmra.mxu0 %v4156
        %v4231 = vpop.f32.mrf.mxu0
        %v4232 = vadd.f32 0.0, %v4231
        %v4233 = vpop.f32.mrf.mxu0
        %v4234 = vadd.f32 0.0, %v4233
        %4235 = vdwg.mxu0
        %v4236 = vadd.f32 %v4130, %v4232
        %v4237 = vadd.f32 %v4131, %v4234
        %v4238 = vld [vmem:[%s6 + $0x98] sm:$0xf]
        %v4239 = vld [vmem:[%s6 + $0x9c] sm:$0xf]
        %v4242 = vunpack.c.l.b16 %v4238
        %v4243 = vunpack.c.l.b16 %v4239
        %v4244 = vpack.c.b16 %v4243, %v4242
        %v4246 = vsel %vm2235, %v4244, 0
        %4248 = vmatpush.bf16.msra.mxu0 0
        %4249 = vmatpush.bf16.msra.mxu0 0
        %4250 = vmatpush.bf16.msra.mxu0 0
        %4251 = vmatpush.bf16.msra.mxu0 0
        %4252 = vmatpush.bf16.msra.mxu0 0
        %4253 = vmatpush.bf16.msra.mxu0 0
        %4254 = vmatpush.bf16.msra.mxu0 0
        %4255 = vmatpush.bf16.msra.mxu0 %v2227
        %4256 = vmatmul.bf16.gmra.mxu0 %v4246
        %v4257 = vpop.f32.mrf.mxu0
        %v4258 = vadd.f32 0.0, %v4257
        %v4259 = vpop.f32.mrf.mxu0
        %v4260 = vadd.f32 0.0, %v4259
        %4261 = vdwg.mxu0
        %v4262 = vpack.c.bf16 %v4260, %v4258
        %s4263 = scalar_lea.vmem [#allocation5], 1216
        %v4264 = vld [vmem:[%s4263] sm:$0xf]
        %v4265 = vld [vmem:[%s4263 + $0x4] sm:$0xf]
        %v4266 = vld [vmem:[%s4263 + $0x8] sm:$0xf]
        %v4267 = vld [vmem:[%s4263 + $0xc] sm:$0xf]
        %v4268 = vld [vmem:[%s4263 + $0x10] sm:$0xf]
        %v4269 = vld [vmem:[%s4263 + $0x14] sm:$0xf]
        %v4270 = vld [vmem:[%s4263 + $0x18] sm:$0xf]
        %v4271 = vld [vmem:[%s4263 + $0x1c] sm:$0xf]
        %v4272 = vld [vmem:[%s4263 + $0x20] sm:$0xf]
        %v4273 = vld [vmem:[%s4263 + $0x24] sm:$0xf]
        %v4274 = vld [vmem:[%s4263 + $0x28] sm:$0xf]
        %v4275 = vld [vmem:[%s4263 + $0x2c] sm:$0xf]
        %v4276 = vld [vmem:[%s4263 + $0x30] sm:$0xf]
        %v4277 = vld [vmem:[%s4263 + $0x34] sm:$0xf]
        %v4278 = vld [vmem:[%s4263 + $0x38] sm:$0xf]
        %v4279 = vld [vmem:[%s4263 + $0x3c] sm:$0xf]
        %v4296 = vunpack.c.l.b16 %v4264
        %v4297 = vunpack.c.l.b16 %v4265
        %v4298 = vunpack.c.l.b16 %v4266
        %v4299 = vunpack.c.l.b16 %v4267
        %v4300 = vunpack.c.l.b16 %v4268
        %v4301 = vunpack.c.l.b16 %v4269
        %v4302 = vunpack.c.l.b16 %v4270
        %v4303 = vunpack.c.l.b16 %v4271
        %v4304 = vunpack.c.l.b16 %v4272
        %v4305 = vunpack.c.l.b16 %v4273
        %v4306 = vunpack.c.l.b16 %v4274
        %v4307 = vunpack.c.l.b16 %v4275
        %v4308 = vunpack.c.l.b16 %v4276
        %v4309 = vunpack.c.l.b16 %v4277
        %v4310 = vunpack.c.l.b16 %v4278
        %v4311 = vunpack.c.l.b16 %v4279
        %v4312 = vpack.c.b16 %v4297, %v4296
        %v4313 = vpack.c.b16 %v4299, %v4298
        %v4314 = vpack.c.b16 %v4301, %v4300
        %v4315 = vpack.c.b16 %v4303, %v4302
        %v4316 = vpack.c.b16 %v4305, %v4304
        %v4317 = vpack.c.b16 %v4307, %v4306
        %v4318 = vpack.c.b16 %v4309, %v4308
        %v4319 = vpack.c.b16 %v4311, %v4310
        %4328 = vmatpush.bf16.msra.mxu0 %v4319
        %4329 = vmatpush.bf16.msra.mxu0 %v4318
        %4330 = vmatpush.bf16.msra.mxu0 %v4317
        %4331 = vmatpush.bf16.msra.mxu0 %v4316
        %4332 = vmatpush.bf16.msra.mxu0 %v4315
        %4333 = vmatpush.bf16.msra.mxu0 %v4314
        %4334 = vmatpush.bf16.msra.mxu0 %v4313
        %4335 = vmatpush.bf16.msra.mxu0 %v4312
        %4336 = vmatmul.bf16.gmra.mxu0 %v4262
        %v4337 = vpop.f32.mrf.mxu0
        %v4338 = vadd.f32 0.0, %v4337
        %v4339 = vpop.f32.mrf.mxu0
        %v4340 = vadd.f32 0.0, %v4339
        %4341 = vdwg.mxu0
        %v4342 = vadd.f32 %v4236, %v4338
        %v4343 = vadd.f32 %v4237, %v4340
        %v4344 = vld [vmem:[%s6 + $0xa0] sm:$0xf]
        %v4345 = vld [vmem:[%s6 + $0xa4] sm:$0xf]
        %v4348 = vunpack.c.l.b16 %v4344
        %v4349 = vunpack.c.l.b16 %v4345
        %v4350 = vpack.c.b16 %v4349, %v4348
        %v4352 = vsel %vm2235, %v4350, 0
        %4354 = vmatpush.bf16.msra.mxu0 0
        %4355 = vmatpush.bf16.msra.mxu0 0
        %4356 = vmatpush.bf16.msra.mxu0 0
        %4357 = vmatpush.bf16.msra.mxu0 0
        %4358 = vmatpush.bf16.msra.mxu0 0
        %4359 = vmatpush.bf16.msra.mxu0 0
        %4360 = vmatpush.bf16.msra.mxu0 0
        %4361 = vmatpush.bf16.msra.mxu0 %v2227
        %4362 = vmatmul.bf16.gmra.mxu0 %v4352
        %v4363 = vpop.f32.mrf.mxu0
        %v4364 = vadd.f32 0.0, %v4363
        %v4365 = vpop.f32.mrf.mxu0
        %v4366 = vadd.f32 0.0, %v4365
        %4367 = vdwg.mxu0
        %v4368 = vpack.c.bf16 %v4366, %v4364
        %s4369 = scalar_lea.vmem [#allocation5], 1280
        %v4370 = vld [vmem:[%s4369] sm:$0xf]
        %v4371 = vld [vmem:[%s4369 + $0x4] sm:$0xf]
        %v4372 = vld [vmem:[%s4369 + $0x8] sm:$0xf]
        %v4373 = vld [vmem:[%s4369 + $0xc] sm:$0xf]
        %v4374 = vld [vmem:[%s4369 + $0x10] sm:$0xf]
        %v4375 = vld [vmem:[%s4369 + $0x14] sm:$0xf]
        %v4376 = vld [vmem:[%s4369 + $0x18] sm:$0xf]
        %v4377 = vld [vmem:[%s4369 + $0x1c] sm:$0xf]
        %v4378 = vld [vmem:[%s4369 + $0x20] sm:$0xf]
        %v4379 = vld [vmem:[%s4369 + $0x24] sm:$0xf]
        %v4380 = vld [vmem:[%s4369 + $0x28] sm:$0xf]
        %v4381 = vld [vmem:[%s4369 + $0x2c] sm:$0xf]
        %v4382 = vld [vmem:[%s4369 + $0x30] sm:$0xf]
        %v4383 = vld [vmem:[%s4369 + $0x34] sm:$0xf]
        %v4384 = vld [vmem:[%s4369 + $0x38] sm:$0xf]
        %v4385 = vld [vmem:[%s4369 + $0x3c] sm:$0xf]
        %v4402 = vunpack.c.l.b16 %v4370
        %v4403 = vunpack.c.l.b16 %v4371
        %v4404 = vunpack.c.l.b16 %v4372
        %v4405 = vunpack.c.l.b16 %v4373
        %v4406 = vunpack.c.l.b16 %v4374
        %v4407 = vunpack.c.l.b16 %v4375
        %v4408 = vunpack.c.l.b16 %v4376
        %v4409 = vunpack.c.l.b16 %v4377
        %v4410 = vunpack.c.l.b16 %v4378
        %v4411 = vunpack.c.l.b16 %v4379
        %v4412 = vunpack.c.l.b16 %v4380
        %v4413 = vunpack.c.l.b16 %v4381
        %v4414 = vunpack.c.l.b16 %v4382
        %v4415 = vunpack.c.l.b16 %v4383
        %v4416 = vunpack.c.l.b16 %v4384
        %v4417 = vunpack.c.l.b16 %v4385
        %v4418 = vpack.c.b16 %v4403, %v4402
        %v4419 = vpack.c.b16 %v4405, %v4404
        %v4420 = vpack.c.b16 %v4407, %v4406
        %v4421 = vpack.c.b16 %v4409, %v4408
        %v4422 = vpack.c.b16 %v4411, %v4410
        %v4423 = vpack.c.b16 %v4413, %v4412
        %v4424 = vpack.c.b16 %v4415, %v4414
        %v4425 = vpack.c.b16 %v4417, %v4416
        %4434 = vmatpush.bf16.msra.mxu0 %v4425
        %4435 = vmatpush.bf16.msra.mxu0 %v4424
        %4436 = vmatpush.bf16.msra.mxu0 %v4423
        %4437 = vmatpush.bf16.msra.mxu0 %v4422
        %4438 = vmatpush.bf16.msra.mxu0 %v4421
        %4439 = vmatpush.bf16.msra.mxu0 %v4420
        %4440 = vmatpush.bf16.msra.mxu0 %v4419
        %4441 = vmatpush.bf16.msra.mxu0 %v4418
        %4442 = vmatmul.bf16.gmra.mxu0 %v4368
        %v4443 = vpop.f32.mrf.mxu0
        %v4444 = vadd.f32 0.0, %v4443
        %v4445 = vpop.f32.mrf.mxu0
        %v4446 = vadd.f32 0.0, %v4445
        %4447 = vdwg.mxu0
        %v4448 = vadd.f32 %v4342, %v4444
        %v4449 = vadd.f32 %v4343, %v4446
        %v4450 = vld [vmem:[%s6 + $0xa8] sm:$0xf]
        %v4451 = vld [vmem:[%s6 + $0xac] sm:$0xf]
        %v4454 = vunpack.c.l.b16 %v4450
        %v4455 = vunpack.c.l.b16 %v4451
        %v4456 = vpack.c.b16 %v4455, %v4454
        %v4458 = vsel %vm2235, %v4456, 0
        %4460 = vmatpush.bf16.msra.mxu0 0
        %4461 = vmatpush.bf16.msra.mxu0 0
        %4462 = vmatpush.bf16.msra.mxu0 0
        %4463 = vmatpush.bf16.msra.mxu0 0
        %4464 = vmatpush.bf16.msra.mxu0 0
        %4465 = vmatpush.bf16.msra.mxu0 0
        %4466 = vmatpush.bf16.msra.mxu0 0
        %4467 = vmatpush.bf16.msra.mxu0 %v2227
        %4468 = vmatmul.bf16.gmra.mxu0 %v4458
        %v4469 = vpop.f32.mrf.mxu0
        %v4470 = vadd.f32 0.0, %v4469
        %v4471 = vpop.f32.mrf.mxu0
        %v4472 = vadd.f32 0.0, %v4471
        %4473 = vdwg.mxu0
        %v4474 = vpack.c.bf16 %v4472, %v4470
        %s4475 = scalar_lea.vmem [#allocation5], 1344
        %v4476 = vld [vmem:[%s4475] sm:$0xf]
        %v4477 = vld [vmem:[%s4475 + $0x4] sm:$0xf]
        %v4478 = vld [vmem:[%s4475 + $0x8] sm:$0xf]
        %v4479 = vld [vmem:[%s4475 + $0xc] sm:$0xf]
        %v4480 = vld [vmem:[%s4475 + $0x10] sm:$0xf]
        %v4481 = vld [vmem:[%s4475 + $0x14] sm:$0xf]
        %v4482 = vld [vmem:[%s4475 + $0x18] sm:$0xf]
        %v4483 = vld [vmem:[%s4475 + $0x1c] sm:$0xf]
        %v4484 = vld [vmem:[%s4475 + $0x20] sm:$0xf]
        %v4485 = vld [vmem:[%s4475 + $0x24] sm:$0xf]
        %v4486 = vld [vmem:[%s4475 + $0x28] sm:$0xf]
        %v4487 = vld [vmem:[%s4475 + $0x2c] sm:$0xf]
        %v4488 = vld [vmem:[%s4475 + $0x30] sm:$0xf]
        %v4489 = vld [vmem:[%s4475 + $0x34] sm:$0xf]
        %v4490 = vld [vmem:[%s4475 + $0x38] sm:$0xf]
        %v4491 = vld [vmem:[%s4475 + $0x3c] sm:$0xf]
        %v4508 = vunpack.c.l.b16 %v4476
        %v4509 = vunpack.c.l.b16 %v4477
        %v4510 = vunpack.c.l.b16 %v4478
        %v4511 = vunpack.c.l.b16 %v4479
        %v4512 = vunpack.c.l.b16 %v4480
        %v4513 = vunpack.c.l.b16 %v4481
        %v4514 = vunpack.c.l.b16 %v4482
        %v4515 = vunpack.c.l.b16 %v4483
        %v4516 = vunpack.c.l.b16 %v4484
        %v4517 = vunpack.c.l.b16 %v4485
        %v4518 = vunpack.c.l.b16 %v4486
        %v4519 = vunpack.c.l.b16 %v4487
        %v4520 = vunpack.c.l.b16 %v4488
        %v4521 = vunpack.c.l.b16 %v4489
        %v4522 = vunpack.c.l.b16 %v4490
        %v4523 = vunpack.c.l.b16 %v4491
        %v4524 = vpack.c.b16 %v4509, %v4508
        %v4525 = vpack.c.b16 %v4511, %v4510
        %v4526 = vpack.c.b16 %v4513, %v4512
        %v4527 = vpack.c.b16 %v4515, %v4514
        %v4528 = vpack.c.b16 %v4517, %v4516
        %v4529 = vpack.c.b16 %v4519, %v4518
        %v4530 = vpack.c.b16 %v4521, %v4520
        %v4531 = vpack.c.b16 %v4523, %v4522
        %4540 = vmatpush.bf16.msra.mxu0 %v4531
        %4541 = vmatpush.bf16.msra.mxu0 %v4530
        %4542 = vmatpush.bf16.msra.mxu0 %v4529
        %4543 = vmatpush.bf16.msra.mxu0 %v4528
        %4544 = vmatpush.bf16.msra.mxu0 %v4527
        %4545 = vmatpush.bf16.msra.mxu0 %v4526
        %4546 = vmatpush.bf16.msra.mxu0 %v4525
        %4547 = vmatpush.bf16.msra.mxu0 %v4524
        %4548 = vmatmul.bf16.gmra.mxu0 %v4474
        %v4549 = vpop.f32.mrf.mxu0
        %v4550 = vadd.f32 0.0, %v4549
        %v4551 = vpop.f32.mrf.mxu0
        %v4552 = vadd.f32 0.0, %v4551
        %4553 = vdwg.mxu0
        %v4554 = vadd.f32 %v4448, %v4550
        %v4555 = vadd.f32 %v4449, %v4552
        %v4556 = vld [vmem:[%s6 + $0xb0] sm:$0xf]
        %v4557 = vld [vmem:[%s6 + $0xb4] sm:$0xf]
        %v4560 = vunpack.c.l.b16 %v4556
        %v4561 = vunpack.c.l.b16 %v4557
        %v4562 = vpack.c.b16 %v4561, %v4560
        %v4564 = vsel %vm2235, %v4562, 0
        %4566 = vmatpush.bf16.msra.mxu0 0
        %4567 = vmatpush.bf16.msra.mxu0 0
        %4568 = vmatpush.bf16.msra.mxu0 0
        %4569 = vmatpush.bf16.msra.mxu0 0
        %4570 = vmatpush.bf16.msra.mxu0 0
        %4571 = vmatpush.bf16.msra.mxu0 0
        %4572 = vmatpush.bf16.msra.mxu0 0
        %4573 = vmatpush.bf16.msra.mxu0 %v2227
        %4574 = vmatmul.bf16.gmra.mxu0 %v4564
        %v4575 = vpop.f32.mrf.mxu0
        %v4576 = vadd.f32 0.0, %v4575
        %v4577 = vpop.f32.mrf.mxu0
        %v4578 = vadd.f32 0.0, %v4577
        %4579 = vdwg.mxu0
        %v4580 = vpack.c.bf16 %v4578, %v4576
        %s4581 = scalar_lea.vmem [#allocation5], 1408
        %v4582 = vld [vmem:[%s4581] sm:$0xf]
        %v4583 = vld [vmem:[%s4581 + $0x4] sm:$0xf]
        %v4584 = vld [vmem:[%s4581 + $0x8] sm:$0xf]
        %v4585 = vld [vmem:[%s4581 + $0xc] sm:$0xf]
        %v4586 = vld [vmem:[%s4581 + $0x10] sm:$0xf]
        %v4587 = vld [vmem:[%s4581 + $0x14] sm:$0xf]
        %v4588 = vld [vmem:[%s4581 + $0x18] sm:$0xf]
        %v4589 = vld [vmem:[%s4581 + $0x1c] sm:$0xf]
        %v4590 = vld [vmem:[%s4581 + $0x20] sm:$0xf]
        %v4591 = vld [vmem:[%s4581 + $0x24] sm:$0xf]
        %v4592 = vld [vmem:[%s4581 + $0x28] sm:$0xf]
        %v4593 = vld [vmem:[%s4581 + $0x2c] sm:$0xf]
        %v4594 = vld [vmem:[%s4581 + $0x30] sm:$0xf]
        %v4595 = vld [vmem:[%s4581 + $0x34] sm:$0xf]
        %v4596 = vld [vmem:[%s4581 + $0x38] sm:$0xf]
        %v4597 = vld [vmem:[%s4581 + $0x3c] sm:$0xf]
        %v4614 = vunpack.c.l.b16 %v4582
        %v4615 = vunpack.c.l.b16 %v4583
        %v4616 = vunpack.c.l.b16 %v4584
        %v4617 = vunpack.c.l.b16 %v4585
        %v4618 = vunpack.c.l.b16 %v4586
        %v4619 = vunpack.c.l.b16 %v4587
        %v4620 = vunpack.c.l.b16 %v4588
        %v4621 = vunpack.c.l.b16 %v4589
        %v4622 = vunpack.c.l.b16 %v4590
        %v4623 = vunpack.c.l.b16 %v4591
        %v4624 = vunpack.c.l.b16 %v4592
        %v4625 = vunpack.c.l.b16 %v4593
        %v4626 = vunpack.c.l.b16 %v4594
        %v4627 = vunpack.c.l.b16 %v4595
        %v4628 = vunpack.c.l.b16 %v4596
        %v4629 = vunpack.c.l.b16 %v4597
        %v4630 = vpack.c.b16 %v4615, %v4614
        %v4631 = vpack.c.b16 %v4617, %v4616
        %v4632 = vpack.c.b16 %v4619, %v4618
        %v4633 = vpack.c.b16 %v4621, %v4620
        %v4634 = vpack.c.b16 %v4623, %v4622
        %v4635 = vpack.c.b16 %v4625, %v4624
        %v4636 = vpack.c.b16 %v4627, %v4626
        %v4637 = vpack.c.b16 %v4629, %v4628
        %4646 = vmatpush.bf16.msra.mxu0 %v4637
        %4647 = vmatpush.bf16.msra.mxu0 %v4636
        %4648 = vmatpush.bf16.msra.mxu0 %v4635
        %4649 = vmatpush.bf16.msra.mxu0 %v4634
        %4650 = vmatpush.bf16.msra.mxu0 %v4633
        %4651 = vmatpush.bf16.msra.mxu0 %v4632
        %4652 = vmatpush.bf16.msra.mxu0 %v4631
        %4653 = vmatpush.bf16.msra.mxu0 %v4630
        %4654 = vmatmul.bf16.gmra.mxu0 %v4580
        %v4655 = vpop.f32.mrf.mxu0
        %v4656 = vadd.f32 0.0, %v4655
        %v4657 = vpop.f32.mrf.mxu0
        %v4658 = vadd.f32 0.0, %v4657
        %4659 = vdwg.mxu0
        %v4660 = vadd.f32 %v4554, %v4656
        %v4661 = vadd.f32 %v4555, %v4658
        %v4662 = vld [vmem:[%s6 + $0xb8] sm:$0xf]
        %v4663 = vld [vmem:[%s6 + $0xbc] sm:$0xf]
        %v4666 = vunpack.c.l.b16 %v4662
        %v4667 = vunpack.c.l.b16 %v4663
        %v4668 = vpack.c.b16 %v4667, %v4666
        %v4670 = vsel %vm2235, %v4668, 0
        %4672 = vmatpush.bf16.msra.mxu0 0
        %4673 = vmatpush.bf16.msra.mxu0 0
        %4674 = vmatpush.bf16.msra.mxu0 0
        %4675 = vmatpush.bf16.msra.mxu0 0
        %4676 = vmatpush.bf16.msra.mxu0 0
        %4677 = vmatpush.bf16.msra.mxu0 0
        %4678 = vmatpush.bf16.msra.mxu0 0
        %4679 = vmatpush.bf16.msra.mxu0 %v2227
        %4680 = vmatmul.bf16.gmra.mxu0 %v4670
        %v4681 = vpop.f32.mrf.mxu0
        %v4682 = vadd.f32 0.0, %v4681
        %v4683 = vpop.f32.mrf.mxu0
        %v4684 = vadd.f32 0.0, %v4683
        %4685 = vdwg.mxu0
        %v4686 = vpack.c.bf16 %v4684, %v4682
        %s4687 = scalar_lea.vmem [#allocation5], 1472
        %v4688 = vld [vmem:[%s4687] sm:$0xf]
        %v4689 = vld [vmem:[%s4687 + $0x4] sm:$0xf]
        %v4690 = vld [vmem:[%s4687 + $0x8] sm:$0xf]
        %v4691 = vld [vmem:[%s4687 + $0xc] sm:$0xf]
        %v4692 = vld [vmem:[%s4687 + $0x10] sm:$0xf]
        %v4693 = vld [vmem:[%s4687 + $0x14] sm:$0xf]
        %v4694 = vld [vmem:[%s4687 + $0x18] sm:$0xf]
        %v4695 = vld [vmem:[%s4687 + $0x1c] sm:$0xf]
        %v4696 = vld [vmem:[%s4687 + $0x20] sm:$0xf]
        %v4697 = vld [vmem:[%s4687 + $0x24] sm:$0xf]
        %v4698 = vld [vmem:[%s4687 + $0x28] sm:$0xf]
        %v4699 = vld [vmem:[%s4687 + $0x2c] sm:$0xf]
        %v4700 = vld [vmem:[%s4687 + $0x30] sm:$0xf]
        %v4701 = vld [vmem:[%s4687 + $0x34] sm:$0xf]
        %v4702 = vld [vmem:[%s4687 + $0x38] sm:$0xf]
        %v4703 = vld [vmem:[%s4687 + $0x3c] sm:$0xf]
        %v4720 = vunpack.c.l.b16 %v4688
        %v4721 = vunpack.c.l.b16 %v4689
        %v4722 = vunpack.c.l.b16 %v4690
        %v4723 = vunpack.c.l.b16 %v4691
        %v4724 = vunpack.c.l.b16 %v4692
        %v4725 = vunpack.c.l.b16 %v4693
        %v4726 = vunpack.c.l.b16 %v4694
        %v4727 = vunpack.c.l.b16 %v4695
        %v4728 = vunpack.c.l.b16 %v4696
        %v4729 = vunpack.c.l.b16 %v4697
        %v4730 = vunpack.c.l.b16 %v4698
        %v4731 = vunpack.c.l.b16 %v4699
        %v4732 = vunpack.c.l.b16 %v4700
        %v4733 = vunpack.c.l.b16 %v4701
        %v4734 = vunpack.c.l.b16 %v4702
        %v4735 = vunpack.c.l.b16 %v4703
        %v4736 = vpack.c.b16 %v4721, %v4720
        %v4737 = vpack.c.b16 %v4723, %v4722
        %v4738 = vpack.c.b16 %v4725, %v4724
        %v4739 = vpack.c.b16 %v4727, %v4726
        %v4740 = vpack.c.b16 %v4729, %v4728
        %v4741 = vpack.c.b16 %v4731, %v4730
        %v4742 = vpack.c.b16 %v4733, %v4732
        %v4743 = vpack.c.b16 %v4735, %v4734
        %4752 = vmatpush.bf16.msra.mxu0 %v4743
        %4753 = vmatpush.bf16.msra.mxu0 %v4742
        %4754 = vmatpush.bf16.msra.mxu0 %v4741
        %4755 = vmatpush.bf16.msra.mxu0 %v4740
        %4756 = vmatpush.bf16.msra.mxu0 %v4739
        %4757 = vmatpush.bf16.msra.mxu0 %v4738
        %4758 = vmatpush.bf16.msra.mxu0 %v4737
        %4759 = vmatpush.bf16.msra.mxu0 %v4736
        %4760 = vmatmul.bf16.gmra.mxu0 %v4686
        %v4761 = vpop.f32.mrf.mxu0
        %v4762 = vadd.f32 0.0, %v4761
        %v4763 = vpop.f32.mrf.mxu0
        %v4764 = vadd.f32 0.0, %v4763
        %4765 = vdwg.mxu0
        %v4766 = vadd.f32 %v4660, %v4762
        %v4767 = vadd.f32 %v4661, %v4764
        %v4768 = vld [vmem:[%s6 + $0xc0] sm:$0xf]
        %v4769 = vld [vmem:[%s6 + $0xc4] sm:$0xf]
        %v4772 = vunpack.c.l.b16 %v4768
        %v4773 = vunpack.c.l.b16 %v4769
        %v4774 = vpack.c.b16 %v4773, %v4772
        %v4776 = vsel %vm2235, %v4774, 0
        %4778 = vmatpush.bf16.msra.mxu0 0
        %4779 = vmatpush.bf16.msra.mxu0 0
        %4780 = vmatpush.bf16.msra.mxu0 0
        %4781 = vmatpush.bf16.msra.mxu0 0
        %4782 = vmatpush.bf16.msra.mxu0 0
        %4783 = vmatpush.bf16.msra.mxu0 0
        %4784 = vmatpush.bf16.msra.mxu0 0
        %4785 = vmatpush.bf16.msra.mxu0 %v2227
        %4786 = vmatmul.bf16.gmra.mxu0 %v4776
        %v4787 = vpop.f32.mrf.mxu0
        %v4788 = vadd.f32 0.0, %v4787
        %v4789 = vpop.f32.mrf.mxu0
        %v4790 = vadd.f32 0.0, %v4789
        %4791 = vdwg.mxu0
        %v4792 = vpack.c.bf16 %v4790, %v4788
        %s4793 = scalar_lea.vmem [#allocation5], 1536
        %v4794 = vld [vmem:[%s4793] sm:$0xf]
        %v4795 = vld [vmem:[%s4793 + $0x4] sm:$0xf]
        %v4796 = vld [vmem:[%s4793 + $0x8] sm:$0xf]
        %v4797 = vld [vmem:[%s4793 + $0xc] sm:$0xf]
        %v4798 = vld [vmem:[%s4793 + $0x10] sm:$0xf]
        %v4799 = vld [vmem:[%s4793 + $0x14] sm:$0xf]
        %v4800 = vld [vmem:[%s4793 + $0x18] sm:$0xf]
        %v4801 = vld [vmem:[%s4793 + $0x1c] sm:$0xf]
        %v4802 = vld [vmem:[%s4793 + $0x20] sm:$0xf]
        %v4803 = vld [vmem:[%s4793 + $0x24] sm:$0xf]
        %v4804 = vld [vmem:[%s4793 + $0x28] sm:$0xf]
        %v4805 = vld [vmem:[%s4793 + $0x2c] sm:$0xf]
        %v4806 = vld [vmem:[%s4793 + $0x30] sm:$0xf]
        %v4807 = vld [vmem:[%s4793 + $0x34] sm:$0xf]
        %v4808 = vld [vmem:[%s4793 + $0x38] sm:$0xf]
        %v4809 = vld [vmem:[%s4793 + $0x3c] sm:$0xf]
        %v4826 = vunpack.c.l.b16 %v4794
        %v4827 = vunpack.c.l.b16 %v4795
        %v4828 = vunpack.c.l.b16 %v4796
        %v4829 = vunpack.c.l.b16 %v4797
        %v4830 = vunpack.c.l.b16 %v4798
        %v4831 = vunpack.c.l.b16 %v4799
        %v4832 = vunpack.c.l.b16 %v4800
        %v4833 = vunpack.c.l.b16 %v4801
        %v4834 = vunpack.c.l.b16 %v4802
        %v4835 = vunpack.c.l.b16 %v4803
        %v4836 = vunpack.c.l.b16 %v4804
        %v4837 = vunpack.c.l.b16 %v4805
        %v4838 = vunpack.c.l.b16 %v4806
        %v4839 = vunpack.c.l.b16 %v4807
        %v4840 = vunpack.c.l.b16 %v4808
        %v4841 = vunpack.c.l.b16 %v4809
        %v4842 = vpack.c.b16 %v4827, %v4826
        %v4843 = vpack.c.b16 %v4829, %v4828
        %v4844 = vpack.c.b16 %v4831, %v4830
        %v4845 = vpack.c.b16 %v4833, %v4832
        %v4846 = vpack.c.b16 %v4835, %v4834
        %v4847 = vpack.c.b16 %v4837, %v4836
        %v4848 = vpack.c.b16 %v4839, %v4838
        %v4849 = vpack.c.b16 %v4841, %v4840
        %4858 = vmatpush.bf16.msra.mxu0 %v4849
        %4859 = vmatpush.bf16.msra.mxu0 %v4848
        %4860 = vmatpush.bf16.msra.mxu0 %v4847
        %4861 = vmatpush.bf16.msra.mxu0 %v4846
        %4862 = vmatpush.bf16.msra.mxu0 %v4845
        %4863 = vmatpush.bf16.msra.mxu0 %v4844
        %4864 = vmatpush.bf16.msra.mxu0 %v4843
        %4865 = vmatpush.bf16.msra.mxu0 %v4842
        %4866 = vmatmul.bf16.gmra.mxu0 %v4792
        %v4867 = vpop.f32.mrf.mxu0
        %v4868 = vadd.f32 0.0, %v4867
        %v4869 = vpop.f32.mrf.mxu0
        %v4870 = vadd.f32 0.0, %v4869
        %4871 = vdwg.mxu0
        %v4872 = vadd.f32 %v4766, %v4868
        %v4873 = vadd.f32 %v4767, %v4870
        %v4874 = vld [vmem:[%s8] sm:$0x1]
        %v4876 = vperm.slane %v4874, 0
        %v4878 = vadd.f32 %v4872, %v4876
        %v4879 = vadd.f32 %v4873, %v4876
        %4880 = vmax.xlane.f32.xlu0 %v4878
        %v4881 = vpop.xlane.xlu0 %4880
        %4882 = vmax.xlane.f32.xlu0 %v4879
        %v4883 = vpop.xlane.xlu0 %4882
        %v4884 = vsub.f32 %v4878, %v4881
        %v4885 = vsub.f32 %v4879, %v4883
        %v4886 = vmul.f32 %v4884, 1.442695
        %v4887 = vpow.pop %v4886
        %v4888 = vmul.f32 %v4885, 1.442695
        %v4889 = vpow.pop %v4888
        %4890 = vadd.xlane.f32.xlu0 %v4887
        %v4891 = vpop.xlane.xlu0 %4890
        %4892 = vadd.xlane.f32.xlu0 %v4889
        %v4893 = vpop.xlane.xlu0 %4892
        %v4894 = vrcp.pop %v4891
        %v4895 = vrcp.pop %v4893
        %v4896 = vmul.f32 %v4887, %v4894
        %v4897 = vmul.f32 %v4889, %v4895
        %4898 = vst [vmem:[%s359] sm:$0xff] %v4896
        %4899 = vst [vmem:[%s359 + $0x8] sm:$0xff] %v4897
        %s4900 = sand.u32 %s227, 1
        %s4901 = scalar_lea.sflag [#allocation4], %s4900
        %s4902 = sand.u32 %s227, 1
        %s4903 = smul.addr %s4902, 16
        %s4904 = scalar_lea.vmem [#allocation7], %s4903
        // Predicated region
        $region65: #{tpu_custom_call.1} parent=55 // pred_check
          %p4905 = pneg %p237
        $region66: #{tpu_custom_call.1} parent=55 // pred_check_branch
          %4907 = sbr.rel (%p4905) target = $region68
        $region67: #{tpu_custom_call.1} parent=55 // pred_region
          %4909 = vsyncadd %s4901, 0
          %s4910 = smul.addr %s25, 2
          %s4911 = smul.addr %s4910, 8
          %s4912 = scalar_lea.hbm %s9, %s4911
          %s4913 = sshll.u32 %s4904, 4
          %s4914 = int_to_ptr.vmem [resolvable:$true] %s4913
          %s4915 = sshll.u32 %s4912, 4
          %s4916 = int_to_ptr.hbm [resolvable:$true] %s4915
          %4921 = dma.vmem_to_hbm [thread:$0]  %s4914, 256, %s4916, %s4901, 128, 128, 8
        $region68: #{tpu_custom_call.1} parent=55 // pred_fallthru
          _
      $region56: #{tpu_custom_call.1} parent=5 // pred_fallthru
        _
      %p4922 = scmp.le.s32.totalorder 2, %s20
      // Predicated region
      $region69: #{tpu_custom_call.1} parent=5 // pred_check
        %p4923 = pneg %p4922
      $region70: #{tpu_custom_call.1} parent=5 // pred_check_branch
        %4925 = sbr.rel (%p4923) target = $region72
      $region71: #{tpu_custom_call.1} parent=5 // pred_region
        %s4926 = ssub.s32 %s20, 2
        // Predicated region
        $region73: #{tpu_custom_call.1} parent=71 // pred_check
          %p4927 = pneg %p243
        $region74: #{tpu_custom_call.1} parent=71 // pred_check_branch
          %4929 = sbr.rel (%p4927) target = $region76
        $region75: #{tpu_custom_call.1} parent=71 // pred_region
          %s4930 = sand.u32 %s228, 1
          %s4931 = scalar_lea.sflag [#allocation4], %s4930
          %s4932 = sand.u32 %s228, 1
          %s4933 = smul.addr %s4932, 16
          %s4934 = scalar_lea.vmem [#allocation7], %s4933
          %4936 = dma.done %s4931, 256
        $region76: #{tpu_custom_call.1} parent=71 // pred_fallthru
          _
      $region72: #{tpu_custom_call.1} parent=5 // pred_fallthru
        _
    $region6: #{tpu_custom_call.1} parent=1 // loop_footer
      %s24 = sadd.s32 1, %s20
    $region7: #{tpu_custom_call.1} parent=1 // loop_footer_branch
      %19 = sbr.rel target = $region3
    $region8: #{tpu_custom_call.1} parent=1 // loop_exit
      _
    %4937 = vsyncpa [#allocation3], 1
    %s4938 = scalar_lea.sflag [#allocation3], 1
    %4939 = vsyncpa %s4938, 1
    %4940 = vsyncpa [#allocation6], 1
    %4941 = vsyncpa [#allocation4], 1
    %s4942 = scalar_lea.sflag [#allocation4], 1
    %4943 = vsyncpa %s4942, 1

</llo_original>
